<compile_context>
chip_gen: v7x
topology: tpu7x:2x2x1
jax: 0.10.0
libtpu: 0.0.40
codegen_flags: <defaults>
</compile_context>

<pallas_src>
import functools
import math

import jax
import jax.numpy as jnp
from jax.experimental import pallas as pl
from jax.experimental.pallas import tpu as pltpu


# MXU operand dtype (accumulation is always f32 via preferred_element_type).
_MM_DTYPE = jnp.bfloat16


def _mm(a, b):
    """MXU matmul: bf16 operands, f32 accumulate."""
    return jnp.dot(a.astype(_MM_DTYPE), b.astype(_MM_DTYPE),
                   preferred_element_type=jnp.float32)


def _layernorm(y, g, b):
    """f32 LayerNorm over the last axis (eps = 1e-5, PyTorch default)."""
    mean = jnp.mean(y, axis=-1, keepdims=True)
    var = jnp.mean(jnp.square(y - mean), axis=-1, keepdims=True)
    return (y - mean) * jax.lax.rsqrt(var + 1e-5) * g + b


def _mha_proj(q_in, k_in, v_in, bias, wo, bo, num_heads):
    """Multi-head attention + output projection, all heads in-kernel.

    q_in: (Lq, E), k_in/v_in: (Lk, E), bias: (1, Lk) additive or None,
    wo: (E, E), bo: (1, E).  The head-merge is folded into Wo:
        concat_h(ctx_h) @ Wo == sum_h ctx_h @ Wo[h*Dh:(h+1)*Dh, :]
    which keeps the result lane-dense and avoids a lane-concatenate.
    """
    lq, e = q_in.shape
    dh = e // num_heads
    scale = 1.0 / math.sqrt(dh)
    out = jnp.zeros((lq, wo.shape[1]), jnp.float32)
    for h in range(num_heads):
        sl = slice(h * dh, (h + 1) * dh)
        qh = q_in[:, sl] * scale                       # (Lq, Dh)
        kh = k_in[:, sl]                               # (Lk, Dh)
        vh = v_in[:, sl]                               # (Lk, Dh)
        s = _mm(qh, kh.T)                              # (Lq, Lk) f32
        if bias is not None:
            s = s + bias
        s = s - jnp.max(s, axis=-1, keepdims=True)
        p = jnp.exp(s)
        p = p * pl.reciprocal(jnp.sum(p, axis=-1, keepdims=True), approx=True)
        ctx = _mm(p, vh)                               # (Lq, Dh)
        out = out + _mm(ctx, wo[sl, :])                # head's Wo contribution
    return out + bo


def _co_kernel(
        x_ref, k_ref, mask_ref,
        # ---- FFM_1 (cross-attention) parameters ----
        wq1, bq1, wkv1, bkv1, wo1, bo1, g1a, be1a,
        fw11, fb11, fw12, fb12, g1b, be1b,
        # ---- FFM_2 (self-attention) parameters ----
        wqkv2, bqkv2, wo2, bo2, g2a, be2a,
        fw21, fb21, fw22, fb22, g2b, be2b,
        o_ref, *, num_heads):
    e = o_ref.shape[-1]

    x = x_ref[0].astype(jnp.float32)                   # (Lq, E)
    kin = k_ref[0].astype(jnp.float32)                 # (Lk, Kd)
    bias1 = mask_ref[0] * jnp.float32(-1e9)            # (1, Lk) additive mask

    # ------------------ FFM_1: cross-attention block -----------------------
    q = _mm(x, wq1[...]) + bq1[...]                    # (Lq, E)
    kv = _mm(kin, wkv1[...]) + bkv1[...]               # (Lk, 2E) fused K,V
    attn = _mha_proj(q, kv[:, :e], kv[:, e:], bias1,
                     wo1[...], bo1[...], num_heads)    # (Lq, E)
    x1 = _layernorm(attn + x, g1a[...], be1a[...])     # post-norm
    hid = jnp.maximum(_mm(x1, fw11[...]) + fb11[...], 0.0)
    x1 = _layernorm(_mm(hid, fw12[...]) + fb12[...] + x1, g1b[...], be1b[...])

    # ------------------ FFM_2: self-attention block (no mask) --------------
    qkv = _mm(x1, wqkv2[...]) + bqkv2[...]             # (Lq, 3E) fused Q,K,V
    attn2 = _mha_proj(qkv[:, :e], qkv[:, e:2 * e], qkv[:, 2 * e:], None,
                      wo2[...], bo2[...], num_heads)
    x2 = _layernorm(attn2 + x1, g2a[...], be2a[...])
    hid2 = jnp.maximum(_mm(x2, fw21[...]) + fb21[...], 0.0)
    x2 = _layernorm(_mm(hid2, fw22[...]) + fb22[...] + x2, g2b[...], be2b[...])

    o_ref[0] = x2.astype(o_ref.dtype)


# ----------------------------------------------------------------- wrapper --

_FFM1_ORDER = ("wq", "bq", "wkv", "bkv", "wo", "bo", "ln1_g", "ln1_b",
               "w1", "b1", "w2", "b2", "ln2_g", "ln2_b")
_FFM2_ORDER = ("wqkv", "bqkv", "wo", "bo", "ln1_g", "ln1_b",
               "w1", "b1", "w2", "b2", "ln2_g", "ln2_b")


def _replicated_spec(shape):
    n = len(shape)

    def imap(b):
        return (0,) * n

    return pl.BlockSpec(shape, imap)


def co_forward(params1, params2, x, k, key_padding_mask, num_heads):
    """x: (Lq, B, E), k: (Lk, B, kdim), key_padding_mask: (B, Lk) bool/None."""
    Lq, B, E = x.shape
    Lk, _, Kd = k.shape

    # Batch-major, lane-dense layout for the kernel (one transpose each way
    # at the call boundary; nothing else moves through XLA between ops).
    xb = jnp.transpose(x, (1, 0, 2))                   # (B, Lq, E)
    kb = jnp.transpose(k, (1, 0, 2))                   # (B, Lk, Kd)
    if key_padding_mask is None:
        maskf = jnp.zeros((B, 1, Lk), jnp.float32)
    else:
        maskf = key_padding_mask.astype(jnp.float32).reshape(B, 1, Lk)

    weights = ([params1[n] for n in _FFM1_ORDER]
               + [params2[n] for n in _FFM2_ORDER])

    in_specs = ([pl.BlockSpec((1, Lq, E), lambda b: (b, 0, 0)),
                 pl.BlockSpec((1, Lk, Kd), lambda b: (b, 0, 0)),
                 pl.BlockSpec((1, 1, Lk), lambda b: (b, 0, 0))]
                + [_replicated_spec(w.shape) for w in weights])

    out = pl.pallas_call(
        functools.partial(_co_kernel, num_heads=num_heads),
        out_shape=jax.ShapeDtypeStruct((B, Lq, E), jnp.float32),
        grid=(B,),
        in_specs=in_specs,
        out_specs=pl.BlockSpec((1, Lq, E), lambda b: (b, 0, 0)),
        compiler_params=pltpu.CompilerParams(
            dimension_semantics=("parallel",)),
    )(xb, kb, maskf, *weights)

    return jnp.transpose(out, (1, 0, 2))               # back to (Lq, B, E)


# ------------------------------------------------------------------ params --

def init_cross_ffm_params(key, embed_dim, kdim, ffn_dim):
    ks = jax.random.split(key, 6)
    s = 0.02
    f32 = jnp.float32
    return {
        "wq": jax.random.normal(ks[0], (embed_dim, embed_dim), f32) * s,
        "bq": jnp.zeros((1, embed_dim), f32),
        "wkv": jax.random.normal(ks[1], (kdim, 2 * embed_dim), f32) * s,
        "bkv": jnp.zeros((1, 2 * embed_dim), f32),
        "wo": jax.random.normal(ks[2], (embed_dim, embed_dim), f32) * s,
        "bo": jnp.zeros((1, embed_dim), f32),
        "ln1_g": jnp.ones((1, embed_dim), f32),
        "ln1_b": jnp.zeros((1, embed_dim), f32),
        "w1": jax.random.normal(ks[3], (embed_dim, ffn_dim), f32) * s,
        "b1": jnp.zeros((1, ffn_dim), f32),
        "w2": jax.random.normal(ks[4], (ffn_dim, embed_dim), f32) * s,
        "b2": jnp.zeros((1, embed_dim), f32),
        "ln2_g": jnp.ones((1, embed_dim), f32),
        "ln2_b": jnp.zeros((1, embed_dim), f32),
    }


def init_self_ffm_params(key, embed_dim, ffn_dim):
    ks = jax.random.split(key, 5)
    s = 0.02
    f32 = jnp.float32
    return {
        "wqkv": jax.random.normal(ks[0], (embed_dim, 3 * embed_dim), f32) * s,
        "bqkv": jnp.zeros((1, 3 * embed_dim), f32),
        "wo": jax.random.normal(ks[1], (embed_dim, embed_dim), f32) * s,
        "bo": jnp.zeros((1, embed_dim), f32),
        "ln1_g": jnp.ones((1, embed_dim), f32),
        "ln1_b": jnp.zeros((1, embed_dim), f32),
        "w1": jax.random.normal(ks[2], (embed_dim, ffn_dim), f32) * s,
        "b1": jnp.zeros((1, ffn_dim), f32),
        "w2": jax.random.normal(ks[3], (ffn_dim, embed_dim), f32) * s,
        "b2": jnp.zeros((1, embed_dim), f32),
        "ln2_g": jnp.ones((1, embed_dim), f32),
        "ln2_b": jnp.zeros((1, embed_dim), f32),
    }


# -------------------------------------------------------------------- main ---

if __name__ == "__main__":
    embed_dim, kdim, ffn_embed_dim, num_heads = 32, 16, 64, 4
    Lq, Lk, B = 8, 8, 2

    root = jax.random.PRNGKey(0)
    kp1, kp2, kx, kk = jax.random.split(root, 4)

    params1 = init_cross_ffm_params(kp1, embed_dim, kdim, ffn_embed_dim)
    params2 = init_self_ffm_params(kp2, embed_dim, ffn_embed_dim)

    x = jax.random.normal(kx, (Lq, B, embed_dim), jnp.float32)
    k = jax.random.normal(kk, (Lk, B, kdim), jnp.float32)
    key_padding_mask = jnp.zeros((B, Lk), jnp.bool_).at[1, Lk - 2:].set(True)

    fwd = jax.jit(functools.partial(co_forward, num_heads=num_heads))
    out = fwd(params1, params2, x, k, key_padding_mask)
    out = jax.block_until_ready(out)

    assert out.shape == (Lq, B, embed_dim)
    assert bool(jnp.all(jnp.isfinite(out)))
    print("KERNEL_OK")
</pallas_src>

<mosaic_0001>
module attributes {stable_mosaic.version = 11 : i64} {
  func.func @_co_kernel(%arg0: i32, %arg1: memref<1x8x32xf32, #tpu.memory_space<vmem>>, %arg2: memref<1x8x16xf32, #tpu.memory_space<vmem>>, %arg3: memref<1x1x8xf32, #tpu.memory_space<vmem>>, %arg4: memref<32x32xf32, #tpu.memory_space<vmem>>, %arg5: memref<1x32xf32, #tpu.memory_space<vmem>>, %arg6: memref<16x64xf32, #tpu.memory_space<vmem>>, %arg7: memref<1x64xf32, #tpu.memory_space<vmem>>, %arg8: memref<32x32xf32, #tpu.memory_space<vmem>>, %arg9: memref<1x32xf32, #tpu.memory_space<vmem>>, %arg10: memref<1x32xf32, #tpu.memory_space<vmem>>, %arg11: memref<1x32xf32, #tpu.memory_space<vmem>>, %arg12: memref<32x64xf32, #tpu.memory_space<vmem>>, %arg13: memref<1x64xf32, #tpu.memory_space<vmem>>, %arg14: memref<64x32xf32, #tpu.memory_space<vmem>>, %arg15: memref<1x32xf32, #tpu.memory_space<vmem>>, %arg16: memref<1x32xf32, #tpu.memory_space<vmem>>, %arg17: memref<1x32xf32, #tpu.memory_space<vmem>>, %arg18: memref<32x96xf32, #tpu.memory_space<vmem>>, %arg19: memref<1x96xf32, #tpu.memory_space<vmem>>, %arg20: memref<32x32xf32, #tpu.memory_space<vmem>>, %arg21: memref<1x32xf32, #tpu.memory_space<vmem>>, %arg22: memref<1x32xf32, #tpu.memory_space<vmem>>, %arg23: memref<1x32xf32, #tpu.memory_space<vmem>>, %arg24: memref<32x64xf32, #tpu.memory_space<vmem>>, %arg25: memref<1x64xf32, #tpu.memory_space<vmem>>, %arg26: memref<64x32xf32, #tpu.memory_space<vmem>>, %arg27: memref<1x32xf32, #tpu.memory_space<vmem>>, %arg28: memref<1x32xf32, #tpu.memory_space<vmem>>, %arg29: memref<1x32xf32, #tpu.memory_space<vmem>>, %arg30: memref<1x8x32xf32, #tpu.memory_space<vmem>>) attributes {dimension_semantics = [#tpu.dimension_semantics<parallel>], iteration_bounds = array<i64: 2>, scalar_prefetch = 0 : i64, scratch_operands = 0 : i64, tpu.core_type = #tpu.core_type<tc>, window_params = [{transform_indices = @transform_0, window_bounds = array<i64: 1, 8, 32>}, {transform_indices = @transform_1, window_bounds = array<i64: 1, 8, 16>}, {transform_indices = @transform_2, window_bounds = array<i64: 1, 1, 8>}, {pipeline_mode = #tpu.pipeline_mode<synchronous>, transform_indices = @transform_3, window_bounds = array<i64: 32, 32>}, {pipeline_mode = #tpu.pipeline_mode<synchronous>, transform_indices = @transform_4, window_bounds = array<i64: 1, 32>}, {pipeline_mode = #tpu.pipeline_mode<synchronous>, transform_indices = @transform_5, window_bounds = array<i64: 16, 64>}, {pipeline_mode = #tpu.pipeline_mode<synchronous>, transform_indices = @transform_6, window_bounds = array<i64: 1, 64>}, {pipeline_mode = #tpu.pipeline_mode<synchronous>, transform_indices = @transform_7, window_bounds = array<i64: 32, 32>}, {pipeline_mode = #tpu.pipeline_mode<synchronous>, transform_indices = @transform_8, window_bounds = array<i64: 1, 32>}, {pipeline_mode = #tpu.pipeline_mode<synchronous>, transform_indices = @transform_9, window_bounds = array<i64: 1, 32>}, {pipeline_mode = #tpu.pipeline_mode<synchronous>, transform_indices = @transform_10, window_bounds = array<i64: 1, 32>}, {pipeline_mode = #tpu.pipeline_mode<synchronous>, transform_indices = @transform_11, window_bounds = array<i64: 32, 64>}, {pipeline_mode = #tpu.pipeline_mode<synchronous>, transform_indices = @transform_12, window_bounds = array<i64: 1, 64>}, {pipeline_mode = #tpu.pipeline_mode<synchronous>, transform_indices = @transform_13, window_bounds = array<i64: 64, 32>}, {pipeline_mode = #tpu.pipeline_mode<synchronous>, transform_indices = @transform_14, window_bounds = array<i64: 1, 32>}, {pipeline_mode = #tpu.pipeline_mode<synchronous>, transform_indices = @transform_15, window_bounds = array<i64: 1, 32>}, {pipeline_mode = #tpu.pipeline_mode<synchronous>, transform_indices = @transform_16, window_bounds = array<i64: 1, 32>}, {pipeline_mode = #tpu.pipeline_mode<synchronous>, transform_indices = @transform_17, window_bounds = array<i64: 32, 96>}, {pipeline_mode = #tpu.pipeline_mode<synchronous>, transform_indices = @transform_18, window_bounds = array<i64: 1, 96>}, {pipeline_mode = #tpu.pipeline_mode<synchronous>, transform_indices = @transform_19, window_bounds = array<i64: 32, 32>}, {pipeline_mode = #tpu.pipeline_mode<synchronous>, transform_indices = @transform_20, window_bounds = array<i64: 1, 32>}, {pipeline_mode = #tpu.pipeline_mode<synchronous>, transform_indices = @transform_21, window_bounds = array<i64: 1, 32>}, {pipeline_mode = #tpu.pipeline_mode<synchronous>, transform_indices = @transform_22, window_bounds = array<i64: 1, 32>}, {pipeline_mode = #tpu.pipeline_mode<synchronous>, transform_indices = @transform_23, window_bounds = array<i64: 32, 64>}, {pipeline_mode = #tpu.pipeline_mode<synchronous>, transform_indices = @transform_24, window_bounds = array<i64: 1, 64>}, {pipeline_mode = #tpu.pipeline_mode<synchronous>, transform_indices = @transform_25, window_bounds = array<i64: 64, 32>}, {pipeline_mode = #tpu.pipeline_mode<synchronous>, transform_indices = @transform_26, window_bounds = array<i64: 1, 32>}, {pipeline_mode = #tpu.pipeline_mode<synchronous>, transform_indices = @transform_27, window_bounds = array<i64: 1, 32>}, {pipeline_mode = #tpu.pipeline_mode<synchronous>, transform_indices = @transform_28, window_bounds = array<i64: 1, 32>}, {transform_indices = @transform_29, window_bounds = array<i64: 1, 8, 32>}]} {
    %c0 = arith.constant 0 : index
    %c0_0 = arith.constant 0 : index
    %c0_1 = arith.constant 0 : index
    %0 = vector.load %arg1[%c0, %c0_0, %c0_1] : memref<1x8x32xf32, #tpu.memory_space<vmem>>, vector<1x8x32xf32>
    %1 = vector.shape_cast %0 : vector<1x8x32xf32> to vector<8x32xf32>
    %c0_2 = arith.constant 0 : index
    %c0_3 = arith.constant 0 : index
    %c0_4 = arith.constant 0 : index
    %2 = vector.load %arg2[%c0_2, %c0_3, %c0_4] : memref<1x8x16xf32, #tpu.memory_space<vmem>>, vector<1x8x16xf32>
    %3 = vector.shape_cast %2 : vector<1x8x16xf32> to vector<8x16xf32>
    %c0_5 = arith.constant 0 : index
    %c0_6 = arith.constant 0 : index
    %c0_7 = arith.constant 0 : index
    %4 = vector.load %arg3[%c0_5, %c0_6, %c0_7] : memref<1x1x8xf32, #tpu.memory_space<vmem>>, vector<1x1x8xf32>
    %5 = vector.shape_cast %4 : vector<1x1x8xf32> to vector<1x8xf32>
    %cst = arith.constant -1.000000e+09 : f32
    %6 = vector.broadcast %cst : f32 to vector<1x8xf32>
    %7 = arith.mulf %5, %6 : vector<1x8xf32>
    %c0_8 = arith.constant 0 : index
    %c0_9 = arith.constant 0 : index
    %8 = vector.load %arg4[%c0_8, %c0_9] : memref<32x32xf32, #tpu.memory_space<vmem>>, vector<32x32xf32>
    %9 = arith.truncf %1 : vector<8x32xf32> to vector<8x32xbf16>
    %10 = arith.truncf %8 : vector<32x32xf32> to vector<32x32xbf16>
    %cst_10 = arith.constant dense<0.000000e+00> : vector<8x32xf32>
    %11 = tpu.matmul %9, %10, %cst_10 {dimension_numbers = #tpu.dot_dimension_numbers<[1], [0], [0], [1], [0, 0, 1, 1], [], []>} : vector<8x32xbf16>, vector<32x32xbf16>, vector<8x32xf32> -> vector<8x32xf32>
    %c0_11 = arith.constant 0 : index
    %c0_12 = arith.constant 0 : index
    %12 = vector.load %arg5[%c0_11, %c0_12] : memref<1x32xf32, #tpu.memory_space<vmem>>, vector<1x32xf32>
    %13 = vector.broadcast %12 : vector<1x32xf32> to vector<8x32xf32>
    %14 = arith.addf %11, %13 : vector<8x32xf32>
    %c0_13 = arith.constant 0 : index
    %c0_14 = arith.constant 0 : index
    %15 = vector.load %arg6[%c0_13, %c0_14] : memref<16x64xf32, #tpu.memory_space<vmem>>, vector<16x64xf32>
    %16 = arith.truncf %3 : vector<8x16xf32> to vector<8x16xbf16>
    %17 = arith.truncf %15 : vector<16x64xf32> to vector<16x64xbf16>
    %cst_15 = arith.constant dense<0.000000e+00> : vector<8x64xf32>
    %18 = tpu.matmul %16, %17, %cst_15 {dimension_numbers = #tpu.dot_dimension_numbers<[1], [0], [0], [1], [0, 0, 1, 1], [], []>} : vector<8x16xbf16>, vector<16x64xbf16>, vector<8x64xf32> -> vector<8x64xf32>
    %c0_16 = arith.constant 0 : index
    %c0_17 = arith.constant 0 : index
    %19 = vector.load %arg7[%c0_16, %c0_17] : memref<1x64xf32, #tpu.memory_space<vmem>>, vector<1x64xf32>
    %20 = vector.broadcast %19 : vector<1x64xf32> to vector<8x64xf32>
    %21 = arith.addf %18, %20 : vector<8x64xf32>
    %22 = vector.extract_strided_slice %21 {offsets = [0, 0], sizes = [8, 32], strides = [1, 1]} : vector<8x64xf32> to vector<8x32xf32>
    %23 = vector.extract_strided_slice %21 {offsets = [0, 32], sizes = [8, 32], strides = [1, 1]} : vector<8x64xf32> to vector<8x32xf32>
    %c0_18 = arith.constant 0 : index
    %c0_19 = arith.constant 0 : index
    %24 = vector.load %arg8[%c0_18, %c0_19] : memref<32x32xf32, #tpu.memory_space<vmem>>, vector<32x32xf32>
    %c0_20 = arith.constant 0 : index
    %c0_21 = arith.constant 0 : index
    %25 = vector.load %arg9[%c0_20, %c0_21] : memref<1x32xf32, #tpu.memory_space<vmem>>, vector<1x32xf32>
    %cst_22 = arith.constant 0.000000e+00 : f32
    %26 = vector.broadcast %cst_22 : f32 to vector<8x32xf32>
    %27 = vector.extract_strided_slice %14 {offsets = [0, 0], sizes = [8, 8], strides = [1, 1]} : vector<8x32xf32> to vector<8x8xf32>
    %cst_23 = arith.constant 0.353553385 : f32
    %28 = vector.broadcast %cst_23 : f32 to vector<8x8xf32>
    %29 = arith.mulf %27, %28 : vector<8x8xf32>
    %30 = vector.extract_strided_slice %22 {offsets = [0, 0], sizes = [8, 8], strides = [1, 1]} : vector<8x32xf32> to vector<8x8xf32>
    %31 = vector.extract_strided_slice %23 {offsets = [0, 0], sizes = [8, 8], strides = [1, 1]} : vector<8x32xf32> to vector<8x8xf32>
    %32 = tpu.transpose %30, [1, 0] : vector<8x8xf32> -> vector<8x8xf32>
    %33 = arith.truncf %29 : vector<8x8xf32> to vector<8x8xbf16>
    %34 = arith.truncf %32 : vector<8x8xf32> to vector<8x8xbf16>
    %cst_24 = arith.constant dense<0.000000e+00> : vector<8x8xf32>
    %35 = tpu.matmul %33, %34, %cst_24 {dimension_numbers = #tpu.dot_dimension_numbers<[1], [0], [0], [1], [0, 0, 1, 1], [], []>} : vector<8x8xbf16>, vector<8x8xbf16>, vector<8x8xf32> -> vector<8x8xf32>
    %36 = vector.broadcast %7 : vector<1x8xf32> to vector<8x8xf32>
    %37 = arith.addf %35, %36 : vector<8x8xf32>
    %cst_25 = arith.constant dense<0xFF800000> : vector<8xf32>
    %38 = vector.multi_reduction <maximumf>, %37, %cst_25 [1] : vector<8x8xf32> to vector<8xf32>
    %39 = vector.shape_cast %38 : vector<8xf32> to vector<8x1xf32>
    %40 = vector.broadcast %39 : vector<8x1xf32> to vector<8x8xf32>
    %41 = arith.subf %37, %40 : vector<8x8xf32>
    %42 = math.exp %41 : vector<8x8xf32>
    %cst_26 = arith.constant dense<0.000000e+00> : vector<8xf32>
    %43 = vector.multi_reduction <add>, %42, %cst_26 [1] : vector<8x8xf32> to vector<8xf32>
    %44 = vector.shape_cast %43 : vector<8xf32> to vector<8x1xf32>
    %45 = tpu.reciprocal %44 {approx = true} : vector<8x1xf32> -> vector<8x1xf32>
    %46 = vector.broadcast %45 : vector<8x1xf32> to vector<8x8xf32>
    %47 = arith.mulf %42, %46 : vector<8x8xf32>
    %48 = arith.truncf %47 : vector<8x8xf32> to vector<8x8xbf16>
    %49 = arith.truncf %31 : vector<8x8xf32> to vector<8x8xbf16>
    %cst_27 = arith.constant dense<0.000000e+00> : vector<8x8xf32>
    %50 = tpu.matmul %48, %49, %cst_27 {dimension_numbers = #tpu.dot_dimension_numbers<[1], [0], [0], [1], [0, 0, 1, 1], [], []>} : vector<8x8xbf16>, vector<8x8xbf16>, vector<8x8xf32> -> vector<8x8xf32>
    %51 = vector.extract_strided_slice %24 {offsets = [0, 0], sizes = [8, 32], strides = [1, 1]} : vector<32x32xf32> to vector<8x32xf32>
    %52 = arith.truncf %50 : vector<8x8xf32> to vector<8x8xbf16>
    %53 = arith.truncf %51 : vector<8x32xf32> to vector<8x32xbf16>
    %cst_28 = arith.constant dense<0.000000e+00> : vector<8x32xf32>
    %54 = tpu.matmul %52, %53, %cst_28 {dimension_numbers = #tpu.dot_dimension_numbers<[1], [0], [0], [1], [0, 0, 1, 1], [], []>} : vector<8x8xbf16>, vector<8x32xbf16>, vector<8x32xf32> -> vector<8x32xf32>
    %55 = arith.addf %26, %54 : vector<8x32xf32>
    %56 = vector.extract_strided_slice %14 {offsets = [0, 8], sizes = [8, 8], strides = [1, 1]} : vector<8x32xf32> to vector<8x8xf32>
    %cst_29 = arith.constant 0.353553385 : f32
    %57 = vector.broadcast %cst_29 : f32 to vector<8x8xf32>
    %58 = arith.mulf %56, %57 : vector<8x8xf32>
    %59 = vector.extract_strided_slice %22 {offsets = [0, 8], sizes = [8, 8], strides = [1, 1]} : vector<8x32xf32> to vector<8x8xf32>
    %60 = vector.extract_strided_slice %23 {offsets = [0, 8], sizes = [8, 8], strides = [1, 1]} : vector<8x32xf32> to vector<8x8xf32>
    %61 = tpu.transpose %59, [1, 0] : vector<8x8xf32> -> vector<8x8xf32>
    %62 = arith.truncf %58 : vector<8x8xf32> to vector<8x8xbf16>
    %63 = arith.truncf %61 : vector<8x8xf32> to vector<8x8xbf16>
    %cst_30 = arith.constant dense<0.000000e+00> : vector<8x8xf32>
    %64 = tpu.matmul %62, %63, %cst_30 {dimension_numbers = #tpu.dot_dimension_numbers<[1], [0], [0], [1], [0, 0, 1, 1], [], []>} : vector<8x8xbf16>, vector<8x8xbf16>, vector<8x8xf32> -> vector<8x8xf32>
    %65 = vector.broadcast %7 : vector<1x8xf32> to vector<8x8xf32>
    %66 = arith.addf %64, %65 : vector<8x8xf32>
    %cst_31 = arith.constant dense<0xFF800000> : vector<8xf32>
    %67 = vector.multi_reduction <maximumf>, %66, %cst_31 [1] : vector<8x8xf32> to vector<8xf32>
    %68 = vector.shape_cast %67 : vector<8xf32> to vector<8x1xf32>
    %69 = vector.broadcast %68 : vector<8x1xf32> to vector<8x8xf32>
    %70 = arith.subf %66, %69 : vector<8x8xf32>
    %71 = math.exp %70 : vector<8x8xf32>
    %cst_32 = arith.constant dense<0.000000e+00> : vector<8xf32>
    %72 = vector.multi_reduction <add>, %71, %cst_32 [1] : vector<8x8xf32> to vector<8xf32>
    %73 = vector.shape_cast %72 : vector<8xf32> to vector<8x1xf32>
    %74 = tpu.reciprocal %73 {approx = true} : vector<8x1xf32> -> vector<8x1xf32>
    %75 = vector.broadcast %74 : vector<8x1xf32> to vector<8x8xf32>
    %76 = arith.mulf %71, %75 : vector<8x8xf32>
    %77 = arith.truncf %76 : vector<8x8xf32> to vector<8x8xbf16>
    %78 = arith.truncf %60 : vector<8x8xf32> to vector<8x8xbf16>
    %cst_33 = arith.constant dense<0.000000e+00> : vector<8x8xf32>
    %79 = tpu.matmul %77, %78, %cst_33 {dimension_numbers = #tpu.dot_dimension_numbers<[1], [0], [0], [1], [0, 0, 1, 1], [], []>} : vector<8x8xbf16>, vector<8x8xbf16>, vector<8x8xf32> -> vector<8x8xf32>
    %80 = vector.extract_strided_slice %24 {offsets = [8, 0], sizes = [8, 32], strides = [1, 1]} : vector<32x32xf32> to vector<8x32xf32>
    %81 = arith.truncf %79 : vector<8x8xf32> to vector<8x8xbf16>
    %82 = arith.truncf %80 : vector<8x32xf32> to vector<8x32xbf16>
    %cst_34 = arith.constant dense<0.000000e+00> : vector<8x32xf32>
    %83 = tpu.matmul %81, %82, %cst_34 {dimension_numbers = #tpu.dot_dimension_numbers<[1], [0], [0], [1], [0, 0, 1, 1], [], []>} : vector<8x8xbf16>, vector<8x32xbf16>, vector<8x32xf32> -> vector<8x32xf32>
    %84 = arith.addf %55, %83 : vector<8x32xf32>
    %85 = vector.extract_strided_slice %14 {offsets = [0, 16], sizes = [8, 8], strides = [1, 1]} : vector<8x32xf32> to vector<8x8xf32>
    %cst_35 = arith.constant 0.353553385 : f32
    %86 = vector.broadcast %cst_35 : f32 to vector<8x8xf32>
    %87 = arith.mulf %85, %86 : vector<8x8xf32>
    %88 = vector.extract_strided_slice %22 {offsets = [0, 16], sizes = [8, 8], strides = [1, 1]} : vector<8x32xf32> to vector<8x8xf32>
    %89 = vector.extract_strided_slice %23 {offsets = [0, 16], sizes = [8, 8], strides = [1, 1]} : vector<8x32xf32> to vector<8x8xf32>
    %90 = tpu.transpose %88, [1, 0] : vector<8x8xf32> -> vector<8x8xf32>
    %91 = arith.truncf %87 : vector<8x8xf32> to vector<8x8xbf16>
    %92 = arith.truncf %90 : vector<8x8xf32> to vector<8x8xbf16>
    %cst_36 = arith.constant dense<0.000000e+00> : vector<8x8xf32>
    %93 = tpu.matmul %91, %92, %cst_36 {dimension_numbers = #tpu.dot_dimension_numbers<[1], [0], [0], [1], [0, 0, 1, 1], [], []>} : vector<8x8xbf16>, vector<8x8xbf16>, vector<8x8xf32> -> vector<8x8xf32>
    %94 = vector.broadcast %7 : vector<1x8xf32> to vector<8x8xf32>
    %95 = arith.addf %93, %94 : vector<8x8xf32>
    %cst_37 = arith.constant dense<0xFF800000> : vector<8xf32>
    %96 = vector.multi_reduction <maximumf>, %95, %cst_37 [1] : vector<8x8xf32> to vector<8xf32>
    %97 = vector.shape_cast %96 : vector<8xf32> to vector<8x1xf32>
    %98 = vector.broadcast %97 : vector<8x1xf32> to vector<8x8xf32>
    %99 = arith.subf %95, %98 : vector<8x8xf32>
    %100 = math.exp %99 : vector<8x8xf32>
    %cst_38 = arith.constant dense<0.000000e+00> : vector<8xf32>
    %101 = vector.multi_reduction <add>, %100, %cst_38 [1] : vector<8x8xf32> to vector<8xf32>
    %102 = vector.shape_cast %101 : vector<8xf32> to vector<8x1xf32>
    %103 = tpu.reciprocal %102 {approx = true} : vector<8x1xf32> -> vector<8x1xf32>
    %104 = vector.broadcast %103 : vector<8x1xf32> to vector<8x8xf32>
    %105 = arith.mulf %100, %104 : vector<8x8xf32>
    %106 = arith.truncf %105 : vector<8x8xf32> to vector<8x8xbf16>
    %107 = arith.truncf %89 : vector<8x8xf32> to vector<8x8xbf16>
    %cst_39 = arith.constant dense<0.000000e+00> : vector<8x8xf32>
    %108 = tpu.matmul %106, %107, %cst_39 {dimension_numbers = #tpu.dot_dimension_numbers<[1], [0], [0], [1], [0, 0, 1, 1], [], []>} : vector<8x8xbf16>, vector<8x8xbf16>, vector<8x8xf32> -> vector<8x8xf32>
    %109 = vector.extract_strided_slice %24 {offsets = [16, 0], sizes = [8, 32], strides = [1, 1]} : vector<32x32xf32> to vector<8x32xf32>
    %110 = arith.truncf %108 : vector<8x8xf32> to vector<8x8xbf16>
    %111 = arith.truncf %109 : vector<8x32xf32> to vector<8x32xbf16>
    %cst_40 = arith.constant dense<0.000000e+00> : vector<8x32xf32>
    %112 = tpu.matmul %110, %111, %cst_40 {dimension_numbers = #tpu.dot_dimension_numbers<[1], [0], [0], [1], [0, 0, 1, 1], [], []>} : vector<8x8xbf16>, vector<8x32xbf16>, vector<8x32xf32> -> vector<8x32xf32>
    %113 = arith.addf %84, %112 : vector<8x32xf32>
    %114 = vector.extract_strided_slice %14 {offsets = [0, 24], sizes = [8, 8], strides = [1, 1]} : vector<8x32xf32> to vector<8x8xf32>
    %cst_41 = arith.constant 0.353553385 : f32
    %115 = vector.broadcast %cst_41 : f32 to vector<8x8xf32>
    %116 = arith.mulf %114, %115 : vector<8x8xf32>
    %117 = vector.extract_strided_slice %22 {offsets = [0, 24], sizes = [8, 8], strides = [1, 1]} : vector<8x32xf32> to vector<8x8xf32>
    %118 = vector.extract_strided_slice %23 {offsets = [0, 24], sizes = [8, 8], strides = [1, 1]} : vector<8x32xf32> to vector<8x8xf32>
    %119 = tpu.transpose %117, [1, 0] : vector<8x8xf32> -> vector<8x8xf32>
    %120 = arith.truncf %116 : vector<8x8xf32> to vector<8x8xbf16>
    %121 = arith.truncf %119 : vector<8x8xf32> to vector<8x8xbf16>
    %cst_42 = arith.constant dense<0.000000e+00> : vector<8x8xf32>
    %122 = tpu.matmul %120, %121, %cst_42 {dimension_numbers = #tpu.dot_dimension_numbers<[1], [0], [0], [1], [0, 0, 1, 1], [], []>} : vector<8x8xbf16>, vector<8x8xbf16>, vector<8x8xf32> -> vector<8x8xf32>
    %123 = vector.broadcast %7 : vector<1x8xf32> to vector<8x8xf32>
    %124 = arith.addf %122, %123 : vector<8x8xf32>
    %cst_43 = arith.constant dense<0xFF800000> : vector<8xf32>
    %125 = vector.multi_reduction <maximumf>, %124, %cst_43 [1] : vector<8x8xf32> to vector<8xf32>
    %126 = vector.shape_cast %125 : vector<8xf32> to vector<8x1xf32>
    %127 = vector.broadcast %126 : vector<8x1xf32> to vector<8x8xf32>
    %128 = arith.subf %124, %127 : vector<8x8xf32>
    %129 = math.exp %128 : vector<8x8xf32>
    %cst_44 = arith.constant dense<0.000000e+00> : vector<8xf32>
    %130 = vector.multi_reduction <add>, %129, %cst_44 [1] : vector<8x8xf32> to vector<8xf32>
    %131 = vector.shape_cast %130 : vector<8xf32> to vector<8x1xf32>
    %132 = tpu.reciprocal %131 {approx = true} : vector<8x1xf32> -> vector<8x1xf32>
    %133 = vector.broadcast %132 : vector<8x1xf32> to vector<8x8xf32>
    %134 = arith.mulf %129, %133 : vector<8x8xf32>
    %135 = arith.truncf %134 : vector<8x8xf32> to vector<8x8xbf16>
    %136 = arith.truncf %118 : vector<8x8xf32> to vector<8x8xbf16>
    %cst_45 = arith.constant dense<0.000000e+00> : vector<8x8xf32>
    %137 = tpu.matmul %135, %136, %cst_45 {dimension_numbers = #tpu.dot_dimension_numbers<[1], [0], [0], [1], [0, 0, 1, 1], [], []>} : vector<8x8xbf16>, vector<8x8xbf16>, vector<8x8xf32> -> vector<8x8xf32>
    %138 = vector.extract_strided_slice %24 {offsets = [24, 0], sizes = [8, 32], strides = [1, 1]} : vector<32x32xf32> to vector<8x32xf32>
    %139 = arith.truncf %137 : vector<8x8xf32> to vector<8x8xbf16>
    %140 = arith.truncf %138 : vector<8x32xf32> to vector<8x32xbf16>
    %cst_46 = arith.constant dense<0.000000e+00> : vector<8x32xf32>
    %141 = tpu.matmul %139, %140, %cst_46 {dimension_numbers = #tpu.dot_dimension_numbers<[1], [0], [0], [1], [0, 0, 1, 1], [], []>} : vector<8x8xbf16>, vector<8x32xbf16>, vector<8x32xf32> -> vector<8x32xf32>
    %142 = arith.addf %113, %141 : vector<8x32xf32>
    %143 = vector.broadcast %25 : vector<1x32xf32> to vector<8x32xf32>
    %144 = arith.addf %142, %143 : vector<8x32xf32>
    %145 = arith.addf %144, %1 : vector<8x32xf32>
    %c0_47 = arith.constant 0 : index
    %c0_48 = arith.constant 0 : index
    %146 = vector.load %arg10[%c0_47, %c0_48] : memref<1x32xf32, #tpu.memory_space<vmem>>, vector<1x32xf32>
    %c0_49 = arith.constant 0 : index
    %c0_50 = arith.constant 0 : index
    %147 = vector.load %arg11[%c0_49, %c0_50] : memref<1x32xf32, #tpu.memory_space<vmem>>, vector<1x32xf32>
    %cst_51 = arith.constant dense<0.000000e+00> : vector<8xf32>
    %148 = vector.multi_reduction <add>, %145, %cst_51 [1] : vector<8x32xf32> to vector<8xf32>
    %149 = vector.shape_cast %148 : vector<8xf32> to vector<8x1xf32>
    %cst_52 = arith.constant 3.200000e+01 : f32
    %150 = vector.broadcast %cst_52 : f32 to vector<8x1xf32>
    %151 = arith.divf %149, %150 : vector<8x1xf32>
    %152 = vector.broadcast %151 : vector<8x1xf32> to vector<8x32xf32>
    %153 = arith.subf %145, %152 : vector<8x32xf32>
    %154 = arith.mulf %153, %153 : vector<8x32xf32>
    %cst_53 = arith.constant dense<0.000000e+00> : vector<8xf32>
    %155 = vector.multi_reduction <add>, %154, %cst_53 [1] : vector<8x32xf32> to vector<8xf32>
    %156 = vector.shape_cast %155 : vector<8xf32> to vector<8x1xf32>
    %cst_54 = arith.constant 3.200000e+01 : f32
    %157 = vector.broadcast %cst_54 : f32 to vector<8x1xf32>
    %158 = arith.divf %156, %157 : vector<8x1xf32>
    %159 = vector.broadcast %151 : vector<8x1xf32> to vector<8x32xf32>
    %160 = arith.subf %145, %159 : vector<8x32xf32>
    %cst_55 = arith.constant 9.99999974E-6 : f32
    %161 = vector.broadcast %cst_55 : f32 to vector<8x1xf32>
    %162 = arith.addf %158, %161 : vector<8x1xf32>
    %163 = math.rsqrt %162 : vector<8x1xf32>
    %164 = vector.broadcast %163 : vector<8x1xf32> to vector<8x32xf32>
    %165 = arith.mulf %160, %164 : vector<8x32xf32>
    %166 = vector.broadcast %146 : vector<1x32xf32> to vector<8x32xf32>
    %167 = arith.mulf %165, %166 : vector<8x32xf32>
    %168 = vector.broadcast %147 : vector<1x32xf32> to vector<8x32xf32>
    %169 = arith.addf %167, %168 : vector<8x32xf32>
    %c0_56 = arith.constant 0 : index
    %c0_57 = arith.constant 0 : index
    %170 = vector.load %arg12[%c0_56, %c0_57] : memref<32x64xf32, #tpu.memory_space<vmem>>, vector<32x64xf32>
    %171 = arith.truncf %169 : vector<8x32xf32> to vector<8x32xbf16>
    %172 = arith.truncf %170 : vector<32x64xf32> to vector<32x64xbf16>
    %cst_58 = arith.constant dense<0.000000e+00> : vector<8x64xf32>
    %173 = tpu.matmul %171, %172, %cst_58 {dimension_numbers = #tpu.dot_dimension_numbers<[1], [0], [0], [1], [0, 0, 1, 1], [], []>} : vector<8x32xbf16>, vector<32x64xbf16>, vector<8x64xf32> -> vector<8x64xf32>
    %c0_59 = arith.constant 0 : index
    %c0_60 = arith.constant 0 : index
    %174 = vector.load %arg13[%c0_59, %c0_60] : memref<1x64xf32, #tpu.memory_space<vmem>>, vector<1x64xf32>
    %175 = vector.broadcast %174 : vector<1x64xf32> to vector<8x64xf32>
    %176 = arith.addf %173, %175 : vector<8x64xf32>
    %cst_61 = arith.constant 0.000000e+00 : f32
    %177 = vector.broadcast %cst_61 : f32 to vector<8x64xf32>
    %178 = arith.maximumf %176, %177 : vector<8x64xf32>
    %c0_62 = arith.constant 0 : index
    %c0_63 = arith.constant 0 : index
    %179 = vector.load %arg14[%c0_62, %c0_63] : memref<64x32xf32, #tpu.memory_space<vmem>>, vector<64x32xf32>
    %180 = arith.truncf %178 : vector<8x64xf32> to vector<8x64xbf16>
    %181 = arith.truncf %179 : vector<64x32xf32> to vector<64x32xbf16>
    %cst_64 = arith.constant dense<0.000000e+00> : vector<8x32xf32>
    %182 = tpu.matmul %180, %181, %cst_64 {dimension_numbers = #tpu.dot_dimension_numbers<[1], [0], [0], [1], [0, 0, 1, 1], [], []>} : vector<8x64xbf16>, vector<64x32xbf16>, vector<8x32xf32> -> vector<8x32xf32>
    %c0_65 = arith.constant 0 : index
    %c0_66 = arith.constant 0 : index
    %183 = vector.load %arg15[%c0_65, %c0_66] : memref<1x32xf32, #tpu.memory_space<vmem>>, vector<1x32xf32>
    %184 = vector.broadcast %183 : vector<1x32xf32> to vector<8x32xf32>
    %185 = arith.addf %182, %184 : vector<8x32xf32>
    %186 = arith.addf %185, %169 : vector<8x32xf32>
    %c0_67 = arith.constant 0 : index
    %c0_68 = arith.constant 0 : index
    %187 = vector.load %arg16[%c0_67, %c0_68] : memref<1x32xf32, #tpu.memory_space<vmem>>, vector<1x32xf32>
    %c0_69 = arith.constant 0 : index
    %c0_70 = arith.constant 0 : index
    %188 = vector.load %arg17[%c0_69, %c0_70] : memref<1x32xf32, #tpu.memory_space<vmem>>, vector<1x32xf32>
    %cst_71 = arith.constant dense<0.000000e+00> : vector<8xf32>
    %189 = vector.multi_reduction <add>, %186, %cst_71 [1] : vector<8x32xf32> to vector<8xf32>
    %190 = vector.shape_cast %189 : vector<8xf32> to vector<8x1xf32>
    %cst_72 = arith.constant 3.200000e+01 : f32
    %191 = vector.broadcast %cst_72 : f32 to vector<8x1xf32>
    %192 = arith.divf %190, %191 : vector<8x1xf32>
    %193 = vector.broadcast %192 : vector<8x1xf32> to vector<8x32xf32>
    %194 = arith.subf %186, %193 : vector<8x32xf32>
    %195 = arith.mulf %194, %194 : vector<8x32xf32>
    %cst_73 = arith.constant dense<0.000000e+00> : vector<8xf32>
    %196 = vector.multi_reduction <add>, %195, %cst_73 [1] : vector<8x32xf32> to vector<8xf32>
    %197 = vector.shape_cast %196 : vector<8xf32> to vector<8x1xf32>
    %cst_74 = arith.constant 3.200000e+01 : f32
    %198 = vector.broadcast %cst_74 : f32 to vector<8x1xf32>
    %199 = arith.divf %197, %198 : vector<8x1xf32>
    %200 = vector.broadcast %192 : vector<8x1xf32> to vector<8x32xf32>
    %201 = arith.subf %186, %200 : vector<8x32xf32>
    %cst_75 = arith.constant 9.99999974E-6 : f32
    %202 = vector.broadcast %cst_75 : f32 to vector<8x1xf32>
    %203 = arith.addf %199, %202 : vector<8x1xf32>
    %204 = math.rsqrt %203 : vector<8x1xf32>
    %205 = vector.broadcast %204 : vector<8x1xf32> to vector<8x32xf32>
    %206 = arith.mulf %201, %205 : vector<8x32xf32>
    %207 = vector.broadcast %187 : vector<1x32xf32> to vector<8x32xf32>
    %208 = arith.mulf %206, %207 : vector<8x32xf32>
    %209 = vector.broadcast %188 : vector<1x32xf32> to vector<8x32xf32>
    %210 = arith.addf %208, %209 : vector<8x32xf32>
    %c0_76 = arith.constant 0 : index
    %c0_77 = arith.constant 0 : index
    %211 = vector.load %arg18[%c0_76, %c0_77] : memref<32x96xf32, #tpu.memory_space<vmem>>, vector<32x96xf32>
    %212 = arith.truncf %210 : vector<8x32xf32> to vector<8x32xbf16>
    %213 = arith.truncf %211 : vector<32x96xf32> to vector<32x96xbf16>
    %cst_78 = arith.constant dense<0.000000e+00> : vector<8x96xf32>
    %214 = tpu.matmul %212, %213, %cst_78 {dimension_numbers = #tpu.dot_dimension_numbers<[1], [0], [0], [1], [0, 0, 1, 1], [], []>} : vector<8x32xbf16>, vector<32x96xbf16>, vector<8x96xf32> -> vector<8x96xf32>
    %c0_79 = arith.constant 0 : index
    %c0_80 = arith.constant 0 : index
    %215 = vector.load %arg19[%c0_79, %c0_80] : memref<1x96xf32, #tpu.memory_space<vmem>>, vector<1x96xf32>
    %216 = vector.broadcast %215 : vector<1x96xf32> to vector<8x96xf32>
    %217 = arith.addf %214, %216 : vector<8x96xf32>
    %218 = vector.extract_strided_slice %217 {offsets = [0, 0], sizes = [8, 32], strides = [1, 1]} : vector<8x96xf32> to vector<8x32xf32>
    %219 = vector.extract_strided_slice %217 {offsets = [0, 32], sizes = [8, 32], strides = [1, 1]} : vector<8x96xf32> to vector<8x32xf32>
    %220 = vector.extract_strided_slice %217 {offsets = [0, 64], sizes = [8, 32], strides = [1, 1]} : vector<8x96xf32> to vector<8x32xf32>
    %c0_81 = arith.constant 0 : index
    %c0_82 = arith.constant 0 : index
    %221 = vector.load %arg20[%c0_81, %c0_82] : memref<32x32xf32, #tpu.memory_space<vmem>>, vector<32x32xf32>
    %c0_83 = arith.constant 0 : index
    %c0_84 = arith.constant 0 : index
    %222 = vector.load %arg21[%c0_83, %c0_84] : memref<1x32xf32, #tpu.memory_space<vmem>>, vector<1x32xf32>
    %cst_85 = arith.constant 0.000000e+00 : f32
    %223 = vector.broadcast %cst_85 : f32 to vector<8x32xf32>
    %224 = vector.extract_strided_slice %218 {offsets = [0, 0], sizes = [8, 8], strides = [1, 1]} : vector<8x32xf32> to vector<8x8xf32>
    %cst_86 = arith.constant 0.353553385 : f32
    %225 = vector.broadcast %cst_86 : f32 to vector<8x8xf32>
    %226 = arith.mulf %224, %225 : vector<8x8xf32>
    %227 = vector.extract_strided_slice %219 {offsets = [0, 0], sizes = [8, 8], strides = [1, 1]} : vector<8x32xf32> to vector<8x8xf32>
    %228 = vector.extract_strided_slice %220 {offsets = [0, 0], sizes = [8, 8], strides = [1, 1]} : vector<8x32xf32> to vector<8x8xf32>
    %229 = tpu.transpose %227, [1, 0] : vector<8x8xf32> -> vector<8x8xf32>
    %230 = arith.truncf %226 : vector<8x8xf32> to vector<8x8xbf16>
    %231 = arith.truncf %229 : vector<8x8xf32> to vector<8x8xbf16>
    %cst_87 = arith.constant dense<0.000000e+00> : vector<8x8xf32>
    %232 = tpu.matmul %230, %231, %cst_87 {dimension_numbers = #tpu.dot_dimension_numbers<[1], [0], [0], [1], [0, 0, 1, 1], [], []>} : vector<8x8xbf16>, vector<8x8xbf16>, vector<8x8xf32> -> vector<8x8xf32>
    %cst_88 = arith.constant dense<0xFF800000> : vector<8xf32>
    %233 = vector.multi_reduction <maximumf>, %232, %cst_88 [1] : vector<8x8xf32> to vector<8xf32>
    %234 = vector.shape_cast %233 : vector<8xf32> to vector<8x1xf32>
    %235 = vector.broadcast %234 : vector<8x1xf32> to vector<8x8xf32>
    %236 = arith.subf %232, %235 : vector<8x8xf32>
    %237 = math.exp %236 : vector<8x8xf32>
    %cst_89 = arith.constant dense<0.000000e+00> : vector<8xf32>
    %238 = vector.multi_reduction <add>, %237, %cst_89 [1] : vector<8x8xf32> to vector<8xf32>
    %239 = vector.shape_cast %238 : vector<8xf32> to vector<8x1xf32>
    %240 = tpu.reciprocal %239 {approx = true} : vector<8x1xf32> -> vector<8x1xf32>
    %241 = vector.broadcast %240 : vector<8x1xf32> to vector<8x8xf32>
    %242 = arith.mulf %237, %241 : vector<8x8xf32>
    %243 = arith.truncf %242 : vector<8x8xf32> to vector<8x8xbf16>
    %244 = arith.truncf %228 : vector<8x8xf32> to vector<8x8xbf16>
    %cst_90 = arith.constant dense<0.000000e+00> : vector<8x8xf32>
    %245 = tpu.matmul %243, %244, %cst_90 {dimension_numbers = #tpu.dot_dimension_numbers<[1], [0], [0], [1], [0, 0, 1, 1], [], []>} : vector<8x8xbf16>, vector<8x8xbf16>, vector<8x8xf32> -> vector<8x8xf32>
    %246 = vector.extract_strided_slice %221 {offsets = [0, 0], sizes = [8, 32], strides = [1, 1]} : vector<32x32xf32> to vector<8x32xf32>
    %247 = arith.truncf %245 : vector<8x8xf32> to vector<8x8xbf16>
    %248 = arith.truncf %246 : vector<8x32xf32> to vector<8x32xbf16>
    %cst_91 = arith.constant dense<0.000000e+00> : vector<8x32xf32>
    %249 = tpu.matmul %247, %248, %cst_91 {dimension_numbers = #tpu.dot_dimension_numbers<[1], [0], [0], [1], [0, 0, 1, 1], [], []>} : vector<8x8xbf16>, vector<8x32xbf16>, vector<8x32xf32> -> vector<8x32xf32>
    %250 = arith.addf %223, %249 : vector<8x32xf32>
    %251 = vector.extract_strided_slice %218 {offsets = [0, 8], sizes = [8, 8], strides = [1, 1]} : vector<8x32xf32> to vector<8x8xf32>
    %cst_92 = arith.constant 0.353553385 : f32
    %252 = vector.broadcast %cst_92 : f32 to vector<8x8xf32>
    %253 = arith.mulf %251, %252 : vector<8x8xf32>
    %254 = vector.extract_strided_slice %219 {offsets = [0, 8], sizes = [8, 8], strides = [1, 1]} : vector<8x32xf32> to vector<8x8xf32>
    %255 = vector.extract_strided_slice %220 {offsets = [0, 8], sizes = [8, 8], strides = [1, 1]} : vector<8x32xf32> to vector<8x8xf32>
    %256 = tpu.transpose %254, [1, 0] : vector<8x8xf32> -> vector<8x8xf32>
    %257 = arith.truncf %253 : vector<8x8xf32> to vector<8x8xbf16>
    %258 = arith.truncf %256 : vector<8x8xf32> to vector<8x8xbf16>
    %cst_93 = arith.constant dense<0.000000e+00> : vector<8x8xf32>
    %259 = tpu.matmul %257, %258, %cst_93 {dimension_numbers = #tpu.dot_dimension_numbers<[1], [0], [0], [1], [0, 0, 1, 1], [], []>} : vector<8x8xbf16>, vector<8x8xbf16>, vector<8x8xf32> -> vector<8x8xf32>
    %cst_94 = arith.constant dense<0xFF800000> : vector<8xf32>
    %260 = vector.multi_reduction <maximumf>, %259, %cst_94 [1] : vector<8x8xf32> to vector<8xf32>
    %261 = vector.shape_cast %260 : vector<8xf32> to vector<8x1xf32>
    %262 = vector.broadcast %261 : vector<8x1xf32> to vector<8x8xf32>
    %263 = arith.subf %259, %262 : vector<8x8xf32>
    %264 = math.exp %263 : vector<8x8xf32>
    %cst_95 = arith.constant dense<0.000000e+00> : vector<8xf32>
    %265 = vector.multi_reduction <add>, %264, %cst_95 [1] : vector<8x8xf32> to vector<8xf32>
    %266 = vector.shape_cast %265 : vector<8xf32> to vector<8x1xf32>
    %267 = tpu.reciprocal %266 {approx = true} : vector<8x1xf32> -> vector<8x1xf32>
    %268 = vector.broadcast %267 : vector<8x1xf32> to vector<8x8xf32>
    %269 = arith.mulf %264, %268 : vector<8x8xf32>
    %270 = arith.truncf %269 : vector<8x8xf32> to vector<8x8xbf16>
    %271 = arith.truncf %255 : vector<8x8xf32> to vector<8x8xbf16>
    %cst_96 = arith.constant dense<0.000000e+00> : vector<8x8xf32>
    %272 = tpu.matmul %270, %271, %cst_96 {dimension_numbers = #tpu.dot_dimension_numbers<[1], [0], [0], [1], [0, 0, 1, 1], [], []>} : vector<8x8xbf16>, vector<8x8xbf16>, vector<8x8xf32> -> vector<8x8xf32>
    %273 = vector.extract_strided_slice %221 {offsets = [8, 0], sizes = [8, 32], strides = [1, 1]} : vector<32x32xf32> to vector<8x32xf32>
    %274 = arith.truncf %272 : vector<8x8xf32> to vector<8x8xbf16>
    %275 = arith.truncf %273 : vector<8x32xf32> to vector<8x32xbf16>
    %cst_97 = arith.constant dense<0.000000e+00> : vector<8x32xf32>
    %276 = tpu.matmul %274, %275, %cst_97 {dimension_numbers = #tpu.dot_dimension_numbers<[1], [0], [0], [1], [0, 0, 1, 1], [], []>} : vector<8x8xbf16>, vector<8x32xbf16>, vector<8x32xf32> -> vector<8x32xf32>
    %277 = arith.addf %250, %276 : vector<8x32xf32>
    %278 = vector.extract_strided_slice %218 {offsets = [0, 16], sizes = [8, 8], strides = [1, 1]} : vector<8x32xf32> to vector<8x8xf32>
    %cst_98 = arith.constant 0.353553385 : f32
    %279 = vector.broadcast %cst_98 : f32 to vector<8x8xf32>
    %280 = arith.mulf %278, %279 : vector<8x8xf32>
    %281 = vector.extract_strided_slice %219 {offsets = [0, 16], sizes = [8, 8], strides = [1, 1]} : vector<8x32xf32> to vector<8x8xf32>
    %282 = vector.extract_strided_slice %220 {offsets = [0, 16], sizes = [8, 8], strides = [1, 1]} : vector<8x32xf32> to vector<8x8xf32>
    %283 = tpu.transpose %281, [1, 0] : vector<8x8xf32> -> vector<8x8xf32>
    %284 = arith.truncf %280 : vector<8x8xf32> to vector<8x8xbf16>
    %285 = arith.truncf %283 : vector<8x8xf32> to vector<8x8xbf16>
    %cst_99 = arith.constant dense<0.000000e+00> : vector<8x8xf32>
    %286 = tpu.matmul %284, %285, %cst_99 {dimension_numbers = #tpu.dot_dimension_numbers<[1], [0], [0], [1], [0, 0, 1, 1], [], []>} : vector<8x8xbf16>, vector<8x8xbf16>, vector<8x8xf32> -> vector<8x8xf32>
    %cst_100 = arith.constant dense<0xFF800000> : vector<8xf32>
    %287 = vector.multi_reduction <maximumf>, %286, %cst_100 [1] : vector<8x8xf32> to vector<8xf32>
    %288 = vector.shape_cast %287 : vector<8xf32> to vector<8x1xf32>
    %289 = vector.broadcast %288 : vector<8x1xf32> to vector<8x8xf32>
    %290 = arith.subf %286, %289 : vector<8x8xf32>
    %291 = math.exp %290 : vector<8x8xf32>
    %cst_101 = arith.constant dense<0.000000e+00> : vector<8xf32>
    %292 = vector.multi_reduction <add>, %291, %cst_101 [1] : vector<8x8xf32> to vector<8xf32>
    %293 = vector.shape_cast %292 : vector<8xf32> to vector<8x1xf32>
    %294 = tpu.reciprocal %293 {approx = true} : vector<8x1xf32> -> vector<8x1xf32>
    %295 = vector.broadcast %294 : vector<8x1xf32> to vector<8x8xf32>
    %296 = arith.mulf %291, %295 : vector<8x8xf32>
    %297 = arith.truncf %296 : vector<8x8xf32> to vector<8x8xbf16>
    %298 = arith.truncf %282 : vector<8x8xf32> to vector<8x8xbf16>
    %cst_102 = arith.constant dense<0.000000e+00> : vector<8x8xf32>
    %299 = tpu.matmul %297, %298, %cst_102 {dimension_numbers = #tpu.dot_dimension_numbers<[1], [0], [0], [1], [0, 0, 1, 1], [], []>} : vector<8x8xbf16>, vector<8x8xbf16>, vector<8x8xf32> -> vector<8x8xf32>
    %300 = vector.extract_strided_slice %221 {offsets = [16, 0], sizes = [8, 32], strides = [1, 1]} : vector<32x32xf32> to vector<8x32xf32>
    %301 = arith.truncf %299 : vector<8x8xf32> to vector<8x8xbf16>
    %302 = arith.truncf %300 : vector<8x32xf32> to vector<8x32xbf16>
    %cst_103 = arith.constant dense<0.000000e+00> : vector<8x32xf32>
    %303 = tpu.matmul %301, %302, %cst_103 {dimension_numbers = #tpu.dot_dimension_numbers<[1], [0], [0], [1], [0, 0, 1, 1], [], []>} : vector<8x8xbf16>, vector<8x32xbf16>, vector<8x32xf32> -> vector<8x32xf32>
    %304 = arith.addf %277, %303 : vector<8x32xf32>
    %305 = vector.extract_strided_slice %218 {offsets = [0, 24], sizes = [8, 8], strides = [1, 1]} : vector<8x32xf32> to vector<8x8xf32>
    %cst_104 = arith.constant 0.353553385 : f32
    %306 = vector.broadcast %cst_104 : f32 to vector<8x8xf32>
    %307 = arith.mulf %305, %306 : vector<8x8xf32>
    %308 = vector.extract_strided_slice %219 {offsets = [0, 24], sizes = [8, 8], strides = [1, 1]} : vector<8x32xf32> to vector<8x8xf32>
    %309 = vector.extract_strided_slice %220 {offsets = [0, 24], sizes = [8, 8], strides = [1, 1]} : vector<8x32xf32> to vector<8x8xf32>
    %310 = tpu.transpose %308, [1, 0] : vector<8x8xf32> -> vector<8x8xf32>
    %311 = arith.truncf %307 : vector<8x8xf32> to vector<8x8xbf16>
    %312 = arith.truncf %310 : vector<8x8xf32> to vector<8x8xbf16>
    %cst_105 = arith.constant dense<0.000000e+00> : vector<8x8xf32>
    %313 = tpu.matmul %311, %312, %cst_105 {dimension_numbers = #tpu.dot_dimension_numbers<[1], [0], [0], [1], [0, 0, 1, 1], [], []>} : vector<8x8xbf16>, vector<8x8xbf16>, vector<8x8xf32> -> vector<8x8xf32>
    %cst_106 = arith.constant dense<0xFF800000> : vector<8xf32>
    %314 = vector.multi_reduction <maximumf>, %313, %cst_106 [1] : vector<8x8xf32> to vector<8xf32>
    %315 = vector.shape_cast %314 : vector<8xf32> to vector<8x1xf32>
    %316 = vector.broadcast %315 : vector<8x1xf32> to vector<8x8xf32>
    %317 = arith.subf %313, %316 : vector<8x8xf32>
    %318 = math.exp %317 : vector<8x8xf32>
    %cst_107 = arith.constant dense<0.000000e+00> : vector<8xf32>
    %319 = vector.multi_reduction <add>, %318, %cst_107 [1] : vector<8x8xf32> to vector<8xf32>
    %320 = vector.shape_cast %319 : vector<8xf32> to vector<8x1xf32>
    %321 = tpu.reciprocal %320 {approx = true} : vector<8x1xf32> -> vector<8x1xf32>
    %322 = vector.broadcast %321 : vector<8x1xf32> to vector<8x8xf32>
    %323 = arith.mulf %318, %322 : vector<8x8xf32>
    %324 = arith.truncf %323 : vector<8x8xf32> to vector<8x8xbf16>
    %325 = arith.truncf %309 : vector<8x8xf32> to vector<8x8xbf16>
    %cst_108 = arith.constant dense<0.000000e+00> : vector<8x8xf32>
    %326 = tpu.matmul %324, %325, %cst_108 {dimension_numbers = #tpu.dot_dimension_numbers<[1], [0], [0], [1], [0, 0, 1, 1], [], []>} : vector<8x8xbf16>, vector<8x8xbf16>, vector<8x8xf32> -> vector<8x8xf32>
    %327 = vector.extract_strided_slice %221 {offsets = [24, 0], sizes = [8, 32], strides = [1, 1]} : vector<32x32xf32> to vector<8x32xf32>
    %328 = arith.truncf %326 : vector<8x8xf32> to vector<8x8xbf16>
    %329 = arith.truncf %327 : vector<8x32xf32> to vector<8x32xbf16>
    %cst_109 = arith.constant dense<0.000000e+00> : vector<8x32xf32>
    %330 = tpu.matmul %328, %329, %cst_109 {dimension_numbers = #tpu.dot_dimension_numbers<[1], [0], [0], [1], [0, 0, 1, 1], [], []>} : vector<8x8xbf16>, vector<8x32xbf16>, vector<8x32xf32> -> vector<8x32xf32>
    %331 = arith.addf %304, %330 : vector<8x32xf32>
    %332 = vector.broadcast %222 : vector<1x32xf32> to vector<8x32xf32>
    %333 = arith.addf %331, %332 : vector<8x32xf32>
    %334 = arith.addf %333, %210 : vector<8x32xf32>
    %c0_110 = arith.constant 0 : index
    %c0_111 = arith.constant 0 : index
    %335 = vector.load %arg22[%c0_110, %c0_111] : memref<1x32xf32, #tpu.memory_space<vmem>>, vector<1x32xf32>
    %c0_112 = arith.constant 0 : index
    %c0_113 = arith.constant 0 : index
    %336 = vector.load %arg23[%c0_112, %c0_113] : memref<1x32xf32, #tpu.memory_space<vmem>>, vector<1x32xf32>
    %cst_114 = arith.constant dense<0.000000e+00> : vector<8xf32>
    %337 = vector.multi_reduction <add>, %334, %cst_114 [1] : vector<8x32xf32> to vector<8xf32>
    %338 = vector.shape_cast %337 : vector<8xf32> to vector<8x1xf32>
    %cst_115 = arith.constant 3.200000e+01 : f32
    %339 = vector.broadcast %cst_115 : f32 to vector<8x1xf32>
    %340 = arith.divf %338, %339 : vector<8x1xf32>
    %341 = vector.broadcast %340 : vector<8x1xf32> to vector<8x32xf32>
    %342 = arith.subf %334, %341 : vector<8x32xf32>
    %343 = arith.mulf %342, %342 : vector<8x32xf32>
    %cst_116 = arith.constant dense<0.000000e+00> : vector<8xf32>
    %344 = vector.multi_reduction <add>, %343, %cst_116 [1] : vector<8x32xf32> to vector<8xf32>
    %345 = vector.shape_cast %344 : vector<8xf32> to vector<8x1xf32>
    %cst_117 = arith.constant 3.200000e+01 : f32
    %346 = vector.broadcast %cst_117 : f32 to vector<8x1xf32>
    %347 = arith.divf %345, %346 : vector<8x1xf32>
    %348 = vector.broadcast %340 : vector<8x1xf32> to vector<8x32xf32>
    %349 = arith.subf %334, %348 : vector<8x32xf32>
    %cst_118 = arith.constant 9.99999974E-6 : f32
    %350 = vector.broadcast %cst_118 : f32 to vector<8x1xf32>
    %351 = arith.addf %347, %350 : vector<8x1xf32>
    %352 = math.rsqrt %351 : vector<8x1xf32>
    %353 = vector.broadcast %352 : vector<8x1xf32> to vector<8x32xf32>
    %354 = arith.mulf %349, %353 : vector<8x32xf32>
    %355 = vector.broadcast %335 : vector<1x32xf32> to vector<8x32xf32>
    %356 = arith.mulf %354, %355 : vector<8x32xf32>
    %357 = vector.broadcast %336 : vector<1x32xf32> to vector<8x32xf32>
    %358 = arith.addf %356, %357 : vector<8x32xf32>
    %c0_119 = arith.constant 0 : index
    %c0_120 = arith.constant 0 : index
    %359 = vector.load %arg24[%c0_119, %c0_120] : memref<32x64xf32, #tpu.memory_space<vmem>>, vector<32x64xf32>
    %360 = arith.truncf %358 : vector<8x32xf32> to vector<8x32xbf16>
    %361 = arith.truncf %359 : vector<32x64xf32> to vector<32x64xbf16>
    %cst_121 = arith.constant dense<0.000000e+00> : vector<8x64xf32>
    %362 = tpu.matmul %360, %361, %cst_121 {dimension_numbers = #tpu.dot_dimension_numbers<[1], [0], [0], [1], [0, 0, 1, 1], [], []>} : vector<8x32xbf16>, vector<32x64xbf16>, vector<8x64xf32> -> vector<8x64xf32>
    %c0_122 = arith.constant 0 : index
    %c0_123 = arith.constant 0 : index
    %363 = vector.load %arg25[%c0_122, %c0_123] : memref<1x64xf32, #tpu.memory_space<vmem>>, vector<1x64xf32>
    %364 = vector.broadcast %363 : vector<1x64xf32> to vector<8x64xf32>
    %365 = arith.addf %362, %364 : vector<8x64xf32>
    %cst_124 = arith.constant 0.000000e+00 : f32
    %366 = vector.broadcast %cst_124 : f32 to vector<8x64xf32>
    %367 = arith.maximumf %365, %366 : vector<8x64xf32>
    %c0_125 = arith.constant 0 : index
    %c0_126 = arith.constant 0 : index
    %368 = vector.load %arg26[%c0_125, %c0_126] : memref<64x32xf32, #tpu.memory_space<vmem>>, vector<64x32xf32>
    %369 = arith.truncf %367 : vector<8x64xf32> to vector<8x64xbf16>
    %370 = arith.truncf %368 : vector<64x32xf32> to vector<64x32xbf16>
    %cst_127 = arith.constant dense<0.000000e+00> : vector<8x32xf32>
    %371 = tpu.matmul %369, %370, %cst_127 {dimension_numbers = #tpu.dot_dimension_numbers<[1], [0], [0], [1], [0, 0, 1, 1], [], []>} : vector<8x64xbf16>, vector<64x32xbf16>, vector<8x32xf32> -> vector<8x32xf32>
    %c0_128 = arith.constant 0 : index
    %c0_129 = arith.constant 0 : index
    %372 = vector.load %arg27[%c0_128, %c0_129] : memref<1x32xf32, #tpu.memory_space<vmem>>, vector<1x32xf32>
    %373 = vector.broadcast %372 : vector<1x32xf32> to vector<8x32xf32>
    %374 = arith.addf %371, %373 : vector<8x32xf32>
    %375 = arith.addf %374, %358 : vector<8x32xf32>
    %c0_130 = arith.constant 0 : index
    %c0_131 = arith.constant 0 : index
    %376 = vector.load %arg28[%c0_130, %c0_131] : memref<1x32xf32, #tpu.memory_space<vmem>>, vector<1x32xf32>
    %c0_132 = arith.constant 0 : index
    %c0_133 = arith.constant 0 : index
    %377 = vector.load %arg29[%c0_132, %c0_133] : memref<1x32xf32, #tpu.memory_space<vmem>>, vector<1x32xf32>
    %cst_134 = arith.constant dense<0.000000e+00> : vector<8xf32>
    %378 = vector.multi_reduction <add>, %375, %cst_134 [1] : vector<8x32xf32> to vector<8xf32>
    %379 = vector.shape_cast %378 : vector<8xf32> to vector<8x1xf32>
    %cst_135 = arith.constant 3.200000e+01 : f32
    %380 = vector.broadcast %cst_135 : f32 to vector<8x1xf32>
    %381 = arith.divf %379, %380 : vector<8x1xf32>
    %382 = vector.broadcast %381 : vector<8x1xf32> to vector<8x32xf32>
    %383 = arith.subf %375, %382 : vector<8x32xf32>
    %384 = arith.mulf %383, %383 : vector<8x32xf32>
    %cst_136 = arith.constant dense<0.000000e+00> : vector<8xf32>
    %385 = vector.multi_reduction <add>, %384, %cst_136 [1] : vector<8x32xf32> to vector<8xf32>
    %386 = vector.shape_cast %385 : vector<8xf32> to vector<8x1xf32>
    %cst_137 = arith.constant 3.200000e+01 : f32
    %387 = vector.broadcast %cst_137 : f32 to vector<8x1xf32>
    %388 = arith.divf %386, %387 : vector<8x1xf32>
    %389 = vector.broadcast %381 : vector<8x1xf32> to vector<8x32xf32>
    %390 = arith.subf %375, %389 : vector<8x32xf32>
    %cst_138 = arith.constant 9.99999974E-6 : f32
    %391 = vector.broadcast %cst_138 : f32 to vector<8x1xf32>
    %392 = arith.addf %388, %391 : vector<8x1xf32>
    %393 = math.rsqrt %392 : vector<8x1xf32>
    %394 = vector.broadcast %393 : vector<8x1xf32> to vector<8x32xf32>
    %395 = arith.mulf %390, %394 : vector<8x32xf32>
    %396 = vector.broadcast %376 : vector<1x32xf32> to vector<8x32xf32>
    %397 = arith.mulf %395, %396 : vector<8x32xf32>
    %398 = vector.broadcast %377 : vector<1x32xf32> to vector<8x32xf32>
    %399 = arith.addf %397, %398 : vector<8x32xf32>
    %c0_139 = arith.constant 0 : index
    %c0_140 = arith.constant 0 : index
    %c0_141 = arith.constant 0 : index
    %400 = vector.load %arg30[%c0_139, %c0_140, %c0_141] : memref<1x8x32xf32, #tpu.memory_space<vmem>>, vector<1x8x32xf32>
    %401 = vector.shape_cast %400 : vector<1x8x32xf32> to vector<8x32xf32>
    %402 = vector.shape_cast %399 : vector<8x32xf32> to vector<1x8x32xf32>
    tpu.vector_store %arg30[%c0_139, %c0_140, %c0_141], %402 {strides = array<i32>} : memref<1x8x32xf32, #tpu.memory_space<vmem>>, vector<1x8x32xf32>,
    return
  }
  func.func @transform_0(%arg0: i32) -> (i32, i32, i32) {
    %c0_i32 = arith.constant 0 : i32
    %c0_i32_0 = arith.constant 0 : i32
    %c0_i32_1 = arith.constant 0 : i32
    return %arg0, %c0_i32, %c0_i32_0 : i32, i32, i32
  }
  func.func @transform_1(%arg0: i32) -> (i32, i32, i32) {
    %c0_i32 = arith.constant 0 : i32
    %c0_i32_0 = arith.constant 0 : i32
    %c0_i32_1 = arith.constant 0 : i32
    return %arg0, %c0_i32, %c0_i32_0 : i32, i32, i32
  }
  func.func @transform_2(%arg0: i32) -> (i32, i32, i32) {
    %c0_i32 = arith.constant 0 : i32
    %c0_i32_0 = arith.constant 0 : i32
    %c0_i32_1 = arith.constant 0 : i32
    return %arg0, %c0_i32, %c0_i32_0 : i32, i32, i32
  }
  func.func @transform_3(%arg0: i32) -> (i32, i32) {
    %c0_i32 = arith.constant 0 : i32
    %c0_i32_0 = arith.constant 0 : i32
    %c0_i32_1 = arith.constant 0 : i32
    return %c0_i32, %c0_i32_0 : i32, i32
  }
  func.func @transform_4(%arg0: i32) -> (i32, i32) {
    %c0_i32 = arith.constant 0 : i32
    %c0_i32_0 = arith.constant 0 : i32
    %c0_i32_1 = arith.constant 0 : i32
    return %c0_i32, %c0_i32_0 : i32, i32
  }
  func.func @transform_5(%arg0: i32) -> (i32, i32) {
    %c0_i32 = arith.constant 0 : i32
    %c0_i32_0 = arith.constant 0 : i32
    %c0_i32_1 = arith.constant 0 : i32
    return %c0_i32, %c0_i32_0 : i32, i32
  }
  func.func @transform_6(%arg0: i32) -> (i32, i32) {
    %c0_i32 = arith.constant 0 : i32
    %c0_i32_0 = arith.constant 0 : i32
    %c0_i32_1 = arith.constant 0 : i32
    return %c0_i32, %c0_i32_0 : i32, i32
  }
  func.func @transform_7(%arg0: i32) -> (i32, i32) {
    %c0_i32 = arith.constant 0 : i32
    %c0_i32_0 = arith.constant 0 : i32
    %c0_i32_1 = arith.constant 0 : i32
    return %c0_i32, %c0_i32_0 : i32, i32
  }
  func.func @transform_8(%arg0: i32) -> (i32, i32) {
    %c0_i32 = arith.constant 0 : i32
    %c0_i32_0 = arith.constant 0 : i32
    %c0_i32_1 = arith.constant 0 : i32
    return %c0_i32, %c0_i32_0 : i32, i32
  }
  func.func @transform_9(%arg0: i32) -> (i32, i32) {
    %c0_i32 = arith.constant 0 : i32
    %c0_i32_0 = arith.constant 0 : i32
    %c0_i32_1 = arith.constant 0 : i32
    return %c0_i32, %c0_i32_0 : i32, i32
  }
  func.func @transform_10(%arg0: i32) -> (i32, i32) {
    %c0_i32 = arith.constant 0 : i32
    %c0_i32_0 = arith.constant 0 : i32
    %c0_i32_1 = arith.constant 0 : i32
    return %c0_i32, %c0_i32_0 : i32, i32
  }
  func.func @transform_11(%arg0: i32) -> (i32, i32) {
    %c0_i32 = arith.constant 0 : i32
    %c0_i32_0 = arith.constant 0 : i32
    %c0_i32_1 = arith.constant 0 : i32
    return %c0_i32, %c0_i32_0 : i32, i32
  }
  func.func @transform_12(%arg0: i32) -> (i32, i32) {
    %c0_i32 = arith.constant 0 : i32
    %c0_i32_0 = arith.constant 0 : i32
    %c0_i32_1 = arith.constant 0 : i32
    return %c0_i32, %c0_i32_0 : i32, i32
  }
  func.func @transform_13(%arg0: i32) -> (i32, i32) {
    %c0_i32 = arith.constant 0 : i32
    %c0_i32_0 = arith.constant 0 : i32
    %c0_i32_1 = arith.constant 0 : i32
    return %c0_i32, %c0_i32_0 : i32, i32
  }
  func.func @transform_14(%arg0: i32) -> (i32, i32) {
    %c0_i32 = arith.constant 0 : i32
    %c0_i32_0 = arith.constant 0 : i32
    %c0_i32_1 = arith.constant 0 : i32
    return %c0_i32, %c0_i32_0 : i32, i32
  }
  func.func @transform_15(%arg0: i32) -> (i32, i32) {
    %c0_i32 = arith.constant 0 : i32
    %c0_i32_0 = arith.constant 0 : i32
    %c0_i32_1 = arith.constant 0 : i32
    return %c0_i32, %c0_i32_0 : i32, i32
  }
  func.func @transform_16(%arg0: i32) -> (i32, i32) {
    %c0_i32 = arith.constant 0 : i32
    %c0_i32_0 = arith.constant 0 : i32
    %c0_i32_1 = arith.constant 0 : i32
    return %c0_i32, %c0_i32_0 : i32, i32
  }
  func.func @transform_17(%arg0: i32) -> (i32, i32) {
    %c0_i32 = arith.constant 0 : i32
    %c0_i32_0 = arith.constant 0 : i32
    %c0_i32_1 = arith.constant 0 : i32
    return %c0_i32, %c0_i32_0 : i32, i32
  }
  func.func @transform_18(%arg0: i32) -> (i32, i32) {
    %c0_i32 = arith.constant 0 : i32
    %c0_i32_0 = arith.constant 0 : i32
    %c0_i32_1 = arith.constant 0 : i32
    return %c0_i32, %c0_i32_0 : i32, i32
  }
  func.func @transform_19(%arg0: i32) -> (i32, i32) {
    %c0_i32 = arith.constant 0 : i32
    %c0_i32_0 = arith.constant 0 : i32
    %c0_i32_1 = arith.constant 0 : i32
    return %c0_i32, %c0_i32_0 : i32, i32
  }
  func.func @transform_20(%arg0: i32) -> (i32, i32) {
    %c0_i32 = arith.constant 0 : i32
    %c0_i32_0 = arith.constant 0 : i32
    %c0_i32_1 = arith.constant 0 : i32
    return %c0_i32, %c0_i32_0 : i32, i32
  }
  func.func @transform_21(%arg0: i32) -> (i32, i32) {
    %c0_i32 = arith.constant 0 : i32
    %c0_i32_0 = arith.constant 0 : i32
    %c0_i32_1 = arith.constant 0 : i32
    return %c0_i32, %c0_i32_0 : i32, i32
  }
  func.func @transform_22(%arg0: i32) -> (i32, i32) {
    %c0_i32 = arith.constant 0 : i32
    %c0_i32_0 = arith.constant 0 : i32
    %c0_i32_1 = arith.constant 0 : i32
    return %c0_i32, %c0_i32_0 : i32, i32
  }
  func.func @transform_23(%arg0: i32) -> (i32, i32) {
    %c0_i32 = arith.constant 0 : i32
    %c0_i32_0 = arith.constant 0 : i32
    %c0_i32_1 = arith.constant 0 : i32
    return %c0_i32, %c0_i32_0 : i32, i32
  }
  func.func @transform_24(%arg0: i32) -> (i32, i32) {
    %c0_i32 = arith.constant 0 : i32
    %c0_i32_0 = arith.constant 0 : i32
    %c0_i32_1 = arith.constant 0 : i32
    return %c0_i32, %c0_i32_0 : i32, i32
  }
  func.func @transform_25(%arg0: i32) -> (i32, i32) {
    %c0_i32 = arith.constant 0 : i32
    %c0_i32_0 = arith.constant 0 : i32
    %c0_i32_1 = arith.constant 0 : i32
    return %c0_i32, %c0_i32_0 : i32, i32
  }
  func.func @transform_26(%arg0: i32) -> (i32, i32) {
    %c0_i32 = arith.constant 0 : i32
    %c0_i32_0 = arith.constant 0 : i32
    %c0_i32_1 = arith.constant 0 : i32
    return %c0_i32, %c0_i32_0 : i32, i32
  }
  func.func @transform_27(%arg0: i32) -> (i32, i32) {
    %c0_i32 = arith.constant 0 : i32
    %c0_i32_0 = arith.constant 0 : i32
    %c0_i32_1 = arith.constant 0 : i32
    return %c0_i32, %c0_i32_0 : i32, i32
  }
  func.func @transform_28(%arg0: i32) -> (i32, i32) {
    %c0_i32 = arith.constant 0 : i32
    %c0_i32_0 = arith.constant 0 : i32
    %c0_i32_1 = arith.constant 0 : i32
    return %c0_i32, %c0_i32_0 : i32, i32
  }
  func.func @transform_29(%arg0: i32) -> (i32, i32, i32) {
    %c0_i32 = arith.constant 0 : i32
    %c0_i32_0 = arith.constant 0 : i32
    %c0_i32_1 = arith.constant 0 : i32
    return %arg0, %c0_i32, %c0_i32_0 : i32, i32, i32
  }
}

</mosaic_0001>

<llo_original>
// kernel: co_forward.1
$region0: #{co_forward.1}
  #allocation0 [shape = 'u32[]', space=smem, size = 0x4, offset = 0x4, fixed_abs, tag = 'smem constant byte address 0x4 - core index']
  #allocation1 [shape = 'u32[144,128]{1,0:T(1,128)}', space=vmem, size = 0x12000, scoped, tag = 'internal scratch']
  %s0 = inlined_call_operand.smem [shape: u32[30], index: -1, kind: input, shape index: {}]
  %s1 = sld [smem:[%s0]]
  %s2 = scalar_lea.smem %s0, 1
  %s3 = sld [smem:[%s2]]
  %s4 = scalar_lea.smem %s0, 2
  %s5 = sld [smem:[%s4]]
  %s6 = scalar_lea.smem %s0, 3
  %s7 = sld [smem:[%s6]]
  %s8 = scalar_lea.smem %s0, 4
  %s9 = sld [smem:[%s8]]
  %s10 = scalar_lea.smem %s0, 5
  %s11 = sld [smem:[%s10]]
  %s12 = scalar_lea.smem %s0, 6
  %s13 = sld [smem:[%s12]]
  %s14 = scalar_lea.smem %s0, 7
  %s15 = sld [smem:[%s14]]
  %s16 = scalar_lea.smem %s0, 8
  %s17 = sld [smem:[%s16]]
  %s18 = scalar_lea.smem %s0, 9
  %s19 = sld [smem:[%s18]]
  %s20 = scalar_lea.smem %s0, 10
  %s21 = sld [smem:[%s20]]
  %s22 = scalar_lea.smem %s0, 11
  %s23 = sld [smem:[%s22]]
  %s24 = scalar_lea.smem %s0, 12
  %s25 = sld [smem:[%s24]]
  %s26 = scalar_lea.smem %s0, 13
  %s27 = sld [smem:[%s26]]
  %s28 = scalar_lea.smem %s0, 14
  %s29 = sld [smem:[%s28]]
  %s30 = scalar_lea.smem %s0, 15
  %s31 = sld [smem:[%s30]]
  %s32 = scalar_lea.smem %s0, 16
  %s33 = sld [smem:[%s32]]
  %s34 = scalar_lea.smem %s0, 17
  %s35 = sld [smem:[%s34]]
  %s36 = scalar_lea.smem %s0, 18
  %s37 = sld [smem:[%s36]]
  %s38 = scalar_lea.smem %s0, 19
  %s39 = sld [smem:[%s38]]
  %s40 = scalar_lea.smem %s0, 20
  %s41 = sld [smem:[%s40]]
  %s42 = scalar_lea.smem %s0, 21
  %s43 = sld [smem:[%s42]]
  %s44 = scalar_lea.smem %s0, 22
  %s45 = sld [smem:[%s44]]
  %s46 = scalar_lea.smem %s0, 23
  %s47 = sld [smem:[%s46]]
  %s48 = scalar_lea.smem %s0, 24
  %s49 = sld [smem:[%s48]]
  %s50 = scalar_lea.smem %s0, 25
  %s51 = sld [smem:[%s50]]
  %s52 = scalar_lea.smem %s0, 26
  %s53 = sld [smem:[%s52]]
  %s54 = scalar_lea.smem %s0, 27
  %s55 = sld [smem:[%s54]]
  %s56 = scalar_lea.smem %s0, 28
  %s57 = sld [smem:[%s56]]
  %s58 = scalar_lea.smem %s0, 29
  %s59 = sld [smem:[%s58]]
  %s60 = sld [smem:[#allocation0]]
  $region181: #{co_forward.1} parent=0
    _
  %s62 = ssub.s32 1, %s60
  %s63 = scalar_select 0, %s62, %s60
  $region1: #{co_forward.1} parent=0
    #allocation2 [shape = 'u8[512]{0}', space=vmem, size = 0x400, scoped, tag = 'input window, operand 6, single buffered']
    #allocation3 [shape = 's32[2]{0}', space=sflag, size = 0x8, scoped, tag = 'scoped memory for co_forward.1']
    #allocation4 [shape = 'u8[512]{0}', space=vmem, size = 0x400, scoped, tag = 'input window, operand 8, single buffered']
    #allocation5 [shape = 's32[1]{0}', space=sflag, size = 0x4, scoped, tag = 'scoped memory for co_forward.1']
    #allocation6 [shape = 'u8[512]{0}', space=vmem, size = 0x400, scoped, tag = 'input window, operand 9, single buffered']
    #allocation7 [shape = 'u8[512]{0}', space=vmem, size = 0x400, scoped, tag = 'input window, operand 10, single buffered']
    #allocation8 [shape = 's32[1]{0}', space=sflag, size = 0x4, scoped, tag = 'scoped memory for co_forward.1']
    #allocation9 [shape = 'u8[512]{0}', space=vmem, size = 0x400, scoped, tag = 'input window, operand 12, single buffered']
    #allocation10 [shape = 'u8[512]{0}', space=vmem, size = 0x400, scoped, tag = 'input window, operand 14, single buffered']
    #allocation11 [shape = 's32[1]{0}', space=sflag, size = 0x4, scoped, tag = 'scoped memory for co_forward.1']
    #allocation12 [shape = 'u8[512]{0}', space=vmem, size = 0x400, scoped, tag = 'input window, operand 15, single buffered']
    #allocation13 [shape = 'u8[512]{0}', space=vmem, size = 0x400, scoped, tag = 'input window, operand 16, single buffered']
    #allocation14 [shape = 's32[1]{0}', space=sflag, size = 0x4, scoped, tag = 'scoped memory for co_forward.1']
    %64 = vsyncpa [#allocation3], 0
    %65 = vsyncpa [#allocation5], 0
    %66 = vsyncpa [#allocation8], 0
    %67 = vsyncpa [#allocation11], 0
    %68 = vsyncpa [#allocation14], 0
    loop: start=0, step=1, limit=4
    $region2: #{co_forward.1} parent=1 // loop_pre_header
      _
    $region3: #{co_forward.1} parent=1 // loop_header
      %s70 = sphi 0, %s74
      %p71 = scmp.ge.s32.totalorder %s70, 4
      %s80 = sphi 0, %s82
      %s83 = sphi 0, %s80
      %s84 = sphi 0, %s83
      %s100 = sphi 0, %s84
      %s106 = sphi 0, %s108
      %s109 = sphi 0, %s106
      %s110 = sphi 0, %s109
      %s126 = sphi 0, %s110
      %s132 = sphi 0, %s134
      %s135 = sphi 0, %s132
      %s136 = sphi 0, %s135
      %s152 = sphi 0, %s136
      %s156 = sphi 0, %s156
      %s158 = sphi 0, %s156
      %s159 = sphi 0, %s158
      %s173 = sphi 0, %s159
      %s177 = sphi 0, %s177
      %s179 = sphi 0, %s177
      %s180 = sphi 0, %s179
      %s194 = sphi 0, %s180
      %s198 = sphi 0, %s198
      %s200 = sphi 0, %s198
      %s201 = sphi 0, %s200
      %s215 = sphi 0, %s201
      %s219 = sphi 0, %s219
      %s221 = sphi 0, %s219
      %s222 = sphi 0, %s221
      %s236 = sphi 0, %s222
      %s240 = sphi 0, %s240
      %s242 = sphi 0, %s240
      %s243 = sphi 0, %s242
      %s257 = sphi 0, %s243
      %s261 = sphi 0, %s261
      %s263 = sphi 0, %s261
      %s264 = sphi 0, %s263
      %s278 = sphi 0, %s264
      %s282 = sphi 0, %s282
      %s284 = sphi 0, %s282
      %s285 = sphi 0, %s284
      %s299 = sphi 0, %s285
      %s303 = sphi 0, %s303
      %s305 = sphi 0, %s303
      %s306 = sphi 0, %s305
      %s320 = sphi 0, %s306
      %s324 = sphi 0, %s324
      %s326 = sphi 0, %s324
      %s327 = sphi 0, %s326
      %s341 = sphi 0, %s327
      %s345 = sphi 0, %s345
      %s347 = sphi 0, %s345
      %s348 = sphi 0, %s347
      %s362 = sphi 0, %s348
      %s366 = sphi 0, %s366
      %s368 = sphi 0, %s366
      %s369 = sphi 0, %s368
      %s383 = sphi 0, %s369
      %s387 = sphi 0, %s387
      %s389 = sphi 0, %s387
      %s390 = sphi 0, %s389
      %s404 = sphi 0, %s390
      %s408 = sphi 0, %s408
      %s410 = sphi 0, %s408
      %s411 = sphi 0, %s410
      %s425 = sphi 0, %s411
      %s429 = sphi 0, %s429
      %s431 = sphi 0, %s429
      %s432 = sphi 0, %s431
      %s446 = sphi 0, %s432
      %s450 = sphi 0, %s450
      %s452 = sphi 0, %s450
      %s453 = sphi 0, %s452
      %s467 = sphi 0, %s453
      %s471 = sphi 0, %s471
      %s473 = sphi 0, %s471
      %s474 = sphi 0, %s473
      %s488 = sphi 0, %s474
      %s492 = sphi 0, %s492
      %s494 = sphi 0, %s492
      %s495 = sphi 0, %s494
      %s509 = sphi 0, %s495
      %s513 = sphi 0, %s513
      %s515 = sphi 0, %s513
      %s516 = sphi 0, %s515
      %s530 = sphi 0, %s516
      %s534 = sphi 0, %s534
      %s536 = sphi 0, %s534
      %s537 = sphi 0, %s536
      %s551 = sphi 0, %s537
      %s555 = sphi 0, %s555
      %s557 = sphi 0, %s555
      %s558 = sphi 0, %s557
      %s572 = sphi 0, %s558
      %s576 = sphi 0, %s576
      %s578 = sphi 0, %s576
      %s579 = sphi 0, %s578
      %s593 = sphi 0, %s579
      %s597 = sphi 0, %s597
      %s599 = sphi 0, %s597
      %s600 = sphi 0, %s599
      %s614 = sphi 0, %s600
      %s618 = sphi 0, %s618
      %s620 = sphi 0, %s618
      %s621 = sphi 0, %s620
      %s635 = sphi 0, %s621
      %s639 = sphi 0, %s639
      %s641 = sphi 0, %s639
      %s642 = sphi 0, %s641
      %s656 = sphi 0, %s642
      %s660 = sphi 0, %s660
      %s662 = sphi 0, %s660
      %s663 = sphi 0, %s662
      %s677 = sphi 0, %s663
      %s681 = sphi 0, %s681
      %s683 = sphi 0, %s681
      %s684 = sphi 0, %s683
      %s698 = sphi 0, %s684
      %s704 = sphi 0, %s706
      %s707 = sphi 0, %s704
      %s708 = sphi 0, %s707
      %s724 = sphi 0, %s708
    $region4: #{co_forward.1} parent=1 // loop_header_branch
      %73 = sbr.rel (%p71) target = $region8
    $region5: #{co_forward.1} parent=1 // loop_body
      %s75 = ssub.s32 %s70, 1
      %s76 = ssub.s32 %s70, 2
      %s77 = sadd.s32 %s70, 1
      %s78 = ssub.s32 %s70, %s77
      %p79 = scmp.eq.s32.totalorder %s78, 0
      %s81 = sadd.s32 %s80, 1
      %s82 = scalar_select %p79, %s80, %s81
      %p85 = pneg %p79
      %p86 = scmp.eq.s32.totalorder %s70, 1
      %p87 = por %p85, %p86
      %p88 = scmp.ne.s32.totalorder %s80, %s83
      %p89 = scmp.eq.s32.totalorder %s70, 0
      %p90 = por %p88, %p89
      %p91 = scmp.ne.s32.totalorder %s80, %s83
      %p92 = scmp.eq.s32.totalorder %s75, 1
      %p93 = por %p91, %p92
      %p94 = scmp.ne.s32.totalorder %s83, %s84
      %p95 = scmp.eq.s32.totalorder %s75, 0
      %p96 = por %p94, %p95
      %p97 = scmp.ne.s32.totalorder %s83, %s84
      %p98 = scmp.eq.s32.totalorder %s76, 1
      %p99 = por %p97, %p98
      %p101 = scmp.ne.s32.totalorder %s84, %s100
      %p102 = scmp.eq.s32.totalorder %s76, 0
      %p103 = por %p101, %p102
      %s104 = ssub.s32 %s70, %s77
      %p105 = scmp.eq.s32.totalorder %s104, 0
      %s107 = sadd.s32 %s106, 1
      %s108 = scalar_select %p105, %s106, %s107
      %p111 = pneg %p105
      %p112 = scmp.eq.s32.totalorder %s70, 1
      %p113 = por %p111, %p112
      %p114 = scmp.ne.s32.totalorder %s106, %s109
      %p115 = scmp.eq.s32.totalorder %s70, 0
      %p116 = por %p114, %p115
      %p117 = scmp.ne.s32.totalorder %s106, %s109
      %p118 = scmp.eq.s32.totalorder %s75, 1
      %p119 = por %p117, %p118
      %p120 = scmp.ne.s32.totalorder %s109, %s110
      %p121 = scmp.eq.s32.totalorder %s75, 0
      %p122 = por %p120, %p121
      %p123 = scmp.ne.s32.totalorder %s109, %s110
      %p124 = scmp.eq.s32.totalorder %s76, 1
      %p125 = por %p123, %p124
      %p127 = scmp.ne.s32.totalorder %s110, %s126
      %p128 = scmp.eq.s32.totalorder %s76, 0
      %p129 = por %p127, %p128
      %s130 = ssub.s32 %s70, %s77
      %p131 = scmp.eq.s32.totalorder %s130, 0
      %s133 = sadd.s32 %s132, 1
      %s134 = scalar_select %p131, %s132, %s133
      %p137 = pneg %p131
      %p138 = scmp.eq.s32.totalorder %s70, 1
      %p139 = por %p137, %p138
      %p140 = scmp.ne.s32.totalorder %s132, %s135
      %p141 = scmp.eq.s32.totalorder %s70, 0
      %p142 = por %p140, %p141
      %p143 = scmp.ne.s32.totalorder %s132, %s135
      %p144 = scmp.eq.s32.totalorder %s75, 1
      %p145 = por %p143, %p144
      %p146 = scmp.ne.s32.totalorder %s135, %s136
      %p147 = scmp.eq.s32.totalorder %s75, 0
      %p148 = por %p146, %p147
      %p149 = scmp.ne.s32.totalorder %s135, %s136
      %p150 = scmp.eq.s32.totalorder %s76, 1
      %p151 = por %p149, %p150
      %p153 = scmp.ne.s32.totalorder %s136, %s152
      %p154 = scmp.eq.s32.totalorder %s76, 0
      %p155 = por %p153, %p154
      %s157 = sadd.s32 %s156, 1
      %p160 = scmp.eq.s32.totalorder %s70, 1
      %p161 = scmp.ne.s32.totalorder %s156, %s158
      %p162 = scmp.eq.s32.totalorder %s70, 0
      %p163 = por %p161, %p162
      %p164 = scmp.ne.s32.totalorder %s156, %s158
      %p165 = scmp.eq.s32.totalorder %s75, 1
      %p166 = por %p164, %p165
      %p167 = scmp.ne.s32.totalorder %s158, %s159
      %p168 = scmp.eq.s32.totalorder %s75, 0
      %p169 = por %p167, %p168
      %p170 = scmp.ne.s32.totalorder %s158, %s159
      %p171 = scmp.eq.s32.totalorder %s76, 1
      %p172 = por %p170, %p171
      %p174 = scmp.ne.s32.totalorder %s159, %s173
      %p175 = scmp.eq.s32.totalorder %s76, 0
      %p176 = por %p174, %p175
      %s178 = sadd.s32 %s177, 1
      %p181 = scmp.eq.s32.totalorder %s70, 1
      %p182 = scmp.ne.s32.totalorder %s177, %s179
      %p183 = scmp.eq.s32.totalorder %s70, 0
      %p184 = por %p182, %p183
      %p185 = scmp.ne.s32.totalorder %s177, %s179
      %p186 = scmp.eq.s32.totalorder %s75, 1
      %p187 = por %p185, %p186
      %p188 = scmp.ne.s32.totalorder %s179, %s180
      %p189 = scmp.eq.s32.totalorder %s75, 0
      %p190 = por %p188, %p189
      %p191 = scmp.ne.s32.totalorder %s179, %s180
      %p192 = scmp.eq.s32.totalorder %s76, 1
      %p193 = por %p191, %p192
      %p195 = scmp.ne.s32.totalorder %s180, %s194
      %p196 = scmp.eq.s32.totalorder %s76, 0
      %p197 = por %p195, %p196
      %s199 = sadd.s32 %s198, 1
      %p202 = scmp.eq.s32.totalorder %s70, 1
      %p203 = scmp.ne.s32.totalorder %s198, %s200
      %p204 = scmp.eq.s32.totalorder %s70, 0
      %p205 = por %p203, %p204
      %p206 = scmp.ne.s32.totalorder %s198, %s200
      %p207 = scmp.eq.s32.totalorder %s75, 1
      %p208 = por %p206, %p207
      %p209 = scmp.ne.s32.totalorder %s200, %s201
      %p210 = scmp.eq.s32.totalorder %s75, 0
      %p211 = por %p209, %p210
      %p212 = scmp.ne.s32.totalorder %s200, %s201
      %p213 = scmp.eq.s32.totalorder %s76, 1
      %p214 = por %p212, %p213
      %p216 = scmp.ne.s32.totalorder %s201, %s215
      %p217 = scmp.eq.s32.totalorder %s76, 0
      %p218 = por %p216, %p217
      %s220 = sadd.s32 %s219, 1
      %p223 = scmp.eq.s32.totalorder %s70, 1
      %p224 = scmp.ne.s32.totalorder %s219, %s221
      %p225 = scmp.eq.s32.totalorder %s70, 0
      %p226 = por %p224, %p225
      %p227 = scmp.ne.s32.totalorder %s219, %s221
      %p228 = scmp.eq.s32.totalorder %s75, 1
      %p229 = por %p227, %p228
      %p230 = scmp.ne.s32.totalorder %s221, %s222
      %p231 = scmp.eq.s32.totalorder %s75, 0
      %p232 = por %p230, %p231
      %p233 = scmp.ne.s32.totalorder %s221, %s222
      %p234 = scmp.eq.s32.totalorder %s76, 1
      %p235 = por %p233, %p234
      %p237 = scmp.ne.s32.totalorder %s222, %s236
      %p238 = scmp.eq.s32.totalorder %s76, 0
      %p239 = por %p237, %p238
      %s241 = sadd.s32 %s240, 1
      %p244 = scmp.eq.s32.totalorder %s70, 1
      %p245 = scmp.ne.s32.totalorder %s240, %s242
      %p246 = scmp.eq.s32.totalorder %s70, 0
      %p247 = por %p245, %p246
      %p248 = scmp.ne.s32.totalorder %s240, %s242
      %p249 = scmp.eq.s32.totalorder %s75, 1
      %p250 = por %p248, %p249
      %p251 = scmp.ne.s32.totalorder %s242, %s243
      %p252 = scmp.eq.s32.totalorder %s75, 0
      %p253 = por %p251, %p252
      %p254 = scmp.ne.s32.totalorder %s242, %s243
      %p255 = scmp.eq.s32.totalorder %s76, 1
      %p256 = por %p254, %p255
      %p258 = scmp.ne.s32.totalorder %s243, %s257
      %p259 = scmp.eq.s32.totalorder %s76, 0
      %p260 = por %p258, %p259
      %s262 = sadd.s32 %s261, 1
      %p265 = scmp.eq.s32.totalorder %s70, 1
      %p266 = scmp.ne.s32.totalorder %s261, %s263
      %p267 = scmp.eq.s32.totalorder %s70, 0
      %p268 = por %p266, %p267
      %p269 = scmp.ne.s32.totalorder %s261, %s263
      %p270 = scmp.eq.s32.totalorder %s75, 1
      %p271 = por %p269, %p270
      %p272 = scmp.ne.s32.totalorder %s263, %s264
      %p273 = scmp.eq.s32.totalorder %s75, 0
      %p274 = por %p272, %p273
      %p275 = scmp.ne.s32.totalorder %s263, %s264
      %p276 = scmp.eq.s32.totalorder %s76, 1
      %p277 = por %p275, %p276
      %p279 = scmp.ne.s32.totalorder %s264, %s278
      %p280 = scmp.eq.s32.totalorder %s76, 0
      %p281 = por %p279, %p280
      %s283 = sadd.s32 %s282, 1
      %p286 = scmp.eq.s32.totalorder %s70, 1
      %p287 = scmp.ne.s32.totalorder %s282, %s284
      %p288 = scmp.eq.s32.totalorder %s70, 0
      %p289 = por %p287, %p288
      %p290 = scmp.ne.s32.totalorder %s282, %s284
      %p291 = scmp.eq.s32.totalorder %s75, 1
      %p292 = por %p290, %p291
      %p293 = scmp.ne.s32.totalorder %s284, %s285
      %p294 = scmp.eq.s32.totalorder %s75, 0
      %p295 = por %p293, %p294
      %p296 = scmp.ne.s32.totalorder %s284, %s285
      %p297 = scmp.eq.s32.totalorder %s76, 1
      %p298 = por %p296, %p297
      %p300 = scmp.ne.s32.totalorder %s285, %s299
      %p301 = scmp.eq.s32.totalorder %s76, 0
      %p302 = por %p300, %p301
      %s304 = sadd.s32 %s303, 1
      %p307 = scmp.eq.s32.totalorder %s70, 1
      %p308 = scmp.ne.s32.totalorder %s303, %s305
      %p309 = scmp.eq.s32.totalorder %s70, 0
      %p310 = por %p308, %p309
      %p311 = scmp.ne.s32.totalorder %s303, %s305
      %p312 = scmp.eq.s32.totalorder %s75, 1
      %p313 = por %p311, %p312
      %p314 = scmp.ne.s32.totalorder %s305, %s306
      %p315 = scmp.eq.s32.totalorder %s75, 0
      %p316 = por %p314, %p315
      %p317 = scmp.ne.s32.totalorder %s305, %s306
      %p318 = scmp.eq.s32.totalorder %s76, 1
      %p319 = por %p317, %p318
      %p321 = scmp.ne.s32.totalorder %s306, %s320
      %p322 = scmp.eq.s32.totalorder %s76, 0
      %p323 = por %p321, %p322
      %s325 = sadd.s32 %s324, 1
      %p328 = scmp.eq.s32.totalorder %s70, 1
      %p329 = scmp.ne.s32.totalorder %s324, %s326
      %p330 = scmp.eq.s32.totalorder %s70, 0
      %p331 = por %p329, %p330
      %p332 = scmp.ne.s32.totalorder %s324, %s326
      %p333 = scmp.eq.s32.totalorder %s75, 1
      %p334 = por %p332, %p333
      %p335 = scmp.ne.s32.totalorder %s326, %s327
      %p336 = scmp.eq.s32.totalorder %s75, 0
      %p337 = por %p335, %p336
      %p338 = scmp.ne.s32.totalorder %s326, %s327
      %p339 = scmp.eq.s32.totalorder %s76, 1
      %p340 = por %p338, %p339
      %p342 = scmp.ne.s32.totalorder %s327, %s341
      %p343 = scmp.eq.s32.totalorder %s76, 0
      %p344 = por %p342, %p343
      %s346 = sadd.s32 %s345, 1
      %p349 = scmp.eq.s32.totalorder %s70, 1
      %p350 = scmp.ne.s32.totalorder %s345, %s347
      %p351 = scmp.eq.s32.totalorder %s70, 0
      %p352 = por %p350, %p351
      %p353 = scmp.ne.s32.totalorder %s345, %s347
      %p354 = scmp.eq.s32.totalorder %s75, 1
      %p355 = por %p353, %p354
      %p356 = scmp.ne.s32.totalorder %s347, %s348
      %p357 = scmp.eq.s32.totalorder %s75, 0
      %p358 = por %p356, %p357
      %p359 = scmp.ne.s32.totalorder %s347, %s348
      %p360 = scmp.eq.s32.totalorder %s76, 1
      %p361 = por %p359, %p360
      %p363 = scmp.ne.s32.totalorder %s348, %s362
      %p364 = scmp.eq.s32.totalorder %s76, 0
      %p365 = por %p363, %p364
      %s367 = sadd.s32 %s366, 1
      %p370 = scmp.eq.s32.totalorder %s70, 1
      %p371 = scmp.ne.s32.totalorder %s366, %s368
      %p372 = scmp.eq.s32.totalorder %s70, 0
      %p373 = por %p371, %p372
      %p374 = scmp.ne.s32.totalorder %s366, %s368
      %p375 = scmp.eq.s32.totalorder %s75, 1
      %p376 = por %p374, %p375
      %p377 = scmp.ne.s32.totalorder %s368, %s369
      %p378 = scmp.eq.s32.totalorder %s75, 0
      %p379 = por %p377, %p378
      %p380 = scmp.ne.s32.totalorder %s368, %s369
      %p381 = scmp.eq.s32.totalorder %s76, 1
      %p382 = por %p380, %p381
      %p384 = scmp.ne.s32.totalorder %s369, %s383
      %p385 = scmp.eq.s32.totalorder %s76, 0
      %p386 = por %p384, %p385
      %s388 = sadd.s32 %s387, 1
      %p391 = scmp.eq.s32.totalorder %s70, 1
      %p392 = scmp.ne.s32.totalorder %s387, %s389
      %p393 = scmp.eq.s32.totalorder %s70, 0
      %p394 = por %p392, %p393
      %p395 = scmp.ne.s32.totalorder %s387, %s389
      %p396 = scmp.eq.s32.totalorder %s75, 1
      %p397 = por %p395, %p396
      %p398 = scmp.ne.s32.totalorder %s389, %s390
      %p399 = scmp.eq.s32.totalorder %s75, 0
      %p400 = por %p398, %p399
      %p401 = scmp.ne.s32.totalorder %s389, %s390
      %p402 = scmp.eq.s32.totalorder %s76, 1
      %p403 = por %p401, %p402
      %p405 = scmp.ne.s32.totalorder %s390, %s404
      %p406 = scmp.eq.s32.totalorder %s76, 0
      %p407 = por %p405, %p406
      %s409 = sadd.s32 %s408, 1
      %p412 = scmp.eq.s32.totalorder %s70, 1
      %p413 = scmp.ne.s32.totalorder %s408, %s410
      %p414 = scmp.eq.s32.totalorder %s70, 0
      %p415 = por %p413, %p414
      %p416 = scmp.ne.s32.totalorder %s408, %s410
      %p417 = scmp.eq.s32.totalorder %s75, 1
      %p418 = por %p416, %p417
      %p419 = scmp.ne.s32.totalorder %s410, %s411
      %p420 = scmp.eq.s32.totalorder %s75, 0
      %p421 = por %p419, %p420
      %p422 = scmp.ne.s32.totalorder %s410, %s411
      %p423 = scmp.eq.s32.totalorder %s76, 1
      %p424 = por %p422, %p423
      %p426 = scmp.ne.s32.totalorder %s411, %s425
      %p427 = scmp.eq.s32.totalorder %s76, 0
      %p428 = por %p426, %p427
      %s430 = sadd.s32 %s429, 1
      %p433 = scmp.eq.s32.totalorder %s70, 1
      %p434 = scmp.ne.s32.totalorder %s429, %s431
      %p435 = scmp.eq.s32.totalorder %s70, 0
      %p436 = por %p434, %p435
      %p437 = scmp.ne.s32.totalorder %s429, %s431
      %p438 = scmp.eq.s32.totalorder %s75, 1
      %p439 = por %p437, %p438
      %p440 = scmp.ne.s32.totalorder %s431, %s432
      %p441 = scmp.eq.s32.totalorder %s75, 0
      %p442 = por %p440, %p441
      %p443 = scmp.ne.s32.totalorder %s431, %s432
      %p444 = scmp.eq.s32.totalorder %s76, 1
      %p445 = por %p443, %p444
      %p447 = scmp.ne.s32.totalorder %s432, %s446
      %p448 = scmp.eq.s32.totalorder %s76, 0
      %p449 = por %p447, %p448
      %s451 = sadd.s32 %s450, 1
      %p454 = scmp.eq.s32.totalorder %s70, 1
      %p455 = scmp.ne.s32.totalorder %s450, %s452
      %p456 = scmp.eq.s32.totalorder %s70, 0
      %p457 = por %p455, %p456
      %p458 = scmp.ne.s32.totalorder %s450, %s452
      %p459 = scmp.eq.s32.totalorder %s75, 1
      %p460 = por %p458, %p459
      %p461 = scmp.ne.s32.totalorder %s452, %s453
      %p462 = scmp.eq.s32.totalorder %s75, 0
      %p463 = por %p461, %p462
      %p464 = scmp.ne.s32.totalorder %s452, %s453
      %p465 = scmp.eq.s32.totalorder %s76, 1
      %p466 = por %p464, %p465
      %p468 = scmp.ne.s32.totalorder %s453, %s467
      %p469 = scmp.eq.s32.totalorder %s76, 0
      %p470 = por %p468, %p469
      %s472 = sadd.s32 %s471, 1
      %p475 = scmp.eq.s32.totalorder %s70, 1
      %p476 = scmp.ne.s32.totalorder %s471, %s473
      %p477 = scmp.eq.s32.totalorder %s70, 0
      %p478 = por %p476, %p477
      %p479 = scmp.ne.s32.totalorder %s471, %s473
      %p480 = scmp.eq.s32.totalorder %s75, 1
      %p481 = por %p479, %p480
      %p482 = scmp.ne.s32.totalorder %s473, %s474
      %p483 = scmp.eq.s32.totalorder %s75, 0
      %p484 = por %p482, %p483
      %p485 = scmp.ne.s32.totalorder %s473, %s474
      %p486 = scmp.eq.s32.totalorder %s76, 1
      %p487 = por %p485, %p486
      %p489 = scmp.ne.s32.totalorder %s474, %s488
      %p490 = scmp.eq.s32.totalorder %s76, 0
      %p491 = por %p489, %p490
      %s493 = sadd.s32 %s492, 1
      %p496 = scmp.eq.s32.totalorder %s70, 1
      %p497 = scmp.ne.s32.totalorder %s492, %s494
      %p498 = scmp.eq.s32.totalorder %s70, 0
      %p499 = por %p497, %p498
      %p500 = scmp.ne.s32.totalorder %s492, %s494
      %p501 = scmp.eq.s32.totalorder %s75, 1
      %p502 = por %p500, %p501
      %p503 = scmp.ne.s32.totalorder %s494, %s495
      %p504 = scmp.eq.s32.totalorder %s75, 0
      %p505 = por %p503, %p504
      %p506 = scmp.ne.s32.totalorder %s494, %s495
      %p507 = scmp.eq.s32.totalorder %s76, 1
      %p508 = por %p506, %p507
      %p510 = scmp.ne.s32.totalorder %s495, %s509
      %p511 = scmp.eq.s32.totalorder %s76, 0
      %p512 = por %p510, %p511
      %s514 = sadd.s32 %s513, 1
      %p517 = scmp.eq.s32.totalorder %s70, 1
      %p518 = scmp.ne.s32.totalorder %s513, %s515
      %p519 = scmp.eq.s32.totalorder %s70, 0
      %p520 = por %p518, %p519
      %p521 = scmp.ne.s32.totalorder %s513, %s515
      %p522 = scmp.eq.s32.totalorder %s75, 1
      %p523 = por %p521, %p522
      %p524 = scmp.ne.s32.totalorder %s515, %s516
      %p525 = scmp.eq.s32.totalorder %s75, 0
      %p526 = por %p524, %p525
      %p527 = scmp.ne.s32.totalorder %s515, %s516
      %p528 = scmp.eq.s32.totalorder %s76, 1
      %p529 = por %p527, %p528
      %p531 = scmp.ne.s32.totalorder %s516, %s530
      %p532 = scmp.eq.s32.totalorder %s76, 0
      %p533 = por %p531, %p532
      %s535 = sadd.s32 %s534, 1
      %p538 = scmp.eq.s32.totalorder %s70, 1
      %p539 = scmp.ne.s32.totalorder %s534, %s536
      %p540 = scmp.eq.s32.totalorder %s70, 0
      %p541 = por %p539, %p540
      %p542 = scmp.ne.s32.totalorder %s534, %s536
      %p543 = scmp.eq.s32.totalorder %s75, 1
      %p544 = por %p542, %p543
      %p545 = scmp.ne.s32.totalorder %s536, %s537
      %p546 = scmp.eq.s32.totalorder %s75, 0
      %p547 = por %p545, %p546
      %p548 = scmp.ne.s32.totalorder %s536, %s537
      %p549 = scmp.eq.s32.totalorder %s76, 1
      %p550 = por %p548, %p549
      %p552 = scmp.ne.s32.totalorder %s537, %s551
      %p553 = scmp.eq.s32.totalorder %s76, 0
      %p554 = por %p552, %p553
      %s556 = sadd.s32 %s555, 1
      %p559 = scmp.eq.s32.totalorder %s70, 1
      %p560 = scmp.ne.s32.totalorder %s555, %s557
      %p561 = scmp.eq.s32.totalorder %s70, 0
      %p562 = por %p560, %p561
      %p563 = scmp.ne.s32.totalorder %s555, %s557
      %p564 = scmp.eq.s32.totalorder %s75, 1
      %p565 = por %p563, %p564
      %p566 = scmp.ne.s32.totalorder %s557, %s558
      %p567 = scmp.eq.s32.totalorder %s75, 0
      %p568 = por %p566, %p567
      %p569 = scmp.ne.s32.totalorder %s557, %s558
      %p570 = scmp.eq.s32.totalorder %s76, 1
      %p571 = por %p569, %p570
      %p573 = scmp.ne.s32.totalorder %s558, %s572
      %p574 = scmp.eq.s32.totalorder %s76, 0
      %p575 = por %p573, %p574
      %s577 = sadd.s32 %s576, 1
      %p580 = scmp.eq.s32.totalorder %s70, 1
      %p581 = scmp.ne.s32.totalorder %s576, %s578
      %p582 = scmp.eq.s32.totalorder %s70, 0
      %p583 = por %p581, %p582
      %p584 = scmp.ne.s32.totalorder %s576, %s578
      %p585 = scmp.eq.s32.totalorder %s75, 1
      %p586 = por %p584, %p585
      %p587 = scmp.ne.s32.totalorder %s578, %s579
      %p588 = scmp.eq.s32.totalorder %s75, 0
      %p589 = por %p587, %p588
      %p590 = scmp.ne.s32.totalorder %s578, %s579
      %p591 = scmp.eq.s32.totalorder %s76, 1
      %p592 = por %p590, %p591
      %p594 = scmp.ne.s32.totalorder %s579, %s593
      %p595 = scmp.eq.s32.totalorder %s76, 0
      %p596 = por %p594, %p595
      %s598 = sadd.s32 %s597, 1
      %p601 = scmp.eq.s32.totalorder %s70, 1
      %p602 = scmp.ne.s32.totalorder %s597, %s599
      %p603 = scmp.eq.s32.totalorder %s70, 0
      %p604 = por %p602, %p603
      %p605 = scmp.ne.s32.totalorder %s597, %s599
      %p606 = scmp.eq.s32.totalorder %s75, 1
      %p607 = por %p605, %p606
      %p608 = scmp.ne.s32.totalorder %s599, %s600
      %p609 = scmp.eq.s32.totalorder %s75, 0
      %p610 = por %p608, %p609
      %p611 = scmp.ne.s32.totalorder %s599, %s600
      %p612 = scmp.eq.s32.totalorder %s76, 1
      %p613 = por %p611, %p612
      %p615 = scmp.ne.s32.totalorder %s600, %s614
      %p616 = scmp.eq.s32.totalorder %s76, 0
      %p617 = por %p615, %p616
      %s619 = sadd.s32 %s618, 1
      %p622 = scmp.eq.s32.totalorder %s70, 1
      %p623 = scmp.ne.s32.totalorder %s618, %s620
      %p624 = scmp.eq.s32.totalorder %s70, 0
      %p625 = por %p623, %p624
      %p626 = scmp.ne.s32.totalorder %s618, %s620
      %p627 = scmp.eq.s32.totalorder %s75, 1
      %p628 = por %p626, %p627
      %p629 = scmp.ne.s32.totalorder %s620, %s621
      %p630 = scmp.eq.s32.totalorder %s75, 0
      %p631 = por %p629, %p630
      %p632 = scmp.ne.s32.totalorder %s620, %s621
      %p633 = scmp.eq.s32.totalorder %s76, 1
      %p634 = por %p632, %p633
      %p636 = scmp.ne.s32.totalorder %s621, %s635
      %p637 = scmp.eq.s32.totalorder %s76, 0
      %p638 = por %p636, %p637
      %s640 = sadd.s32 %s639, 1
      %p643 = scmp.eq.s32.totalorder %s70, 1
      %p644 = scmp.ne.s32.totalorder %s639, %s641
      %p645 = scmp.eq.s32.totalorder %s70, 0
      %p646 = por %p644, %p645
      %p647 = scmp.ne.s32.totalorder %s639, %s641
      %p648 = scmp.eq.s32.totalorder %s75, 1
      %p649 = por %p647, %p648
      %p650 = scmp.ne.s32.totalorder %s641, %s642
      %p651 = scmp.eq.s32.totalorder %s75, 0
      %p652 = por %p650, %p651
      %p653 = scmp.ne.s32.totalorder %s641, %s642
      %p654 = scmp.eq.s32.totalorder %s76, 1
      %p655 = por %p653, %p654
      %p657 = scmp.ne.s32.totalorder %s642, %s656
      %p658 = scmp.eq.s32.totalorder %s76, 0
      %p659 = por %p657, %p658
      %s661 = sadd.s32 %s660, 1
      %p664 = scmp.eq.s32.totalorder %s70, 1
      %p665 = scmp.ne.s32.totalorder %s660, %s662
      %p666 = scmp.eq.s32.totalorder %s70, 0
      %p667 = por %p665, %p666
      %p668 = scmp.ne.s32.totalorder %s660, %s662
      %p669 = scmp.eq.s32.totalorder %s75, 1
      %p670 = por %p668, %p669
      %p671 = scmp.ne.s32.totalorder %s662, %s663
      %p672 = scmp.eq.s32.totalorder %s75, 0
      %p673 = por %p671, %p672
      %p674 = scmp.ne.s32.totalorder %s662, %s663
      %p675 = scmp.eq.s32.totalorder %s76, 1
      %p676 = por %p674, %p675
      %p678 = scmp.ne.s32.totalorder %s663, %s677
      %p679 = scmp.eq.s32.totalorder %s76, 0
      %p680 = por %p678, %p679
      %s682 = sadd.s32 %s681, 1
      %p685 = scmp.eq.s32.totalorder %s70, 1
      %p686 = scmp.ne.s32.totalorder %s681, %s683
      %p687 = scmp.eq.s32.totalorder %s70, 0
      %p688 = por %p686, %p687
      %p689 = scmp.ne.s32.totalorder %s681, %s683
      %p690 = scmp.eq.s32.totalorder %s75, 1
      %p691 = por %p689, %p690
      %p692 = scmp.ne.s32.totalorder %s683, %s684
      %p693 = scmp.eq.s32.totalorder %s75, 0
      %p694 = por %p692, %p693
      %p695 = scmp.ne.s32.totalorder %s683, %s684
      %p696 = scmp.eq.s32.totalorder %s76, 1
      %p697 = por %p695, %p696
      %p699 = scmp.ne.s32.totalorder %s684, %s698
      %p700 = scmp.eq.s32.totalorder %s76, 0
      %p701 = por %p699, %p700
      %s702 = ssub.s32 %s70, %s77
      %p703 = scmp.eq.s32.totalorder %s702, 0
      %s705 = sadd.s32 %s704, 1
      %s706 = scalar_select %p703, %s704, %s705
      %p709 = pneg %p703
      %p710 = scmp.eq.s32.totalorder %s70, 1
      %p711 = por %p709, %p710
      %p712 = scmp.ne.s32.totalorder %s704, %s707
      %p713 = scmp.eq.s32.totalorder %s70, 0
      %p714 = por %p712, %p713
      %p715 = scmp.ne.s32.totalorder %s704, %s707
      %p716 = scmp.eq.s32.totalorder %s75, 1
      %p717 = por %p715, %p716
      %p718 = scmp.ne.s32.totalorder %s707, %s708
      %p719 = scmp.eq.s32.totalorder %s75, 0
      %p720 = por %p718, %p719
      %p721 = scmp.ne.s32.totalorder %s707, %s708
      %p722 = scmp.eq.s32.totalorder %s76, 1
      %p723 = por %p721, %p722
      %p725 = scmp.ne.s32.totalorder %s708, %s724
      %p726 = scmp.eq.s32.totalorder %s76, 0
      %p727 = por %p725, %p726
      %p728 = scmp.le.s32.totalorder 1, %s70
      %p729 = scmp.lt.s32.totalorder %s70, 3
      %p730 = pnand %p728, %p729
      %p731 = pneg %p730
      // Predicated region
      $region9: #{co_forward.1} parent=5 // pred_check
        _
      $region10: #{co_forward.1} parent=5 // pred_check_branch
        %733 = sbr.rel (%p730) target = $region12
      $region11: #{co_forward.1} parent=5 // pred_region
        %s734 = ssub.s32 %s70, 1
        // Predicated region
        $region13: #{co_forward.1} parent=11 // pred_check
          %p735 = pneg %p169
        $region14: #{co_forward.1} parent=11 // pred_check_branch
          %737 = sbr.rel (%p735) target = $region16
        $region15: #{co_forward.1} parent=11 // pred_region
          _
        $region16: #{co_forward.1} parent=11 // pred_fallthru
          _
        // Predicated region
        $region17: #{co_forward.1} parent=11 // pred_check
          %p738 = pneg %p190
        $region18: #{co_forward.1} parent=11 // pred_check_branch
          %740 = sbr.rel (%p738) target = $region20
        $region19: #{co_forward.1} parent=11 // pred_region
          _
        $region20: #{co_forward.1} parent=11 // pred_fallthru
          _
        // Predicated region
        $region21: #{co_forward.1} parent=11 // pred_check
          %p741 = pneg %p211
        $region22: #{co_forward.1} parent=11 // pred_check_branch
          %743 = sbr.rel (%p741) target = $region24
        $region23: #{co_forward.1} parent=11 // pred_region
          _
        $region24: #{co_forward.1} parent=11 // pred_fallthru
          _
        // Predicated region
        $region25: #{co_forward.1} parent=11 // pred_check
          %p744 = pneg %p232
        $region26: #{co_forward.1} parent=11 // pred_check_branch
          %746 = sbr.rel (%p744) target = $region28
        $region27: #{co_forward.1} parent=11 // pred_region
          %s748 = ssub.s32 16, 16
          %749 = vsyncadd [#allocation3], %s748
          %s751 = sshll.u32 [#allocation2], 4
          %s752 = int_to_ptr.vmem [resolvable:$true] %s751
          %754 = dma.hbm_to_vmem [thread:$0]  %s13, 16, %s752, [#allocation3]
        $region28: #{co_forward.1} parent=11 // pred_fallthru
          _
        // Predicated region
        $region29: #{co_forward.1} parent=11 // pred_check
          %p755 = pneg %p253
        $region30: #{co_forward.1} parent=11 // pred_check_branch
          %757 = sbr.rel (%p755) target = $region32
        $region31: #{co_forward.1} parent=11 // pred_region
          _
        $region32: #{co_forward.1} parent=11 // pred_fallthru
          _
        // Predicated region
        $region33: #{co_forward.1} parent=11 // pred_check
          %p758 = pneg %p274
        $region34: #{co_forward.1} parent=11 // pred_check_branch
          %760 = sbr.rel (%p758) target = $region36
        $region35: #{co_forward.1} parent=11 // pred_region
          %s762 = ssub.s32 16, 16
          %763 = vsyncadd [#allocation5], %s762
          %s765 = sshll.u32 [#allocation4], 4
          %s766 = int_to_ptr.vmem [resolvable:$true] %s765
          %768 = dma.hbm_to_vmem [thread:$0]  %s17, 16, %s766, [#allocation5]
        $region36: #{co_forward.1} parent=11 // pred_fallthru
          _
        // Predicated region
        $region37: #{co_forward.1} parent=11 // pred_check
          %p769 = pneg %p295
        $region38: #{co_forward.1} parent=11 // pred_check_branch
          %771 = sbr.rel (%p769) target = $region40
        $region39: #{co_forward.1} parent=11 // pred_region
          %s773 = ssub.s32 16, 16
          %774 = vsyncadd [#allocation5], %s773
          %s776 = sshll.u32 [#allocation6], 4
          %s777 = int_to_ptr.vmem [resolvable:$true] %s776
          %779 = dma.hbm_to_vmem [thread:$0]  %s19, 16, %s777, [#allocation5]
        $region40: #{co_forward.1} parent=11 // pred_fallthru
          _
        // Predicated region
        $region41: #{co_forward.1} parent=11 // pred_check
          %p780 = pneg %p316
        $region42: #{co_forward.1} parent=11 // pred_check_branch
          %782 = sbr.rel (%p780) target = $region44
        $region43: #{co_forward.1} parent=11 // pred_region
          %s784 = ssub.s32 16, 16
          %785 = vsyncadd [#allocation8], %s784
          %s787 = sshll.u32 [#allocation7], 4
          %s788 = int_to_ptr.vmem [resolvable:$true] %s787
          %790 = dma.hbm_to_vmem [thread:$0]  %s21, 16, %s788, [#allocation8]
        $region44: #{co_forward.1} parent=11 // pred_fallthru
          _
        // Predicated region
        $region45: #{co_forward.1} parent=11 // pred_check
          %p791 = pneg %p337
        $region46: #{co_forward.1} parent=11 // pred_check_branch
          %793 = sbr.rel (%p791) target = $region48
        $region47: #{co_forward.1} parent=11 // pred_region
          _
        $region48: #{co_forward.1} parent=11 // pred_fallthru
          _
        // Predicated region
        $region49: #{co_forward.1} parent=11 // pred_check
          %p794 = pneg %p358
        $region50: #{co_forward.1} parent=11 // pred_check_branch
          %796 = sbr.rel (%p794) target = $region52
        $region51: #{co_forward.1} parent=11 // pred_region
          %s798 = ssub.s32 16, 16
          %799 = vsyncadd [#allocation8], %s798
          %s801 = sshll.u32 [#allocation9], 4
          %s802 = int_to_ptr.vmem [resolvable:$true] %s801
          %804 = dma.hbm_to_vmem [thread:$0]  %s25, 16, %s802, [#allocation8]
        $region52: #{co_forward.1} parent=11 // pred_fallthru
          _
        // Predicated region
        $region53: #{co_forward.1} parent=11 // pred_check
          %p805 = pneg %p379
        $region54: #{co_forward.1} parent=11 // pred_check_branch
          %807 = sbr.rel (%p805) target = $region56
        $region55: #{co_forward.1} parent=11 // pred_region
          _
        $region56: #{co_forward.1} parent=11 // pred_fallthru
          _
        // Predicated region
        $region57: #{co_forward.1} parent=11 // pred_check
          %p808 = pneg %p400
        $region58: #{co_forward.1} parent=11 // pred_check_branch
          %810 = sbr.rel (%p808) target = $region60
        $region59: #{co_forward.1} parent=11 // pred_region
          %s812 = ssub.s32 16, 16
          %813 = vsyncadd [#allocation11], %s812
          %s815 = sshll.u32 [#allocation10], 4
          %s816 = int_to_ptr.vmem [resolvable:$true] %s815
          %818 = dma.hbm_to_vmem [thread:$0]  %s29, 16, %s816, [#allocation11]
        $region60: #{co_forward.1} parent=11 // pred_fallthru
          _
        // Predicated region
        $region61: #{co_forward.1} parent=11 // pred_check
          %p819 = pneg %p421
        $region62: #{co_forward.1} parent=11 // pred_check_branch
          %821 = sbr.rel (%p819) target = $region64
        $region63: #{co_forward.1} parent=11 // pred_region
          %s823 = ssub.s32 16, 16
          %824 = vsyncadd [#allocation11], %s823
          %s826 = sshll.u32 [#allocation12], 4
          %s827 = int_to_ptr.vmem [resolvable:$true] %s826
          %829 = dma.hbm_to_vmem [thread:$0]  %s31, 16, %s827, [#allocation11]
        $region64: #{co_forward.1} parent=11 // pred_fallthru
          _
        // Predicated region
        $region65: #{co_forward.1} parent=11 // pred_check
          %p830 = pneg %p442
        $region66: #{co_forward.1} parent=11 // pred_check_branch
          %832 = sbr.rel (%p830) target = $region68
        $region67: #{co_forward.1} parent=11 // pred_region
          %s834 = ssub.s32 16, 16
          %835 = vsyncadd [#allocation14], %s834
          %s837 = sshll.u32 [#allocation13], 4
          %s838 = int_to_ptr.vmem [resolvable:$true] %s837
          %840 = dma.hbm_to_vmem [thread:$0]  %s33, 16, %s838, [#allocation14]
        $region68: #{co_forward.1} parent=11 // pred_fallthru
          _
        // Predicated region
        $region69: #{co_forward.1} parent=11 // pred_check
          %p841 = pneg %p463
        $region70: #{co_forward.1} parent=11 // pred_check_branch
          %843 = sbr.rel (%p841) target = $region72
        $region71: #{co_forward.1} parent=11 // pred_region
          _
        $region72: #{co_forward.1} parent=11 // pred_fallthru
          _
        // Predicated region
        $region73: #{co_forward.1} parent=11 // pred_check
          %p844 = pneg %p484
        $region74: #{co_forward.1} parent=11 // pred_check_branch
          %846 = sbr.rel (%p844) target = $region76
        $region75: #{co_forward.1} parent=11 // pred_region
          _
        $region76: #{co_forward.1} parent=11 // pred_fallthru
          _
        // Predicated region
        $region77: #{co_forward.1} parent=11 // pred_check
          %p847 = pneg %p505
        $region78: #{co_forward.1} parent=11 // pred_check_branch
          %849 = sbr.rel (%p847) target = $region80
        $region79: #{co_forward.1} parent=11 // pred_region
          _
        $region80: #{co_forward.1} parent=11 // pred_fallthru
          _
        // Predicated region
        $region81: #{co_forward.1} parent=11 // pred_check
          %p850 = pneg %p526
        $region82: #{co_forward.1} parent=11 // pred_check_branch
          %852 = sbr.rel (%p850) target = $region84
        $region83: #{co_forward.1} parent=11 // pred_region
          _
        $region84: #{co_forward.1} parent=11 // pred_fallthru
          _
        // Predicated region
        $region85: #{co_forward.1} parent=11 // pred_check
          %p853 = pneg %p547
        $region86: #{co_forward.1} parent=11 // pred_check_branch
          %855 = sbr.rel (%p853) target = $region88
        $region87: #{co_forward.1} parent=11 // pred_region
          _
        $region88: #{co_forward.1} parent=11 // pred_fallthru
          _
        // Predicated region
        $region89: #{co_forward.1} parent=11 // pred_check
          %p856 = pneg %p568
        $region90: #{co_forward.1} parent=11 // pred_check_branch
          %858 = sbr.rel (%p856) target = $region92
        $region91: #{co_forward.1} parent=11 // pred_region
          _
        $region92: #{co_forward.1} parent=11 // pred_fallthru
          _
        // Predicated region
        $region93: #{co_forward.1} parent=11 // pred_check
          %p859 = pneg %p589
        $region94: #{co_forward.1} parent=11 // pred_check_branch
          %861 = sbr.rel (%p859) target = $region96
        $region95: #{co_forward.1} parent=11 // pred_region
          _
        $region96: #{co_forward.1} parent=11 // pred_fallthru
          _
        // Predicated region
        $region97: #{co_forward.1} parent=11 // pred_check
          %p862 = pneg %p610
        $region98: #{co_forward.1} parent=11 // pred_check_branch
          %864 = sbr.rel (%p862) target = $region100
        $region99: #{co_forward.1} parent=11 // pred_region
          _
        $region100: #{co_forward.1} parent=11 // pred_fallthru
          _
        // Predicated region
        $region101: #{co_forward.1} parent=11 // pred_check
          %p865 = pneg %p631
        $region102: #{co_forward.1} parent=11 // pred_check_branch
          %867 = sbr.rel (%p865) target = $region104
        $region103: #{co_forward.1} parent=11 // pred_region
          _
        $region104: #{co_forward.1} parent=11 // pred_fallthru
          _
        // Predicated region
        $region105: #{co_forward.1} parent=11 // pred_check
          %p868 = pneg %p652
        $region106: #{co_forward.1} parent=11 // pred_check_branch
          %870 = sbr.rel (%p868) target = $region108
        $region107: #{co_forward.1} parent=11 // pred_region
          _
        $region108: #{co_forward.1} parent=11 // pred_fallthru
          _
        // Predicated region
        $region109: #{co_forward.1} parent=11 // pred_check
          %p871 = pneg %p673
        $region110: #{co_forward.1} parent=11 // pred_check_branch
          %873 = sbr.rel (%p871) target = $region112
        $region111: #{co_forward.1} parent=11 // pred_region
          _
        $region112: #{co_forward.1} parent=11 // pred_fallthru
          _
        // Predicated region
        $region113: #{co_forward.1} parent=11 // pred_check
          %p874 = pneg %p694
        $region114: #{co_forward.1} parent=11 // pred_check_branch
          %876 = sbr.rel (%p874) target = $region116
        $region115: #{co_forward.1} parent=11 // pred_region
          _
        $region116: #{co_forward.1} parent=11 // pred_fallthru
          _
      $region12: #{co_forward.1} parent=5 // pred_fallthru
        _
      %p877 = scmp.lt.s32.totalorder %s70, 2
      // Predicated region
      $region117: #{co_forward.1} parent=5 // pred_check
        %p878 = pneg %p877
      $region118: #{co_forward.1} parent=5 // pred_check_branch
        %880 = sbr.rel (%p878) target = $region120
      $region119: #{co_forward.1} parent=5 // pred_region
        // Predicated region
        $region121: #{co_forward.1} parent=119 // pred_check
          %p881 = pneg %p90
        $region122: #{co_forward.1} parent=119 // pred_check_branch
          %883 = sbr.rel (%p881) target = $region124
        $region123: #{co_forward.1} parent=119 // pred_region
          %p884 = scmp.lt.s32.totalorder %s70, 1
          %s885 = scalar_select %p884, %s70, 1
          %s886 = smul.addr %s885, 8
          %s887 = scalar_lea.vmem %s1, %s886
        $region124: #{co_forward.1} parent=119 // pred_fallthru
          _
        // Predicated region
        $region125: #{co_forward.1} parent=119 // pred_check
          %p888 = pneg %p116
        $region126: #{co_forward.1} parent=119 // pred_check_branch
          %890 = sbr.rel (%p888) target = $region128
        $region127: #{co_forward.1} parent=119 // pred_region
          %p891 = scmp.lt.s32.totalorder %s70, 1
          %s892 = scalar_select %p891, %s70, 1
          %s893 = smul.addr %s892, 8
          %s894 = scalar_lea.vmem %s3, %s893
        $region128: #{co_forward.1} parent=119 // pred_fallthru
          _
        // Predicated region
        $region129: #{co_forward.1} parent=119 // pred_check
          %p895 = pneg %p142
        $region130: #{co_forward.1} parent=119 // pred_check_branch
          %897 = sbr.rel (%p895) target = $region132
        $region131: #{co_forward.1} parent=119 // pred_region
          %p898 = scmp.lt.s32.totalorder %s70, 1
          %s899 = scalar_select %p898, %s70, 1
          %s900 = scalar_lea.vmem %s5, %s899
        $region132: #{co_forward.1} parent=119 // pred_fallthru
          _
      $region120: #{co_forward.1} parent=5 // pred_fallthru
        _
      %p901 = scmp.le.s32.totalorder 1, %s70
      %p902 = scmp.lt.s32.totalorder %s70, 3
      %p903 = pnand %p901, %p902
      %p904 = pneg %p903
      // Predicated region
      $region133: #{co_forward.1} parent=5 // pred_check
        _
      $region134: #{co_forward.1} parent=5 // pred_check_branch
        %906 = sbr.rel (%p903) target = $region136
      $region135: #{co_forward.1} parent=5 // pred_region
        %s907 = ssub.s32 %s70, 1
        // Predicated region
        $region137: #{co_forward.1} parent=135 // pred_check
          %p908 = pneg %p232
        $region138: #{co_forward.1} parent=135 // pred_check_branch
          %910 = sbr.rel (%p908) target = $region140
        $region139: #{co_forward.1} parent=135 // pred_region
          %911 = dma.done [#allocation3], 16
        $region140: #{co_forward.1} parent=135 // pred_fallthru
          _
        // Predicated region
        $region141: #{co_forward.1} parent=135 // pred_check
          %p912 = pneg %p274
        $region142: #{co_forward.1} parent=135 // pred_check_branch
          %914 = sbr.rel (%p912) target = $region144
        $region143: #{co_forward.1} parent=135 // pred_region
          %915 = dma.done [#allocation5], 16
        $region144: #{co_forward.1} parent=135 // pred_fallthru
          _
        // Predicated region
        $region145: #{co_forward.1} parent=135 // pred_check
          %p916 = pneg %p295
        $region146: #{co_forward.1} parent=135 // pred_check_branch
          %918 = sbr.rel (%p916) target = $region148
        $region147: #{co_forward.1} parent=135 // pred_region
          %919 = dma.done [#allocation5], 16
        $region148: #{co_forward.1} parent=135 // pred_fallthru
          _
        // Predicated region
        $region149: #{co_forward.1} parent=135 // pred_check
          %p920 = pneg %p316
        $region150: #{co_forward.1} parent=135 // pred_check_branch
          %922 = sbr.rel (%p920) target = $region152
        $region151: #{co_forward.1} parent=135 // pred_region
          %923 = dma.done [#allocation8], 16
        $region152: #{co_forward.1} parent=135 // pred_fallthru
          _
        // Predicated region
        $region153: #{co_forward.1} parent=135 // pred_check
          %p924 = pneg %p358
        $region154: #{co_forward.1} parent=135 // pred_check_branch
          %926 = sbr.rel (%p924) target = $region156
        $region155: #{co_forward.1} parent=135 // pred_region
          %927 = dma.done [#allocation8], 16
        $region156: #{co_forward.1} parent=135 // pred_fallthru
          _
        // Predicated region
        $region157: #{co_forward.1} parent=135 // pred_check
          %p928 = pneg %p400
        $region158: #{co_forward.1} parent=135 // pred_check_branch
          %930 = sbr.rel (%p928) target = $region160
        $region159: #{co_forward.1} parent=135 // pred_region
          %931 = dma.done [#allocation11], 16
        $region160: #{co_forward.1} parent=135 // pred_fallthru
          _
        // Predicated region
        $region161: #{co_forward.1} parent=135 // pred_check
          %p932 = pneg %p421
        $region162: #{co_forward.1} parent=135 // pred_check_branch
          %934 = sbr.rel (%p932) target = $region164
        $region163: #{co_forward.1} parent=135 // pred_region
          %935 = dma.done [#allocation11], 16
        $region164: #{co_forward.1} parent=135 // pred_fallthru
          _
        // Predicated region
        $region165: #{co_forward.1} parent=135 // pred_check
          %p936 = pneg %p442
        $region166: #{co_forward.1} parent=135 // pred_check_branch
          %938 = sbr.rel (%p936) target = $region168
        $region167: #{co_forward.1} parent=135 // pred_region
          %939 = dma.done [#allocation14], 16
        $region168: #{co_forward.1} parent=135 // pred_fallthru
          _
        %p940 = scmp.lt.s32.totalorder %s75, 1
        %s941 = scalar_select %p940, %s75, 1
        %s942 = smul.addr %s941, 8
        %s943 = scalar_lea.vmem %s1, %s942
        %p944 = pneg %p96
        %p945 = pneg %p93
        %p946 = scmp.lt.s32.totalorder %s75, 1
        %s947 = scalar_select %p946, %s75, 1
        %s948 = smul.addr %s947, 8
        %s949 = scalar_lea.vmem %s3, %s948
        %p950 = pneg %p122
        %p951 = pneg %p119
        %p952 = scmp.lt.s32.totalorder %s75, 1
        %s953 = scalar_select %p952, %s75, 1
        %s954 = scalar_lea.vmem %s5, %s953
        %p955 = pneg %p148
        %p956 = pneg %p145
        %p957 = pneg %p169
        %p958 = pneg %p166
        %p959 = pneg %p190
        %p960 = pneg %p187
        %p961 = pneg %p211
        %p962 = pneg %p208
        %p963 = pneg %p232
        %p964 = pneg %p229
        %p965 = pneg %p253
        %p966 = pneg %p250
        %p967 = pneg %p274
        %p968 = pneg %p271
        %p969 = pneg %p295
        %p970 = pneg %p292
        %p971 = pneg %p316
        %p972 = pneg %p313
        %p973 = pneg %p337
        %p974 = pneg %p334
        %p975 = pneg %p358
        %p976 = pneg %p355
        %p977 = pneg %p379
        %p978 = pneg %p376
        %p979 = pneg %p400
        %p980 = pneg %p397
        %p981 = pneg %p421
        %p982 = pneg %p418
        %p983 = pneg %p442
        %p984 = pneg %p439
        %p985 = pneg %p463
        %p986 = pneg %p460
        %p987 = pneg %p484
        %p988 = pneg %p481
        %p989 = pneg %p505
        %p990 = pneg %p502
        %p991 = pneg %p526
        %p992 = pneg %p523
        %p993 = pneg %p547
        %p994 = pneg %p544
        %p995 = pneg %p568
        %p996 = pneg %p565
        %p997 = pneg %p589
        %p998 = pneg %p586
        %p999 = pneg %p610
        %p1000 = pneg %p607
        %p1001 = pneg %p631
        %p1002 = pneg %p628
        %p1003 = pneg %p652
        %p1004 = pneg %p649
        %p1005 = pneg %p673
        %p1006 = pneg %p670
        %p1007 = pneg %p694
        %p1008 = pneg %p691
        %p1009 = pneg %p720
        %p1010 = pneg %p717
        %p1011 = scmp.lt.s32.totalorder %s75, 1
        %s1012 = scalar_select %p1011, %s75, 1
        %s1013 = smul.addr %s1012, 8
        %s1014 = scalar_lea.vmem %s59, %s1013
        %p1015 = scmp.lt.s32.totalorder %s75, 1
        %s1016 = scalar_select %p1015, %s75, 1
        %s1017 = smul.addr %s1016, 8
        %s1018 = scalar_lea.vmem %s1, %s1017
        %p1019 = scmp.lt.s32.totalorder %s75, 1
        %s1020 = scalar_select %p1019, %s75, 1
        %s1021 = smul.addr %s1020, 8
        %s1022 = scalar_lea.vmem %s3, %s1021
        %p1023 = scmp.lt.s32.totalorder %s75, 1
        %s1024 = scalar_select %p1023, %s75, 1
        %s1025 = scalar_lea.vmem %s5, %s1024
        %p1026 = scmp.lt.s32.totalorder %s75, 1
        %s1027 = scalar_select %p1026, %s75, 1
        %s1028 = smul.addr %s1027, 8
        %s1029 = scalar_lea.vmem %s59, %s1028
        %v1031 = vld [vmem:[%s1018] sm:$0xff]
        %v1032 = vld [vmem:[%s1022] sm:$0xff]
        %v1033 = vld [vmem:[%s1025] sm:$0x1]
        %v1034 = vmul.f32 %v1033, -1e+09
        %v1035 = vld [vmem:[%s7] sm:$0xff]
        %v1036 = vld [vmem:[%s7 + $0x8] sm:$0xff]
        %v1037 = vld [vmem:[%s7 + $0x10] sm:$0xff]
        %v1038 = vld [vmem:[%s7 + $0x18] sm:$0xff]
        %v1039 = vpack.c.bf16 %v1031, %v1031
        %v1040 = vpack.c.bf16 %v1036, %v1035
        %v1041 = vpack.c.bf16 %v1038, %v1037
        %v1042 = vld [vmem:[%s9] sm:$0x1]
        %v1044 = vlaneseq
        %v1045 = vshrl.u32 %v1044, 7
        %v1046 = vsub.s32 0, %v1045
        %v1047 = vrot.slane %v1042, %v1046
        %vm1049 = vcmask 261120
        %v1051 = vsel %vm1049, %v1039, 0
        %1053 = vmatprep.subr.bf16.mxu0 0
        %1054 = vmatpush1.bf16.msra.mxu0 %v1040
        %1055 = vmatprep.subr.bf16.mxu0 0
        %1056 = vmatpush1.bf16.msra.mxu0 %v1041
        %1057 = vmatprep.subr.bf16.mxu0 0
        %1058 = vmatpush1.bf16.msra.mxu0 0
        %1059 = vmatprep.subr.bf16.mxu0 0
        %1060 = vmatpush1.bf16.msra.mxu0 0
        %1061 = vmatprep.subr.bf16.mxu0 0
        %1062 = vmatpush1.bf16.msra.mxu0 0
        %1063 = vmatprep.subr.bf16.mxu0 0
        %1064 = vmatpush1.bf16.msra.mxu0 0
        %1065 = vmatprep.subr.bf16.mxu0 0
        %1066 = vmatpush1.bf16.msra.mxu0 0
        %1067 = vmatprep.subr.bf16.mxu0 0
        %1068 = vmatpush1.bf16.msra.mxu0 0
        %1069 = vmatprep.subr.bf16.mxu0 0
        %1070 = vmatpush1.bf16.msra.mxu0 0
        %1071 = vmatprep.subr.bf16.mxu0 0
        %1072 = vmatpush1.bf16.msra.mxu0 0
        %1073 = vmatprep.subr.bf16.mxu0 0
        %1074 = vmatpush1.bf16.msra.mxu0 0
        %1075 = vmatprep.subr.bf16.mxu0 0
        %1076 = vmatpush1.bf16.msra.mxu0 0
        %1077 = vmatprep.subr.bf16.mxu0 0
        %1078 = vmatpush1.bf16.msra.mxu0 0
        %1079 = vmatprep.subr.bf16.mxu0 0
        %1080 = vmatpush1.bf16.msra.mxu0 0
        %1081 = vmatprep.subr.bf16.mxu0 0
        %1082 = vmatpush1.bf16.msra.mxu0 0
        %1083 = vmatprep.subr.bf16.mxu0 0
        %1084 = vmatpush1.bf16.msra.mxu0 0
        %1085 = vmatprep.mubr.bf16.mxu0 0
        %1086 = vmatmul.mubr.bf16.gmra.mrb[0].mxu0 %v1051
        %v1087 = vpop.f32.mrb[0].mxu0
        %v1088 = vadd.f32 %v1047, %v1087
        %v1089 = vpop.f32.mrb[0].mxu0
        %v1090 = vpop.f32.mrb[0].mxu0
        %v1091 = vpop.f32.mrb[0].mxu0
        %1092 = vdwg.mxu0
        %v1093 = vld [vmem:[%s11] sm:$0xff]
        %v1094 = vld [vmem:[%s11 + $0x8] sm:$0xff]
        %v1095 = vpack.c.bf16 %v1032, %v1032
        %v1096 = vpack.c.bf16 %v1094, %v1093
        %v1097 = vld [vmem:[#allocation2] sm:$0x1]
        %v1099 = vlaneseq
        %v1100 = vshrl.u32 %v1099, 7
        %v1101 = vsub.s32 0, %v1100
        %v1102 = vrot.slane %v1097, %v1101
        %vm1104 = vcmask 130048
        %v1106 = vsel %vm1104, %v1095, 0
        %1108 = vmatprep.subr.bf16.mxu0 0
        %1109 = vmatpush1.bf16.msra.mxu0 %v1096
        %1110 = vmatprep.subr.bf16.mxu0 0
        %1111 = vmatpush1.bf16.msra.mxu0 0
        %1112 = vmatprep.subr.bf16.mxu0 0
        %1113 = vmatpush1.bf16.msra.mxu0 0
        %1114 = vmatprep.subr.bf16.mxu0 0
        %1115 = vmatpush1.bf16.msra.mxu0 0
        %1116 = vmatprep.subr.bf16.mxu0 0
        %1117 = vmatpush1.bf16.msra.mxu0 0
        %1118 = vmatprep.subr.bf16.mxu0 0
        %1119 = vmatpush1.bf16.msra.mxu0 0
        %1120 = vmatprep.subr.bf16.mxu0 0
        %1121 = vmatpush1.bf16.msra.mxu0 0
        %1122 = vmatprep.subr.bf16.mxu0 0
        %1123 = vmatpush1.bf16.msra.mxu0 0
        %1124 = vmatprep.subr.bf16.mxu0 0
        %1125 = vmatpush1.bf16.msra.mxu0 0
        %1126 = vmatprep.subr.bf16.mxu0 0
        %1127 = vmatpush1.bf16.msra.mxu0 0
        %1128 = vmatprep.subr.bf16.mxu0 0
        %1129 = vmatpush1.bf16.msra.mxu0 0
        %1130 = vmatprep.subr.bf16.mxu0 0
        %1131 = vmatpush1.bf16.msra.mxu0 0
        %1132 = vmatprep.subr.bf16.mxu0 0
        %1133 = vmatpush1.bf16.msra.mxu0 0
        %1134 = vmatprep.subr.bf16.mxu0 0
        %1135 = vmatpush1.bf16.msra.mxu0 0
        %1136 = vmatprep.subr.bf16.mxu0 0
        %1137 = vmatpush1.bf16.msra.mxu0 0
        %1138 = vmatprep.subr.bf16.mxu0 0
        %1139 = vmatpush1.bf16.msra.mxu0 0
        %1140 = vmatprep.mubr.bf16.mxu0 0
        %1141 = vmatmul.mubr.bf16.gmra.mrb[0].mxu0 %v1106
        %v1142 = vpop.f32.mrb[0].mxu0
        %v1143 = vadd.f32 %v1102, %v1142
        %v1144 = vpop.f32.mrb[0].mxu0
        %v1145 = vpop.f32.mrb[0].mxu0
        %v1146 = vpop.f32.mrb[0].mxu0
        %1147 = vdwg.mxu0
        %v1148 = vld [vmem:[%s15] sm:$0xff]
        %v1149 = vld [vmem:[%s15 + $0x8] sm:$0xff]
        %v1150 = vld [vmem:[%s15 + $0x10] sm:$0xff]
        %v1151 = vld [vmem:[%s15 + $0x18] sm:$0xff]
        %v1152 = vld [vmem:[#allocation4] sm:$0x1]
        %v1153 = vmul.f32 %v1088, 0.35355338
        %1154 = vxpose.xlu0.b32.start [1/16] %v1143, 128
        %1155 = vxpose.xlu0.b32.cont [2/16] 0.0, 128
        %1156 = vxpose.xlu0.b32.cont [3/16] 0.0, 128
        %1157 = vxpose.xlu0.b32.cont [4/16] 0.0, 128
        %1158 = vxpose.xlu0.b32.cont [5/16] 0.0, 128
        %1159 = vxpose.xlu0.b32.cont [6/16] 0.0, 128
        %1160 = vxpose.xlu0.b32.cont [7/16] 0.0, 128
        %1161 = vxpose.xlu0.b32.cont [8/16] 0.0, 128
        %1162 = vxpose.xlu0.b32.cont [9/16] 0.0, 128
        %1163 = vxpose.xlu0.b32.cont [10/16] 0.0, 128
        %1164 = vxpose.xlu0.b32.cont [11/16] 0.0, 128
        %1165 = vxpose.xlu0.b32.cont [12/16] 0.0, 128
        %1166 = vxpose.xlu0.b32.cont [13/16] 0.0, 128
        %1167 = vxpose.xlu0.b32.cont [14/16] 0.0, 128
        %1168 = vxpose.xlu0.b32.cont [15/16] 0.0, 128
        %1169 = vxpose.xlu0.b32.end [16/16] 0.0, 128
        %v1170 = vpop.trf.xlu0
        %v1171 = vpop.trf.xlu0
        %v1172 = vpop.trf.xlu0
        %v1173 = vpop.trf.xlu0
        %v1174 = vpop.trf.xlu0
        %v1175 = vpop.trf.xlu0
        %v1176 = vpop.trf.xlu0
        %v1177 = vpop.trf.xlu0
        %v1178 = vpop.trf.xlu0
        %v1179 = vpop.trf.xlu0
        %v1180 = vpop.trf.xlu0
        %v1181 = vpop.trf.xlu0
        %v1182 = vpop.trf.xlu0
        %v1183 = vpop.trf.xlu0
        %v1184 = vpop.trf.xlu0
        %v1185 = vpop.trf.xlu0
        %v1186 = vpack.c.bf16 %v1153, %v1153
        %v1187 = vpack.c.bf16 %v1170, %v1170
        %v1189 = vlaneseq
        %v1190 = vshrl.u32 %v1189, 7
        %v1191 = vsub.s32 0, %v1190
        %v1192 = vrot.slane %v1034, %v1191
        %vm1194 = vcmask 64512
        %v1196 = vsel %vm1194, %v1186, 0
        %vm1198 = vcmask 1043456
        %v1200 = vsel %vm1198, %v1187, 0
        %1202 = vmatprep.subr.bf16.mxu0 0
        %1203 = vmatpush1.bf16.msra.mxu0 %v1200
        %1204 = vmatprep.subr.bf16.mxu0 0
        %1205 = vmatpush1.bf16.msra.mxu0 0
        %1206 = vmatprep.subr.bf16.mxu0 0
        %1207 = vmatpush1.bf16.msra.mxu0 0
        %1208 = vmatprep.subr.bf16.mxu0 0
        %1209 = vmatpush1.bf16.msra.mxu0 0
        %1210 = vmatprep.subr.bf16.mxu0 0
        %1211 = vmatpush1.bf16.msra.mxu0 0
        %1212 = vmatprep.subr.bf16.mxu0 0
        %1213 = vmatpush1.bf16.msra.mxu0 0
        %1214 = vmatprep.subr.bf16.mxu0 0
        %1215 = vmatpush1.bf16.msra.mxu0 0
        %1216 = vmatprep.subr.bf16.mxu0 0
        %1217 = vmatpush1.bf16.msra.mxu0 0
        %1218 = vmatprep.subr.bf16.mxu0 0
        %1219 = vmatpush1.bf16.msra.mxu0 0
        %1220 = vmatprep.subr.bf16.mxu0 0
        %1221 = vmatpush1.bf16.msra.mxu0 0
        %1222 = vmatprep.subr.bf16.mxu0 0
        %1223 = vmatpush1.bf16.msra.mxu0 0
        %1224 = vmatprep.subr.bf16.mxu0 0
        %1225 = vmatpush1.bf16.msra.mxu0 0
        %1226 = vmatprep.subr.bf16.mxu0 0
        %1227 = vmatpush1.bf16.msra.mxu0 0
        %1228 = vmatprep.subr.bf16.mxu0 0
        %1229 = vmatpush1.bf16.msra.mxu0 0
        %1230 = vmatprep.subr.bf16.mxu0 0
        %1231 = vmatpush1.bf16.msra.mxu0 0
        %1232 = vmatprep.subr.bf16.mxu0 0
        %1233 = vmatpush1.bf16.msra.mxu0 0
        %1234 = vmatprep.mubr.bf16.mxu0 0
        %1235 = vmatmul.mubr.bf16.gmra.mrb[0].mxu0 %v1196
        %v1236 = vpop.f32.mrb[0].mxu0
        %v1237 = vadd.f32 %v1192, %v1236
        %v1238 = vpop.f32.mrb[0].mxu0
        %v1239 = vpop.f32.mrb[0].mxu0
        %v1240 = vpop.f32.mrb[0].mxu0
        %1241 = vdwg.mxu0
        %v1242 = vsel %vm1194, %v1237, -inf
        %1243 = vmax.xlane.f32.xlu0 %v1242
        %v1244 = vpop.xlane.xlu0 %1243
        %v1245 = vsub.f32 %v1237, %v1244
        %v1246 = vmul.f32 %v1245, 1.442695
        %v1247 = vpow.pop %v1246
        %v1248 = vsel %vm1194, %v1247, 0.0
        %1249 = vadd.xlane.f32.xlu0 %v1248
        %v1250 = vpop.xlane.xlu0 %1249
        %v1251 = vrcp.pop %v1250
        %v1252 = vmul.f32 %v1247, %v1251
        %v1253 = vpack.c.bf16 %v1252, %v1252
        %v1254 = vpack.c.bf16 %v1143, %v1143
        %1256 = vrot.lane.b32.xlu0 %v1254, 96
        %v1257 = vpop.permute.xlu0 %1256
        %v1259 = vsel %vm1194, %v1253, 0
        %v1262 = vsel %vm1198, %v1257, 0
        %1264 = vmatprep.subr.bf16.mxu0 0
        %1265 = vmatpush1.bf16.msra.mxu0 %v1262
        %1266 = vmatprep.subr.bf16.mxu0 0
        %1267 = vmatpush1.bf16.msra.mxu0 0
        %1268 = vmatprep.subr.bf16.mxu0 0
        %1269 = vmatpush1.bf16.msra.mxu0 0
        %1270 = vmatprep.subr.bf16.mxu0 0
        %1271 = vmatpush1.bf16.msra.mxu0 0
        %1272 = vmatprep.subr.bf16.mxu0 0
        %1273 = vmatpush1.bf16.msra.mxu0 0
        %1274 = vmatprep.subr.bf16.mxu0 0
        %1275 = vmatpush1.bf16.msra.mxu0 0
        %1276 = vmatprep.subr.bf16.mxu0 0
        %1277 = vmatpush1.bf16.msra.mxu0 0
        %1278 = vmatprep.subr.bf16.mxu0 0
        %1279 = vmatpush1.bf16.msra.mxu0 0
        %1280 = vmatprep.subr.bf16.mxu0 0
        %1281 = vmatpush1.bf16.msra.mxu0 0
        %1282 = vmatprep.subr.bf16.mxu0 0
        %1283 = vmatpush1.bf16.msra.mxu0 0
        %1284 = vmatprep.subr.bf16.mxu0 0
        %1285 = vmatpush1.bf16.msra.mxu0 0
        %1286 = vmatprep.subr.bf16.mxu0 0
        %1287 = vmatpush1.bf16.msra.mxu0 0
        %1288 = vmatprep.subr.bf16.mxu0 0
        %1289 = vmatpush1.bf16.msra.mxu0 0
        %1290 = vmatprep.subr.bf16.mxu0 0
        %1291 = vmatpush1.bf16.msra.mxu0 0
        %1292 = vmatprep.subr.bf16.mxu0 0
        %1293 = vmatpush1.bf16.msra.mxu0 0
        %1294 = vmatprep.subr.bf16.mxu0 0
        %1295 = vmatpush1.bf16.msra.mxu0 0
        %1296 = vmatprep.mubr.bf16.mxu0 0
        %1297 = vmatmul.mubr.bf16.gmra.mrb[0].mxu0 %v1259
        %v1298 = vpop.f32.mrb[0].mxu0
        %v1299 = vadd.f32 0.0, %v1298
        %v1300 = vpop.f32.mrb[0].mxu0
        %v1301 = vpop.f32.mrb[0].mxu0
        %v1302 = vpop.f32.mrb[0].mxu0
        %1303 = vdwg.mxu0
        %v1304 = vpack.c.bf16 %v1299, %v1299
        %v1305 = vpack.c.bf16 %v1148, %v1148
        %1307 = vrot.lane.b32.xlu0 %v1143, 120
        %v1308 = vpop.permute.xlu0 %1307
        %1310 = vxpose.xlu0.b32.start [1/16] %v1308, 128
        %1311 = vxpose.xlu0.b32.cont [2/16] 0.0, 128
        %1312 = vxpose.xlu0.b32.cont [3/16] 0.0, 128
        %1313 = vxpose.xlu0.b32.cont [4/16] 0.0, 128
        %1314 = vxpose.xlu0.b32.cont [5/16] 0.0, 128
        %1315 = vxpose.xlu0.b32.cont [6/16] 0.0, 128
        %1316 = vxpose.xlu0.b32.cont [7/16] 0.0, 128
        %1317 = vxpose.xlu0.b32.cont [8/16] 0.0, 128
        %1318 = vxpose.xlu0.b32.cont [9/16] 0.0, 128
        %1319 = vxpose.xlu0.b32.cont [10/16] 0.0, 128
        %1320 = vxpose.xlu0.b32.cont [11/16] 0.0, 128
        %1321 = vxpose.xlu0.b32.cont [12/16] 0.0, 128
        %1322 = vxpose.xlu0.b32.cont [13/16] 0.0, 128
        %1323 = vxpose.xlu0.b32.cont [14/16] 0.0, 128
        %1324 = vxpose.xlu0.b32.cont [15/16] 0.0, 128
        %1325 = vxpose.xlu0.b32.end [16/16] 0.0, 128
        %v1326 = vpop.trf.xlu0
        %v1327 = vpop.trf.xlu0
        %v1328 = vpop.trf.xlu0
        %v1329 = vpop.trf.xlu0
        %v1330 = vpop.trf.xlu0
        %v1331 = vpop.trf.xlu0
        %v1332 = vpop.trf.xlu0
        %v1333 = vpop.trf.xlu0
        %v1334 = vpop.trf.xlu0
        %v1335 = vpop.trf.xlu0
        %v1336 = vpop.trf.xlu0
        %v1337 = vpop.trf.xlu0
        %v1338 = vpop.trf.xlu0
        %v1339 = vpop.trf.xlu0
        %v1340 = vpop.trf.xlu0
        %v1341 = vpop.trf.xlu0
        %v1342 = vpack.c.bf16 %v1326, %v1326
        %1344 = vrot.lane.b32.xlu0 %v1186, 120
        %v1345 = vpop.permute.xlu0 %1344
        %v1347 = vsel %vm1194, %v1345, 0
        %v1350 = vsel %vm1198, %v1342, 0
        %1352 = vmatprep.subr.bf16.mxu0 0
        %1353 = vmatpush1.bf16.msra.mxu0 %v1350
        %1354 = vmatprep.subr.bf16.mxu0 0
        %1355 = vmatpush1.bf16.msra.mxu0 0
        %1356 = vmatprep.subr.bf16.mxu0 0
        %1357 = vmatpush1.bf16.msra.mxu0 0
        %1358 = vmatprep.subr.bf16.mxu0 0
        %1359 = vmatpush1.bf16.msra.mxu0 0
        %1360 = vmatprep.subr.bf16.mxu0 0
        %1361 = vmatpush1.bf16.msra.mxu0 0
        %1362 = vmatprep.subr.bf16.mxu0 0
        %1363 = vmatpush1.bf16.msra.mxu0 0
        %1364 = vmatprep.subr.bf16.mxu0 0
        %1365 = vmatpush1.bf16.msra.mxu0 0
        %1366 = vmatprep.subr.bf16.mxu0 0
        %1367 = vmatpush1.bf16.msra.mxu0 0
        %1368 = vmatprep.subr.bf16.mxu0 0
        %1369 = vmatpush1.bf16.msra.mxu0 0
        %1370 = vmatprep.subr.bf16.mxu0 0
        %1371 = vmatpush1.bf16.msra.mxu0 0
        %1372 = vmatprep.subr.bf16.mxu0 0
        %1373 = vmatpush1.bf16.msra.mxu0 0
        %1374 = vmatprep.subr.bf16.mxu0 0
        %1375 = vmatpush1.bf16.msra.mxu0 0
        %1376 = vmatprep.subr.bf16.mxu0 0
        %1377 = vmatpush1.bf16.msra.mxu0 0
        %1378 = vmatprep.subr.bf16.mxu0 0
        %1379 = vmatpush1.bf16.msra.mxu0 0
        %1380 = vmatprep.subr.bf16.mxu0 0
        %1381 = vmatpush1.bf16.msra.mxu0 0
        %1382 = vmatprep.subr.bf16.mxu0 0
        %1383 = vmatpush1.bf16.msra.mxu0 0
        %1384 = vmatprep.mubr.bf16.mxu0 0
        %1385 = vmatmul.mubr.bf16.gmra.mrb[0].mxu0 %v1347
        %v1386 = vpop.f32.mrb[0].mxu0
        %v1387 = vadd.f32 %v1192, %v1386
        %v1388 = vpop.f32.mrb[0].mxu0
        %v1389 = vpop.f32.mrb[0].mxu0
        %v1390 = vpop.f32.mrb[0].mxu0
        %1391 = vdwg.mxu0
        %v1392 = vsel %vm1194, %v1387, -inf
        %1393 = vmax.xlane.f32.xlu0 %v1392
        %v1394 = vpop.xlane.xlu0 %1393
        %v1395 = vsub.f32 %v1387, %v1394
        %v1396 = vmul.f32 %v1395, 1.442695
        %v1397 = vpow.pop %v1396
        %v1398 = vsel %vm1194, %v1397, 0.0
        %1399 = vadd.xlane.f32.xlu0 %v1398
        %v1400 = vpop.xlane.xlu0 %1399
        %v1401 = vrcp.pop %v1400
        %v1402 = vmul.f32 %v1397, %v1401
        %v1403 = vpack.c.bf16 %v1402, %v1402
        %1404 = vrot.lane.b32.xlu0 %v1254, 88
        %v1405 = vpop.permute.xlu0 %1404
        %v1407 = vsel %vm1194, %v1403, 0
        %v1410 = vsel %vm1198, %v1405, 0
        %1412 = vmatprep.subr.bf16.mxu0 0
        %1413 = vmatpush1.bf16.msra.mxu0 %v1410
        %1414 = vmatprep.subr.bf16.mxu0 0
        %1415 = vmatpush1.bf16.msra.mxu0 0
        %1416 = vmatprep.subr.bf16.mxu0 0
        %1417 = vmatpush1.bf16.msra.mxu0 0
        %1418 = vmatprep.subr.bf16.mxu0 0
        %1419 = vmatpush1.bf16.msra.mxu0 0
        %1420 = vmatprep.subr.bf16.mxu0 0
        %1421 = vmatpush1.bf16.msra.mxu0 0
        %1422 = vmatprep.subr.bf16.mxu0 0
        %1423 = vmatpush1.bf16.msra.mxu0 0
        %1424 = vmatprep.subr.bf16.mxu0 0
        %1425 = vmatpush1.bf16.msra.mxu0 0
        %1426 = vmatprep.subr.bf16.mxu0 0
        %1427 = vmatpush1.bf16.msra.mxu0 0
        %1428 = vmatprep.subr.bf16.mxu0 0
        %1429 = vmatpush1.bf16.msra.mxu0 0
        %1430 = vmatprep.subr.bf16.mxu0 0
        %1431 = vmatpush1.bf16.msra.mxu0 0
        %1432 = vmatprep.subr.bf16.mxu0 0
        %1433 = vmatpush1.bf16.msra.mxu0 0
        %1434 = vmatprep.subr.bf16.mxu0 0
        %1435 = vmatpush1.bf16.msra.mxu0 0
        %1436 = vmatprep.subr.bf16.mxu0 0
        %1437 = vmatpush1.bf16.msra.mxu0 0
        %1438 = vmatprep.subr.bf16.mxu0 0
        %1439 = vmatpush1.bf16.msra.mxu0 0
        %1440 = vmatprep.subr.bf16.mxu0 0
        %1441 = vmatpush1.bf16.msra.mxu0 0
        %1442 = vmatprep.subr.bf16.mxu0 0
        %1443 = vmatpush1.bf16.msra.mxu0 0
        %1444 = vmatprep.mubr.bf16.mxu0 0
        %1445 = vmatmul.mubr.bf16.gmra.mrb[0].mxu0 %v1407
        %v1446 = vpop.f32.mrb[0].mxu0
        %v1447 = vadd.f32 0.0, %v1446
        %v1448 = vpop.f32.mrb[0].mxu0
        %v1449 = vpop.f32.mrb[0].mxu0
        %v1450 = vpop.f32.mrb[0].mxu0
        %1451 = vdwg.mxu0
        %v1452 = vpack.c.bf16 %v1447, %v1447
        %v1453 = vpack.c.bf16 %v1149, %v1149
        %v1455 = vsel %vm1194, %v1452, 0
        %v1458 = vsel %vm1198, %v1453, 0
        %1460 = vmatprep.subr.bf16.mxu0 0
        %1461 = vmatpush1.bf16.msra.mxu0 %v1458
        %1462 = vmatprep.subr.bf16.mxu0 0
        %1463 = vmatpush1.bf16.msra.mxu0 0
        %1464 = vmatprep.subr.bf16.mxu0 0
        %1465 = vmatpush1.bf16.msra.mxu0 0
        %1466 = vmatprep.subr.bf16.mxu0 0
        %1467 = vmatpush1.bf16.msra.mxu0 0
        %1468 = vmatprep.subr.bf16.mxu0 0
        %1469 = vmatpush1.bf16.msra.mxu0 0
        %1470 = vmatprep.subr.bf16.mxu0 0
        %1471 = vmatpush1.bf16.msra.mxu0 0
        %1472 = vmatprep.subr.bf16.mxu0 0
        %1473 = vmatpush1.bf16.msra.mxu0 0
        %1474 = vmatprep.subr.bf16.mxu0 0
        %1475 = vmatpush1.bf16.msra.mxu0 0
        %1476 = vmatprep.subr.bf16.mxu0 0
        %1477 = vmatpush1.bf16.msra.mxu0 0
        %1478 = vmatprep.subr.bf16.mxu0 0
        %1479 = vmatpush1.bf16.msra.mxu0 0
        %1480 = vmatprep.subr.bf16.mxu0 0
        %1481 = vmatpush1.bf16.msra.mxu0 0
        %1482 = vmatprep.subr.bf16.mxu0 0
        %1483 = vmatpush1.bf16.msra.mxu0 0
        %1484 = vmatprep.subr.bf16.mxu0 0
        %1485 = vmatpush1.bf16.msra.mxu0 0
        %1486 = vmatprep.subr.bf16.mxu0 0
        %1487 = vmatpush1.bf16.msra.mxu0 0
        %1488 = vmatprep.subr.bf16.mxu0 0
        %1489 = vmatpush1.bf16.msra.mxu0 0
        %1490 = vmatprep.subr.bf16.mxu0 0
        %1491 = vmatpush1.bf16.msra.mxu0 0
        %1492 = vmatprep.mubr.bf16.mxu0 0
        %1493 = vmatmul.mubr.bf16.gmra.mrb[0].mxu0 %v1455
        %v1494 = vpop.f32.mrb[0].mxu0
        %v1495 = vadd.f32 0.0, %v1494
        %v1496 = vpop.f32.mrb[0].mxu0
        %v1497 = vpop.f32.mrb[0].mxu0
        %v1498 = vpop.f32.mrb[0].mxu0
        %1499 = vdwg.mxu0
        %v1501 = vsel %vm1194, %v1304, 0
        %v1504 = vsel %vm1198, %v1305, 0
        %1506 = vmatprep.subr.bf16.mxu0 0
        %1507 = vmatpush1.bf16.msra.mxu0 %v1504
        %1508 = vmatprep.subr.bf16.mxu0 0
        %1509 = vmatpush1.bf16.msra.mxu0 0
        %1510 = vmatprep.subr.bf16.mxu0 0
        %1511 = vmatpush1.bf16.msra.mxu0 0
        %1512 = vmatprep.subr.bf16.mxu0 0
        %1513 = vmatpush1.bf16.msra.mxu0 0
        %1514 = vmatprep.subr.bf16.mxu0 0
        %1515 = vmatpush1.bf16.msra.mxu0 0
        %1516 = vmatprep.subr.bf16.mxu0 0
        %1517 = vmatpush1.bf16.msra.mxu0 0
        %1518 = vmatprep.subr.bf16.mxu0 0
        %1519 = vmatpush1.bf16.msra.mxu0 0
        %1520 = vmatprep.subr.bf16.mxu0 0
        %1521 = vmatpush1.bf16.msra.mxu0 0
        %1522 = vmatprep.subr.bf16.mxu0 0
        %1523 = vmatpush1.bf16.msra.mxu0 0
        %1524 = vmatprep.subr.bf16.mxu0 0
        %1525 = vmatpush1.bf16.msra.mxu0 0
        %1526 = vmatprep.subr.bf16.mxu0 0
        %1527 = vmatpush1.bf16.msra.mxu0 0
        %1528 = vmatprep.subr.bf16.mxu0 0
        %1529 = vmatpush1.bf16.msra.mxu0 0
        %1530 = vmatprep.subr.bf16.mxu0 0
        %1531 = vmatpush1.bf16.msra.mxu0 0
        %1532 = vmatprep.subr.bf16.mxu0 0
        %1533 = vmatpush1.bf16.msra.mxu0 0
        %1534 = vmatprep.subr.bf16.mxu0 0
        %1535 = vmatpush1.bf16.msra.mxu0 0
        %1536 = vmatprep.subr.bf16.mxu0 0
        %1537 = vmatpush1.bf16.msra.mxu0 0
        %1538 = vmatprep.mubr.bf16.mxu0 0
        %1539 = vmatmul.mubr.bf16.gmra.mrb[0].mxu0 %v1501
        %v1540 = vpop.f32.mrb[0].mxu0
        %v1541 = vadd.f32 %v1495, %v1540
        %v1542 = vpop.f32.mrb[0].mxu0
        %v1543 = vpop.f32.mrb[0].mxu0
        %v1544 = vpop.f32.mrb[0].mxu0
        %1545 = vdwg.mxu0
        %1546 = vrot.lane.b32.xlu0 %v1143, 112
        %v1547 = vpop.permute.xlu0 %1546
        %1549 = vxpose.xlu0.b32.start [1/16] %v1547, 128
        %1550 = vxpose.xlu0.b32.cont [2/16] 0.0, 128
        %1551 = vxpose.xlu0.b32.cont [3/16] 0.0, 128
        %1552 = vxpose.xlu0.b32.cont [4/16] 0.0, 128
        %1553 = vxpose.xlu0.b32.cont [5/16] 0.0, 128
        %1554 = vxpose.xlu0.b32.cont [6/16] 0.0, 128
        %1555 = vxpose.xlu0.b32.cont [7/16] 0.0, 128
        %1556 = vxpose.xlu0.b32.cont [8/16] 0.0, 128
        %1557 = vxpose.xlu0.b32.cont [9/16] 0.0, 128
        %1558 = vxpose.xlu0.b32.cont [10/16] 0.0, 128
        %1559 = vxpose.xlu0.b32.cont [11/16] 0.0, 128
        %1560 = vxpose.xlu0.b32.cont [12/16] 0.0, 128
        %1561 = vxpose.xlu0.b32.cont [13/16] 0.0, 128
        %1562 = vxpose.xlu0.b32.cont [14/16] 0.0, 128
        %1563 = vxpose.xlu0.b32.cont [15/16] 0.0, 128
        %1564 = vxpose.xlu0.b32.end [16/16] 0.0, 128
        %v1565 = vpop.trf.xlu0
        %v1566 = vpop.trf.xlu0
        %v1567 = vpop.trf.xlu0
        %v1568 = vpop.trf.xlu0
        %v1569 = vpop.trf.xlu0
        %v1570 = vpop.trf.xlu0
        %v1571 = vpop.trf.xlu0
        %v1572 = vpop.trf.xlu0
        %v1573 = vpop.trf.xlu0
        %v1574 = vpop.trf.xlu0
        %v1575 = vpop.trf.xlu0
        %v1576 = vpop.trf.xlu0
        %v1577 = vpop.trf.xlu0
        %v1578 = vpop.trf.xlu0
        %v1579 = vpop.trf.xlu0
        %v1580 = vpop.trf.xlu0
        %v1581 = vpack.c.bf16 %v1565, %v1565
        %1582 = vrot.lane.b32.xlu0 %v1186, 112
        %v1583 = vpop.permute.xlu0 %1582
        %v1585 = vsel %vm1194, %v1583, 0
        %v1588 = vsel %vm1198, %v1581, 0
        %1590 = vmatprep.subr.bf16.mxu0 0
        %1591 = vmatpush1.bf16.msra.mxu0 %v1588
        %1592 = vmatprep.subr.bf16.mxu0 0
        %1593 = vmatpush1.bf16.msra.mxu0 0
        %1594 = vmatprep.subr.bf16.mxu0 0
        %1595 = vmatpush1.bf16.msra.mxu0 0
        %1596 = vmatprep.subr.bf16.mxu0 0
        %1597 = vmatpush1.bf16.msra.mxu0 0
        %1598 = vmatprep.subr.bf16.mxu0 0
        %1599 = vmatpush1.bf16.msra.mxu0 0
        %1600 = vmatprep.subr.bf16.mxu0 0
        %1601 = vmatpush1.bf16.msra.mxu0 0
        %1602 = vmatprep.subr.bf16.mxu0 0
        %1603 = vmatpush1.bf16.msra.mxu0 0
        %1604 = vmatprep.subr.bf16.mxu0 0
        %1605 = vmatpush1.bf16.msra.mxu0 0
        %1606 = vmatprep.subr.bf16.mxu0 0
        %1607 = vmatpush1.bf16.msra.mxu0 0
        %1608 = vmatprep.subr.bf16.mxu0 0
        %1609 = vmatpush1.bf16.msra.mxu0 0
        %1610 = vmatprep.subr.bf16.mxu0 0
        %1611 = vmatpush1.bf16.msra.mxu0 0
        %1612 = vmatprep.subr.bf16.mxu0 0
        %1613 = vmatpush1.bf16.msra.mxu0 0
        %1614 = vmatprep.subr.bf16.mxu0 0
        %1615 = vmatpush1.bf16.msra.mxu0 0
        %1616 = vmatprep.subr.bf16.mxu0 0
        %1617 = vmatpush1.bf16.msra.mxu0 0
        %1618 = vmatprep.subr.bf16.mxu0 0
        %1619 = vmatpush1.bf16.msra.mxu0 0
        %1620 = vmatprep.subr.bf16.mxu0 0
        %1621 = vmatpush1.bf16.msra.mxu0 0
        %1622 = vmatprep.mubr.bf16.mxu0 0
        %1623 = vmatmul.mubr.bf16.gmra.mrb[0].mxu0 %v1585
        %v1624 = vpop.f32.mrb[0].mxu0
        %v1625 = vadd.f32 %v1192, %v1624
        %v1626 = vpop.f32.mrb[0].mxu0
        %v1627 = vpop.f32.mrb[0].mxu0
        %v1628 = vpop.f32.mrb[0].mxu0
        %1629 = vdwg.mxu0
        %v1630 = vsel %vm1194, %v1625, -inf
        %1631 = vmax.xlane.f32.xlu0 %v1630
        %v1632 = vpop.xlane.xlu0 %1631
        %v1633 = vsub.f32 %v1625, %v1632
        %v1634 = vmul.f32 %v1633, 1.442695
        %v1635 = vpow.pop %v1634
        %v1636 = vsel %vm1194, %v1635, 0.0
        %1637 = vadd.xlane.f32.xlu0 %v1636
        %v1638 = vpop.xlane.xlu0 %1637
        %v1639 = vrcp.pop %v1638
        %v1640 = vmul.f32 %v1635, %v1639
        %v1641 = vpack.c.bf16 %v1640, %v1640
        %1642 = vrot.lane.b32.xlu0 %v1254, 80
        %v1643 = vpop.permute.xlu0 %1642
        %v1645 = vsel %vm1194, %v1641, 0
        %v1648 = vsel %vm1198, %v1643, 0
        %1650 = vmatprep.subr.bf16.mxu0 0
        %1651 = vmatpush1.bf16.msra.mxu0 %v1648
        %1652 = vmatprep.subr.bf16.mxu0 0
        %1653 = vmatpush1.bf16.msra.mxu0 0
        %1654 = vmatprep.subr.bf16.mxu0 0
        %1655 = vmatpush1.bf16.msra.mxu0 0
        %1656 = vmatprep.subr.bf16.mxu0 0
        %1657 = vmatpush1.bf16.msra.mxu0 0
        %1658 = vmatprep.subr.bf16.mxu0 0
        %1659 = vmatpush1.bf16.msra.mxu0 0
        %1660 = vmatprep.subr.bf16.mxu0 0
        %1661 = vmatpush1.bf16.msra.mxu0 0
        %1662 = vmatprep.subr.bf16.mxu0 0
        %1663 = vmatpush1.bf16.msra.mxu0 0
        %1664 = vmatprep.subr.bf16.mxu0 0
        %1665 = vmatpush1.bf16.msra.mxu0 0
        %1666 = vmatprep.subr.bf16.mxu0 0
        %1667 = vmatpush1.bf16.msra.mxu0 0
        %1668 = vmatprep.subr.bf16.mxu0 0
        %1669 = vmatpush1.bf16.msra.mxu0 0
        %1670 = vmatprep.subr.bf16.mxu0 0
        %1671 = vmatpush1.bf16.msra.mxu0 0
        %1672 = vmatprep.subr.bf16.mxu0 0
        %1673 = vmatpush1.bf16.msra.mxu0 0
        %1674 = vmatprep.subr.bf16.mxu0 0
        %1675 = vmatpush1.bf16.msra.mxu0 0
        %1676 = vmatprep.subr.bf16.mxu0 0
        %1677 = vmatpush1.bf16.msra.mxu0 0
        %1678 = vmatprep.subr.bf16.mxu0 0
        %1679 = vmatpush1.bf16.msra.mxu0 0
        %1680 = vmatprep.subr.bf16.mxu0 0
        %1681 = vmatpush1.bf16.msra.mxu0 0
        %1682 = vmatprep.mubr.bf16.mxu0 0
        %1683 = vmatmul.mubr.bf16.gmra.mrb[0].mxu0 %v1645
        %v1684 = vpop.f32.mrb[0].mxu0
        %v1685 = vadd.f32 0.0, %v1684
        %v1686 = vpop.f32.mrb[0].mxu0
        %v1687 = vpop.f32.mrb[0].mxu0
        %v1688 = vpop.f32.mrb[0].mxu0
        %1689 = vdwg.mxu0
        %v1690 = vpack.c.bf16 %v1685, %v1685
        %v1691 = vpack.c.bf16 %v1150, %v1150
        %v1693 = vsel %vm1194, %v1690, 0
        %v1696 = vsel %vm1198, %v1691, 0
        %1698 = vmatprep.subr.bf16.mxu0 0
        %1699 = vmatpush1.bf16.msra.mxu0 %v1696
        %1700 = vmatprep.subr.bf16.mxu0 0
        %1701 = vmatpush1.bf16.msra.mxu0 0
        %1702 = vmatprep.subr.bf16.mxu0 0
        %1703 = vmatpush1.bf16.msra.mxu0 0
        %1704 = vmatprep.subr.bf16.mxu0 0
        %1705 = vmatpush1.bf16.msra.mxu0 0
        %1706 = vmatprep.subr.bf16.mxu0 0
        %1707 = vmatpush1.bf16.msra.mxu0 0
        %1708 = vmatprep.subr.bf16.mxu0 0
        %1709 = vmatpush1.bf16.msra.mxu0 0
        %1710 = vmatprep.subr.bf16.mxu0 0
        %1711 = vmatpush1.bf16.msra.mxu0 0
        %1712 = vmatprep.subr.bf16.mxu0 0
        %1713 = vmatpush1.bf16.msra.mxu0 0
        %1714 = vmatprep.subr.bf16.mxu0 0
        %1715 = vmatpush1.bf16.msra.mxu0 0
        %1716 = vmatprep.subr.bf16.mxu0 0
        %1717 = vmatpush1.bf16.msra.mxu0 0
        %1718 = vmatprep.subr.bf16.mxu0 0
        %1719 = vmatpush1.bf16.msra.mxu0 0
        %1720 = vmatprep.subr.bf16.mxu0 0
        %1721 = vmatpush1.bf16.msra.mxu0 0
        %1722 = vmatprep.subr.bf16.mxu0 0
        %1723 = vmatpush1.bf16.msra.mxu0 0
        %1724 = vmatprep.subr.bf16.mxu0 0
        %1725 = vmatpush1.bf16.msra.mxu0 0
        %1726 = vmatprep.subr.bf16.mxu0 0
        %1727 = vmatpush1.bf16.msra.mxu0 0
        %1728 = vmatprep.subr.bf16.mxu0 0
        %1729 = vmatpush1.bf16.msra.mxu0 0
        %1730 = vmatprep.mubr.bf16.mxu0 0
        %1731 = vmatmul.mubr.bf16.gmra.mrb[0].mxu0 %v1693
        %v1732 = vpop.f32.mrb[0].mxu0
        %v1733 = vadd.f32 0.0, %v1732
        %v1734 = vpop.f32.mrb[0].mxu0
        %v1735 = vpop.f32.mrb[0].mxu0
        %v1736 = vpop.f32.mrb[0].mxu0
        %1737 = vdwg.mxu0
        %v1738 = vadd.f32 %v1541, %v1733
        %1739 = vrot.lane.b32.xlu0 %v1143, 104
        %v1740 = vpop.permute.xlu0 %1739
        %1742 = vxpose.xlu0.b32.start [1/16] %v1740, 128
        %1743 = vxpose.xlu0.b32.cont [2/16] 0.0, 128
        %1744 = vxpose.xlu0.b32.cont [3/16] 0.0, 128
        %1745 = vxpose.xlu0.b32.cont [4/16] 0.0, 128
        %1746 = vxpose.xlu0.b32.cont [5/16] 0.0, 128
        %1747 = vxpose.xlu0.b32.cont [6/16] 0.0, 128
        %1748 = vxpose.xlu0.b32.cont [7/16] 0.0, 128
        %1749 = vxpose.xlu0.b32.cont [8/16] 0.0, 128
        %1750 = vxpose.xlu0.b32.cont [9/16] 0.0, 128
        %1751 = vxpose.xlu0.b32.cont [10/16] 0.0, 128
        %1752 = vxpose.xlu0.b32.cont [11/16] 0.0, 128
        %1753 = vxpose.xlu0.b32.cont [12/16] 0.0, 128
        %1754 = vxpose.xlu0.b32.cont [13/16] 0.0, 128
        %1755 = vxpose.xlu0.b32.cont [14/16] 0.0, 128
        %1756 = vxpose.xlu0.b32.cont [15/16] 0.0, 128
        %1757 = vxpose.xlu0.b32.end [16/16] 0.0, 128
        %v1758 = vpop.trf.xlu0
        %v1759 = vpop.trf.xlu0
        %v1760 = vpop.trf.xlu0
        %v1761 = vpop.trf.xlu0
        %v1762 = vpop.trf.xlu0
        %v1763 = vpop.trf.xlu0
        %v1764 = vpop.trf.xlu0
        %v1765 = vpop.trf.xlu0
        %v1766 = vpop.trf.xlu0
        %v1767 = vpop.trf.xlu0
        %v1768 = vpop.trf.xlu0
        %v1769 = vpop.trf.xlu0
        %v1770 = vpop.trf.xlu0
        %v1771 = vpop.trf.xlu0
        %v1772 = vpop.trf.xlu0
        %v1773 = vpop.trf.xlu0
        %v1774 = vpack.c.bf16 %v1758, %v1758
        %1775 = vrot.lane.b32.xlu0 %v1186, 104
        %v1776 = vpop.permute.xlu0 %1775
        %v1778 = vsel %vm1194, %v1776, 0
        %v1781 = vsel %vm1198, %v1774, 0
        %1783 = vmatprep.subr.bf16.mxu0 0
        %1784 = vmatpush1.bf16.msra.mxu0 %v1781
        %1785 = vmatprep.subr.bf16.mxu0 0
        %1786 = vmatpush1.bf16.msra.mxu0 0
        %1787 = vmatprep.subr.bf16.mxu0 0
        %1788 = vmatpush1.bf16.msra.mxu0 0
        %1789 = vmatprep.subr.bf16.mxu0 0
        %1790 = vmatpush1.bf16.msra.mxu0 0
        %1791 = vmatprep.subr.bf16.mxu0 0
        %1792 = vmatpush1.bf16.msra.mxu0 0
        %1793 = vmatprep.subr.bf16.mxu0 0
        %1794 = vmatpush1.bf16.msra.mxu0 0
        %1795 = vmatprep.subr.bf16.mxu0 0
        %1796 = vmatpush1.bf16.msra.mxu0 0
        %1797 = vmatprep.subr.bf16.mxu0 0
        %1798 = vmatpush1.bf16.msra.mxu0 0
        %1799 = vmatprep.subr.bf16.mxu0 0
        %1800 = vmatpush1.bf16.msra.mxu0 0
        %1801 = vmatprep.subr.bf16.mxu0 0
        %1802 = vmatpush1.bf16.msra.mxu0 0
        %1803 = vmatprep.subr.bf16.mxu0 0
        %1804 = vmatpush1.bf16.msra.mxu0 0
        %1805 = vmatprep.subr.bf16.mxu0 0
        %1806 = vmatpush1.bf16.msra.mxu0 0
        %1807 = vmatprep.subr.bf16.mxu0 0
        %1808 = vmatpush1.bf16.msra.mxu0 0
        %1809 = vmatprep.subr.bf16.mxu0 0
        %1810 = vmatpush1.bf16.msra.mxu0 0
        %1811 = vmatprep.subr.bf16.mxu0 0
        %1812 = vmatpush1.bf16.msra.mxu0 0
        %1813 = vmatprep.subr.bf16.mxu0 0
        %1814 = vmatpush1.bf16.msra.mxu0 0
        %1815 = vmatprep.mubr.bf16.mxu0 0
        %1816 = vmatmul.mubr.bf16.gmra.mrb[0].mxu0 %v1778
        %v1817 = vpop.f32.mrb[0].mxu0
        %v1818 = vadd.f32 %v1192, %v1817
        %v1819 = vpop.f32.mrb[0].mxu0
        %v1820 = vpop.f32.mrb[0].mxu0
        %v1821 = vpop.f32.mrb[0].mxu0
        %1822 = vdwg.mxu0
        %v1823 = vsel %vm1194, %v1818, -inf
        %1824 = vmax.xlane.f32.xlu0 %v1823
        %v1825 = vpop.xlane.xlu0 %1824
        %v1826 = vsub.f32 %v1818, %v1825
        %v1827 = vmul.f32 %v1826, 1.442695
        %v1828 = vpow.pop %v1827
        %v1829 = vsel %vm1194, %v1828, 0.0
        %1830 = vadd.xlane.f32.xlu0 %v1829
        %v1831 = vpop.xlane.xlu0 %1830
        %v1832 = vrcp.pop %v1831
        %v1833 = vmul.f32 %v1828, %v1832
        %v1834 = vpack.c.bf16 %v1833, %v1833
        %1835 = vrot.lane.b32.xlu0 %v1254, 72
        %v1836 = vpop.permute.xlu0 %1835
        %v1838 = vsel %vm1194, %v1834, 0
        %v1841 = vsel %vm1198, %v1836, 0
        %1843 = vmatprep.subr.bf16.mxu0 0
        %1844 = vmatpush1.bf16.msra.mxu0 %v1841
        %1845 = vmatprep.subr.bf16.mxu0 0
        %1846 = vmatpush1.bf16.msra.mxu0 0
        %1847 = vmatprep.subr.bf16.mxu0 0
        %1848 = vmatpush1.bf16.msra.mxu0 0
        %1849 = vmatprep.subr.bf16.mxu0 0
        %1850 = vmatpush1.bf16.msra.mxu0 0
        %1851 = vmatprep.subr.bf16.mxu0 0
        %1852 = vmatpush1.bf16.msra.mxu0 0
        %1853 = vmatprep.subr.bf16.mxu0 0
        %1854 = vmatpush1.bf16.msra.mxu0 0
        %1855 = vmatprep.subr.bf16.mxu0 0
        %1856 = vmatpush1.bf16.msra.mxu0 0
        %1857 = vmatprep.subr.bf16.mxu0 0
        %1858 = vmatpush1.bf16.msra.mxu0 0
        %1859 = vmatprep.subr.bf16.mxu0 0
        %1860 = vmatpush1.bf16.msra.mxu0 0
        %1861 = vmatprep.subr.bf16.mxu0 0
        %1862 = vmatpush1.bf16.msra.mxu0 0
        %1863 = vmatprep.subr.bf16.mxu0 0
        %1864 = vmatpush1.bf16.msra.mxu0 0
        %1865 = vmatprep.subr.bf16.mxu0 0
        %1866 = vmatpush1.bf16.msra.mxu0 0
        %1867 = vmatprep.subr.bf16.mxu0 0
        %1868 = vmatpush1.bf16.msra.mxu0 0
        %1869 = vmatprep.subr.bf16.mxu0 0
        %1870 = vmatpush1.bf16.msra.mxu0 0
        %1871 = vmatprep.subr.bf16.mxu0 0
        %1872 = vmatpush1.bf16.msra.mxu0 0
        %1873 = vmatprep.subr.bf16.mxu0 0
        %1874 = vmatpush1.bf16.msra.mxu0 0
        %1875 = vmatprep.mubr.bf16.mxu0 0
        %1876 = vmatmul.mubr.bf16.gmra.mrb[0].mxu0 %v1838
        %v1877 = vpop.f32.mrb[0].mxu0
        %v1878 = vadd.f32 0.0, %v1877
        %v1879 = vpop.f32.mrb[0].mxu0
        %v1880 = vpop.f32.mrb[0].mxu0
        %v1881 = vpop.f32.mrb[0].mxu0
        %1882 = vdwg.mxu0
        %v1883 = vpack.c.bf16 %v1878, %v1878
        %v1884 = vpack.c.bf16 %v1151, %v1151
        %v1886 = vsel %vm1194, %v1883, 0
        %v1889 = vsel %vm1198, %v1884, 0
        %1891 = vmatprep.subr.bf16.mxu0 0
        %1892 = vmatpush1.bf16.msra.mxu0 %v1889
        %1893 = vmatprep.subr.bf16.mxu0 0
        %1894 = vmatpush1.bf16.msra.mxu0 0
        %1895 = vmatprep.subr.bf16.mxu0 0
        %1896 = vmatpush1.bf16.msra.mxu0 0
        %1897 = vmatprep.subr.bf16.mxu0 0
        %1898 = vmatpush1.bf16.msra.mxu0 0
        %1899 = vmatprep.subr.bf16.mxu0 0
        %1900 = vmatpush1.bf16.msra.mxu0 0
        %1901 = vmatprep.subr.bf16.mxu0 0
        %1902 = vmatpush1.bf16.msra.mxu0 0
        %1903 = vmatprep.subr.bf16.mxu0 0
        %1904 = vmatpush1.bf16.msra.mxu0 0
        %1905 = vmatprep.subr.bf16.mxu0 0
        %1906 = vmatpush1.bf16.msra.mxu0 0
        %1907 = vmatprep.subr.bf16.mxu0 0
        %1908 = vmatpush1.bf16.msra.mxu0 0
        %1909 = vmatprep.subr.bf16.mxu0 0
        %1910 = vmatpush1.bf16.msra.mxu0 0
        %1911 = vmatprep.subr.bf16.mxu0 0
        %1912 = vmatpush1.bf16.msra.mxu0 0
        %1913 = vmatprep.subr.bf16.mxu0 0
        %1914 = vmatpush1.bf16.msra.mxu0 0
        %1915 = vmatprep.subr.bf16.mxu0 0
        %1916 = vmatpush1.bf16.msra.mxu0 0
        %1917 = vmatprep.subr.bf16.mxu0 0
        %1918 = vmatpush1.bf16.msra.mxu0 0
        %1919 = vmatprep.subr.bf16.mxu0 0
        %1920 = vmatpush1.bf16.msra.mxu0 0
        %1921 = vmatprep.subr.bf16.mxu0 0
        %1922 = vmatpush1.bf16.msra.mxu0 0
        %1923 = vmatprep.mubr.bf16.mxu0 0
        %1924 = vmatmul.mubr.bf16.gmra.mrb[0].mxu0 %v1886
        %v1925 = vpop.f32.mrb[0].mxu0
        %v1926 = vadd.f32 0.0, %v1925
        %v1927 = vpop.f32.mrb[0].mxu0
        %v1928 = vpop.f32.mrb[0].mxu0
        %v1929 = vpop.f32.mrb[0].mxu0
        %1930 = vdwg.mxu0
        %v1931 = vadd.f32 %v1738, %v1926
        %v1933 = vlaneseq
        %v1934 = vshrl.u32 %v1933, 7
        %v1935 = vsub.s32 0, %v1934
        %v1936 = vrot.slane %v1152, %v1935
        %v1938 = vadd.f32 %v1931, %v1936
        %v1939 = vadd.f32 %v1938, %v1031
        %v1940 = vld [vmem:[#allocation6] sm:$0x1]
        %v1941 = vld [vmem:[#allocation7] sm:$0x1]
        %v1942 = vsel %vm1049, %v1939, 0.0
        %1943 = vadd.xlane.f32.xlu0 %v1942
        %v1944 = vpop.xlane.xlu0 %1943
        %v1945 = vrcp.pop 32.0
        %v1946 = vmul.f32 %v1944, %v1945
        %v1947 = vsub.f32 %v1939, %v1946
        %v1948 = vmul.f32 %v1947, %v1947
        %v1949 = vsel %vm1049, %v1948, 0.0
        %1950 = vadd.xlane.f32.xlu0 %v1949
        %v1951 = vpop.xlane.xlu0 %1950
        %v1952 = vmul.f32 %v1951, %v1945
        %v1953 = vadd.f32 %v1952, 1e-05
        %v1954 = vrsqrt.pop %v1953
        %v1955 = vmul.f32 %v1947, %v1954
        %v1957 = vlaneseq
        %v1958 = vshrl.u32 %v1957, 7
        %v1959 = vsub.s32 0, %v1958
        %v1960 = vrot.slane %v1940, %v1959
        %v1962 = vmul.f32 %v1955, %v1960
        %v1964 = vlaneseq
        %v1965 = vshrl.u32 %v1964, 7
        %v1966 = vsub.s32 0, %v1965
        %v1967 = vrot.slane %v1941, %v1966
        %v1969 = vadd.f32 %v1962, %v1967
        %v1970 = vld [vmem:[%s23] sm:$0xff]
        %v1971 = vld [vmem:[%s23 + $0x8] sm:$0xff]
        %v1972 = vld [vmem:[%s23 + $0x10] sm:$0xff]
        %v1973 = vld [vmem:[%s23 + $0x18] sm:$0xff]
        %v1974 = vpack.c.bf16 %v1969, %v1969
        %v1975 = vpack.c.bf16 %v1971, %v1970
        %v1976 = vpack.c.bf16 %v1973, %v1972
        %v1977 = vld [vmem:[#allocation9] sm:$0x1]
        %v1979 = vlaneseq
        %v1980 = vshrl.u32 %v1979, 7
        %v1981 = vsub.s32 0, %v1980
        %v1982 = vrot.slane %v1977, %v1981
        %v1985 = vsel %vm1049, %v1974, 0
        %1987 = vmatprep.subr.bf16.mxu0 0
        %1988 = vmatpush1.bf16.msra.mxu0 %v1975
        %1989 = vmatprep.subr.bf16.mxu0 0
        %1990 = vmatpush1.bf16.msra.mxu0 %v1976
        %1991 = vmatprep.subr.bf16.mxu0 0
        %1992 = vmatpush1.bf16.msra.mxu0 0
        %1993 = vmatprep.subr.bf16.mxu0 0
        %1994 = vmatpush1.bf16.msra.mxu0 0
        %1995 = vmatprep.subr.bf16.mxu0 0
        %1996 = vmatpush1.bf16.msra.mxu0 0
        %1997 = vmatprep.subr.bf16.mxu0 0
        %1998 = vmatpush1.bf16.msra.mxu0 0
        %1999 = vmatprep.subr.bf16.mxu0 0
        %2000 = vmatpush1.bf16.msra.mxu0 0
        %2001 = vmatprep.subr.bf16.mxu0 0
        %2002 = vmatpush1.bf16.msra.mxu0 0
        %2003 = vmatprep.subr.bf16.mxu0 0
        %2004 = vmatpush1.bf16.msra.mxu0 0
        %2005 = vmatprep.subr.bf16.mxu0 0
        %2006 = vmatpush1.bf16.msra.mxu0 0
        %2007 = vmatprep.subr.bf16.mxu0 0
        %2008 = vmatpush1.bf16.msra.mxu0 0
        %2009 = vmatprep.subr.bf16.mxu0 0
        %2010 = vmatpush1.bf16.msra.mxu0 0
        %2011 = vmatprep.subr.bf16.mxu0 0
        %2012 = vmatpush1.bf16.msra.mxu0 0
        %2013 = vmatprep.subr.bf16.mxu0 0
        %2014 = vmatpush1.bf16.msra.mxu0 0
        %2015 = vmatprep.subr.bf16.mxu0 0
        %2016 = vmatpush1.bf16.msra.mxu0 0
        %2017 = vmatprep.subr.bf16.mxu0 0
        %2018 = vmatpush1.bf16.msra.mxu0 0
        %2019 = vmatprep.mubr.bf16.mxu0 0
        %2020 = vmatmul.mubr.bf16.gmra.mrb[0].mxu0 %v1985
        %v2021 = vpop.f32.mrb[0].mxu0
        %v2022 = vadd.f32 %v1982, %v2021
        %v2023 = vpop.f32.mrb[0].mxu0
        %v2024 = vpop.f32.mrb[0].mxu0
        %v2025 = vpop.f32.mrb[0].mxu0
        %2026 = vdwg.mxu0
        %v2027 = vmax.f32 %v2022, 0.0
        %v2028 = vld [vmem:[%s27] sm:$0xff]
        %v2029 = vld [vmem:[%s27 + $0x8] sm:$0xff]
        %v2030 = vld [vmem:[%s27 + $0x10] sm:$0xff]
        %v2031 = vld [vmem:[%s27 + $0x18] sm:$0xff]
        %v2032 = vld [vmem:[%s27 + $0x20] sm:$0xff]
        %v2033 = vld [vmem:[%s27 + $0x28] sm:$0xff]
        %v2034 = vld [vmem:[%s27 + $0x30] sm:$0xff]
        %v2035 = vld [vmem:[%s27 + $0x38] sm:$0xff]
        %v2036 = vpack.c.bf16 %v2027, %v2027
        %v2037 = vpack.c.bf16 %v2029, %v2028
        %v2038 = vpack.c.bf16 %v2031, %v2030
        %v2039 = vpack.c.bf16 %v2033, %v2032
        %v2040 = vpack.c.bf16 %v2035, %v2034
        %v2041 = vld [vmem:[#allocation10] sm:$0x1]
        %v2043 = vlaneseq
        %v2044 = vshrl.u32 %v2043, 7
        %v2045 = vsub.s32 0, %v2044
        %v2046 = vrot.slane %v2041, %v2045
        %vm2048 = vcmask 523264
        %v2050 = vsel %vm2048, %v2036, 0
        %2052 = vmatprep.subr.bf16.mxu0 0
        %2053 = vmatpush1.bf16.msra.mxu0 %v2037
        %2054 = vmatprep.subr.bf16.mxu0 0
        %2055 = vmatpush1.bf16.msra.mxu0 %v2038
        %2056 = vmatprep.subr.bf16.mxu0 0
        %2057 = vmatpush1.bf16.msra.mxu0 %v2039
        %2058 = vmatprep.subr.bf16.mxu0 0
        %2059 = vmatpush1.bf16.msra.mxu0 %v2040
        %2060 = vmatprep.subr.bf16.mxu0 0
        %2061 = vmatpush1.bf16.msra.mxu0 0
        %2062 = vmatprep.subr.bf16.mxu0 0
        %2063 = vmatpush1.bf16.msra.mxu0 0
        %2064 = vmatprep.subr.bf16.mxu0 0
        %2065 = vmatpush1.bf16.msra.mxu0 0
        %2066 = vmatprep.subr.bf16.mxu0 0
        %2067 = vmatpush1.bf16.msra.mxu0 0
        %2068 = vmatprep.subr.bf16.mxu0 0
        %2069 = vmatpush1.bf16.msra.mxu0 0
        %2070 = vmatprep.subr.bf16.mxu0 0
        %2071 = vmatpush1.bf16.msra.mxu0 0
        %2072 = vmatprep.subr.bf16.mxu0 0
        %2073 = vmatpush1.bf16.msra.mxu0 0
        %2074 = vmatprep.subr.bf16.mxu0 0
        %2075 = vmatpush1.bf16.msra.mxu0 0
        %2076 = vmatprep.subr.bf16.mxu0 0
        %2077 = vmatpush1.bf16.msra.mxu0 0
        %2078 = vmatprep.subr.bf16.mxu0 0
        %2079 = vmatpush1.bf16.msra.mxu0 0
        %2080 = vmatprep.subr.bf16.mxu0 0
        %2081 = vmatpush1.bf16.msra.mxu0 0
        %2082 = vmatprep.subr.bf16.mxu0 0
        %2083 = vmatpush1.bf16.msra.mxu0 0
        %2084 = vmatprep.mubr.bf16.mxu0 0
        %2085 = vmatmul.mubr.bf16.gmra.mrb[0].mxu0 %v2050
        %v2086 = vpop.f32.mrb[0].mxu0
        %v2087 = vadd.f32 %v2046, %v2086
        %v2088 = vpop.f32.mrb[0].mxu0
        %v2089 = vpop.f32.mrb[0].mxu0
        %v2090 = vpop.f32.mrb[0].mxu0
        %2091 = vdwg.mxu0
        %v2092 = vadd.f32 %v2087, %v1969
        %v2093 = vld [vmem:[#allocation12] sm:$0x1]
        %v2094 = vld [vmem:[#allocation13] sm:$0x1]
        %v2095 = vsel %vm1049, %v2092, 0.0
        %2096 = vadd.xlane.f32.xlu0 %v2095
        %v2097 = vpop.xlane.xlu0 %2096
        %v2098 = vmul.f32 %v2097, %v1945
        %v2099 = vsub.f32 %v2092, %v2098
        %v2100 = vmul.f32 %v2099, %v2099
        %v2101 = vsel %vm1049, %v2100, 0.0
        %2102 = vadd.xlane.f32.xlu0 %v2101
        %v2103 = vpop.xlane.xlu0 %2102
        %v2104 = vmul.f32 %v2103, %v1945
        %v2105 = vadd.f32 %v2104, 1e-05
        %v2106 = vrsqrt.pop %v2105
        %v2107 = vmul.f32 %v2099, %v2106
        %v2109 = vlaneseq
        %v2110 = vshrl.u32 %v2109, 7
        %v2111 = vsub.s32 0, %v2110
        %v2112 = vrot.slane %v2093, %v2111
        %v2114 = vmul.f32 %v2107, %v2112
        %v2116 = vlaneseq
        %v2117 = vshrl.u32 %v2116, 7
        %v2118 = vsub.s32 0, %v2117
        %v2119 = vrot.slane %v2094, %v2118
        %v2121 = vadd.f32 %v2114, %v2119
        %v2122 = vld [vmem:[%s35] sm:$0xff]
        %v2123 = vld [vmem:[%s35 + $0x8] sm:$0xff]
        %v2124 = vld [vmem:[%s35 + $0x10] sm:$0xff]
        %v2125 = vld [vmem:[%s35 + $0x18] sm:$0xff]
        %v2126 = vpack.c.bf16 %v2121, %v2121
        %v2127 = vpack.c.bf16 %v2123, %v2122
        %v2128 = vpack.c.bf16 %v2125, %v2124
        %v2129 = vld [vmem:[%s37] sm:$0x1]
        %v2131 = vlaneseq
        %v2132 = vshrl.u32 %v2131, 7
        %v2133 = vsub.s32 0, %v2132
        %v2134 = vrot.slane %v2129, %v2133
        %v2137 = vsel %vm1049, %v2126, 0
        %2139 = vmatprep.subr.bf16.mxu0 0
        %2140 = vmatpush1.bf16.msra.mxu0 %v2127
        %2141 = vmatprep.subr.bf16.mxu0 0
        %2142 = vmatpush1.bf16.msra.mxu0 %v2128
        %2143 = vmatprep.subr.bf16.mxu0 0
        %2144 = vmatpush1.bf16.msra.mxu0 0
        %2145 = vmatprep.subr.bf16.mxu0 0
        %2146 = vmatpush1.bf16.msra.mxu0 0
        %2147 = vmatprep.subr.bf16.mxu0 0
        %2148 = vmatpush1.bf16.msra.mxu0 0
        %2149 = vmatprep.subr.bf16.mxu0 0
        %2150 = vmatpush1.bf16.msra.mxu0 0
        %2151 = vmatprep.subr.bf16.mxu0 0
        %2152 = vmatpush1.bf16.msra.mxu0 0
        %2153 = vmatprep.subr.bf16.mxu0 0
        %2154 = vmatpush1.bf16.msra.mxu0 0
        %2155 = vmatprep.subr.bf16.mxu0 0
        %2156 = vmatpush1.bf16.msra.mxu0 0
        %2157 = vmatprep.subr.bf16.mxu0 0
        %2158 = vmatpush1.bf16.msra.mxu0 0
        %2159 = vmatprep.subr.bf16.mxu0 0
        %2160 = vmatpush1.bf16.msra.mxu0 0
        %2161 = vmatprep.subr.bf16.mxu0 0
        %2162 = vmatpush1.bf16.msra.mxu0 0
        %2163 = vmatprep.subr.bf16.mxu0 0
        %2164 = vmatpush1.bf16.msra.mxu0 0
        %2165 = vmatprep.subr.bf16.mxu0 0
        %2166 = vmatpush1.bf16.msra.mxu0 0
        %2167 = vmatprep.subr.bf16.mxu0 0
        %2168 = vmatpush1.bf16.msra.mxu0 0
        %2169 = vmatprep.subr.bf16.mxu0 0
        %2170 = vmatpush1.bf16.msra.mxu0 0
        %2171 = vmatprep.mubr.bf16.mxu0 0
        %2172 = vmatmul.mubr.bf16.gmra.mrb[0].mxu0 %v2137
        %v2173 = vpop.f32.mrb[0].mxu0
        %v2174 = vadd.f32 %v2134, %v2173
        %v2175 = vpop.f32.mrb[0].mxu0
        %v2176 = vpop.f32.mrb[0].mxu0
        %v2177 = vpop.f32.mrb[0].mxu0
        %2178 = vdwg.mxu0
        %v2179 = vld [vmem:[%s39] sm:$0xff]
        %v2180 = vld [vmem:[%s39 + $0x8] sm:$0xff]
        %v2181 = vld [vmem:[%s39 + $0x10] sm:$0xff]
        %v2182 = vld [vmem:[%s39 + $0x18] sm:$0xff]
        %v2183 = vld [vmem:[%s41] sm:$0x1]
        %v2184 = vmul.f32 %v2174, 0.35355338
        %2186 = vrot.lane.b32.xlu0 %v2174, 96
        %v2187 = vpop.permute.xlu0 %2186
        %2189 = vxpose.xlu0.b32.start [1/16] %v2187, 128
        %2190 = vxpose.xlu0.b32.cont [2/16] 0.0, 128
        %2191 = vxpose.xlu0.b32.cont [3/16] 0.0, 128
        %2192 = vxpose.xlu0.b32.cont [4/16] 0.0, 128
        %2193 = vxpose.xlu0.b32.cont [5/16] 0.0, 128
        %2194 = vxpose.xlu0.b32.cont [6/16] 0.0, 128
        %2195 = vxpose.xlu0.b32.cont [7/16] 0.0, 128
        %2196 = vxpose.xlu0.b32.cont [8/16] 0.0, 128
        %2197 = vxpose.xlu0.b32.cont [9/16] 0.0, 128
        %2198 = vxpose.xlu0.b32.cont [10/16] 0.0, 128
        %2199 = vxpose.xlu0.b32.cont [11/16] 0.0, 128
        %2200 = vxpose.xlu0.b32.cont [12/16] 0.0, 128
        %2201 = vxpose.xlu0.b32.cont [13/16] 0.0, 128
        %2202 = vxpose.xlu0.b32.cont [14/16] 0.0, 128
        %2203 = vxpose.xlu0.b32.cont [15/16] 0.0, 128
        %2204 = vxpose.xlu0.b32.end [16/16] 0.0, 128
        %v2205 = vpop.trf.xlu0
        %v2206 = vpop.trf.xlu0
        %v2207 = vpop.trf.xlu0
        %v2208 = vpop.trf.xlu0
        %v2209 = vpop.trf.xlu0
        %v2210 = vpop.trf.xlu0
        %v2211 = vpop.trf.xlu0
        %v2212 = vpop.trf.xlu0
        %v2213 = vpop.trf.xlu0
        %v2214 = vpop.trf.xlu0
        %v2215 = vpop.trf.xlu0
        %v2216 = vpop.trf.xlu0
        %v2217 = vpop.trf.xlu0
        %v2218 = vpop.trf.xlu0
        %v2219 = vpop.trf.xlu0
        %v2220 = vpop.trf.xlu0
        %v2221 = vpack.c.bf16 %v2184, %v2184
        %v2222 = vpack.c.bf16 %v2205, %v2205
        %v2224 = vsel %vm1194, %v2221, 0
        %v2227 = vsel %vm1198, %v2222, 0
        %2229 = vmatprep.subr.bf16.mxu0 0
        %2230 = vmatpush1.bf16.msra.mxu0 %v2227
        %2231 = vmatprep.subr.bf16.mxu0 0
        %2232 = vmatpush1.bf16.msra.mxu0 0
        %2233 = vmatprep.subr.bf16.mxu0 0
        %2234 = vmatpush1.bf16.msra.mxu0 0
        %2235 = vmatprep.subr.bf16.mxu0 0
        %2236 = vmatpush1.bf16.msra.mxu0 0
        %2237 = vmatprep.subr.bf16.mxu0 0
        %2238 = vmatpush1.bf16.msra.mxu0 0
        %2239 = vmatprep.subr.bf16.mxu0 0
        %2240 = vmatpush1.bf16.msra.mxu0 0
        %2241 = vmatprep.subr.bf16.mxu0 0
        %2242 = vmatpush1.bf16.msra.mxu0 0
        %2243 = vmatprep.subr.bf16.mxu0 0
        %2244 = vmatpush1.bf16.msra.mxu0 0
        %2245 = vmatprep.subr.bf16.mxu0 0
        %2246 = vmatpush1.bf16.msra.mxu0 0
        %2247 = vmatprep.subr.bf16.mxu0 0
        %2248 = vmatpush1.bf16.msra.mxu0 0
        %2249 = vmatprep.subr.bf16.mxu0 0
        %2250 = vmatpush1.bf16.msra.mxu0 0
        %2251 = vmatprep.subr.bf16.mxu0 0
        %2252 = vmatpush1.bf16.msra.mxu0 0
        %2253 = vmatprep.subr.bf16.mxu0 0
        %2254 = vmatpush1.bf16.msra.mxu0 0
        %2255 = vmatprep.subr.bf16.mxu0 0
        %2256 = vmatpush1.bf16.msra.mxu0 0
        %2257 = vmatprep.subr.bf16.mxu0 0
        %2258 = vmatpush1.bf16.msra.mxu0 0
        %2259 = vmatprep.subr.bf16.mxu0 0
        %2260 = vmatpush1.bf16.msra.mxu0 0
        %2261 = vmatprep.mubr.bf16.mxu0 0
        %2262 = vmatmul.mubr.bf16.gmra.mrb[0].mxu0 %v2224
        %v2263 = vpop.f32.mrb[0].mxu0
        %v2264 = vadd.f32 0.0, %v2263
        %v2265 = vpop.f32.mrb[0].mxu0
        %v2266 = vpop.f32.mrb[0].mxu0
        %v2267 = vpop.f32.mrb[0].mxu0
        %2268 = vdwg.mxu0
        %v2269 = vsel %vm1194, %v2264, -inf
        %2270 = vmax.xlane.f32.xlu0 %v2269
        %v2271 = vpop.xlane.xlu0 %2270
        %v2272 = vsub.f32 %v2264, %v2271
        %v2273 = vmul.f32 %v2272, 1.442695
        %v2274 = vpow.pop %v2273
        %v2275 = vsel %vm1194, %v2274, 0.0
        %2276 = vadd.xlane.f32.xlu0 %v2275
        %v2277 = vpop.xlane.xlu0 %2276
        %v2278 = vrcp.pop %v2277
        %v2279 = vmul.f32 %v2274, %v2278
        %v2280 = vpack.c.bf16 %v2279, %v2279
        %v2281 = vpack.c.bf16 %v2174, %v2174
        %2283 = vrot.lane.b32.xlu0 %v2281, 64
        %v2284 = vpop.permute.xlu0 %2283
        %v2286 = vsel %vm1194, %v2280, 0
        %v2289 = vsel %vm1198, %v2284, 0
        %2291 = vmatprep.subr.bf16.mxu0 0
        %2292 = vmatpush1.bf16.msra.mxu0 %v2289
        %2293 = vmatprep.subr.bf16.mxu0 0
        %2294 = vmatpush1.bf16.msra.mxu0 0
        %2295 = vmatprep.subr.bf16.mxu0 0
        %2296 = vmatpush1.bf16.msra.mxu0 0
        %2297 = vmatprep.subr.bf16.mxu0 0
        %2298 = vmatpush1.bf16.msra.mxu0 0
        %2299 = vmatprep.subr.bf16.mxu0 0
        %2300 = vmatpush1.bf16.msra.mxu0 0
        %2301 = vmatprep.subr.bf16.mxu0 0
        %2302 = vmatpush1.bf16.msra.mxu0 0
        %2303 = vmatprep.subr.bf16.mxu0 0
        %2304 = vmatpush1.bf16.msra.mxu0 0
        %2305 = vmatprep.subr.bf16.mxu0 0
        %2306 = vmatpush1.bf16.msra.mxu0 0
        %2307 = vmatprep.subr.bf16.mxu0 0
        %2308 = vmatpush1.bf16.msra.mxu0 0
        %2309 = vmatprep.subr.bf16.mxu0 0
        %2310 = vmatpush1.bf16.msra.mxu0 0
        %2311 = vmatprep.subr.bf16.mxu0 0
        %2312 = vmatpush1.bf16.msra.mxu0 0
        %2313 = vmatprep.subr.bf16.mxu0 0
        %2314 = vmatpush1.bf16.msra.mxu0 0
        %2315 = vmatprep.subr.bf16.mxu0 0
        %2316 = vmatpush1.bf16.msra.mxu0 0
        %2317 = vmatprep.subr.bf16.mxu0 0
        %2318 = vmatpush1.bf16.msra.mxu0 0
        %2319 = vmatprep.subr.bf16.mxu0 0
        %2320 = vmatpush1.bf16.msra.mxu0 0
        %2321 = vmatprep.subr.bf16.mxu0 0
        %2322 = vmatpush1.bf16.msra.mxu0 0
        %2323 = vmatprep.mubr.bf16.mxu0 0
        %2324 = vmatmul.mubr.bf16.gmra.mrb[0].mxu0 %v2286
        %v2325 = vpop.f32.mrb[0].mxu0
        %v2326 = vadd.f32 0.0, %v2325
        %v2327 = vpop.f32.mrb[0].mxu0
        %v2328 = vpop.f32.mrb[0].mxu0
        %v2329 = vpop.f32.mrb[0].mxu0
        %2330 = vdwg.mxu0
        %v2331 = vpack.c.bf16 %v2326, %v2326
        %v2332 = vpack.c.bf16 %v2179, %v2179
        %2333 = vrot.lane.b32.xlu0 %v2174, 88
        %v2334 = vpop.permute.xlu0 %2333
        %2336 = vxpose.xlu0.b32.start [1/16] %v2334, 128
        %2337 = vxpose.xlu0.b32.cont [2/16] 0.0, 128
        %2338 = vxpose.xlu0.b32.cont [3/16] 0.0, 128
        %2339 = vxpose.xlu0.b32.cont [4/16] 0.0, 128
        %2340 = vxpose.xlu0.b32.cont [5/16] 0.0, 128
        %2341 = vxpose.xlu0.b32.cont [6/16] 0.0, 128
        %2342 = vxpose.xlu0.b32.cont [7/16] 0.0, 128
        %2343 = vxpose.xlu0.b32.cont [8/16] 0.0, 128
        %2344 = vxpose.xlu0.b32.cont [9/16] 0.0, 128
        %2345 = vxpose.xlu0.b32.cont [10/16] 0.0, 128
        %2346 = vxpose.xlu0.b32.cont [11/16] 0.0, 128
        %2347 = vxpose.xlu0.b32.cont [12/16] 0.0, 128
        %2348 = vxpose.xlu0.b32.cont [13/16] 0.0, 128
        %2349 = vxpose.xlu0.b32.cont [14/16] 0.0, 128
        %2350 = vxpose.xlu0.b32.cont [15/16] 0.0, 128
        %2351 = vxpose.xlu0.b32.end [16/16] 0.0, 128
        %v2352 = vpop.trf.xlu0
        %v2353 = vpop.trf.xlu0
        %v2354 = vpop.trf.xlu0
        %v2355 = vpop.trf.xlu0
        %v2356 = vpop.trf.xlu0
        %v2357 = vpop.trf.xlu0
        %v2358 = vpop.trf.xlu0
        %v2359 = vpop.trf.xlu0
        %v2360 = vpop.trf.xlu0
        %v2361 = vpop.trf.xlu0
        %v2362 = vpop.trf.xlu0
        %v2363 = vpop.trf.xlu0
        %v2364 = vpop.trf.xlu0
        %v2365 = vpop.trf.xlu0
        %v2366 = vpop.trf.xlu0
        %v2367 = vpop.trf.xlu0
        %v2368 = vpack.c.bf16 %v2352, %v2352
        %2370 = vrot.lane.b32.xlu0 %v2221, 120
        %v2371 = vpop.permute.xlu0 %2370
        %v2373 = vsel %vm1194, %v2371, 0
        %v2376 = vsel %vm1198, %v2368, 0
        %2378 = vmatprep.subr.bf16.mxu0 0
        %2379 = vmatpush1.bf16.msra.mxu0 %v2376
        %2380 = vmatprep.subr.bf16.mxu0 0
        %2381 = vmatpush1.bf16.msra.mxu0 0
        %2382 = vmatprep.subr.bf16.mxu0 0
        %2383 = vmatpush1.bf16.msra.mxu0 0
        %2384 = vmatprep.subr.bf16.mxu0 0
        %2385 = vmatpush1.bf16.msra.mxu0 0
        %2386 = vmatprep.subr.bf16.mxu0 0
        %2387 = vmatpush1.bf16.msra.mxu0 0
        %2388 = vmatprep.subr.bf16.mxu0 0
        %2389 = vmatpush1.bf16.msra.mxu0 0
        %2390 = vmatprep.subr.bf16.mxu0 0
        %2391 = vmatpush1.bf16.msra.mxu0 0
        %2392 = vmatprep.subr.bf16.mxu0 0
        %2393 = vmatpush1.bf16.msra.mxu0 0
        %2394 = vmatprep.subr.bf16.mxu0 0
        %2395 = vmatpush1.bf16.msra.mxu0 0
        %2396 = vmatprep.subr.bf16.mxu0 0
        %2397 = vmatpush1.bf16.msra.mxu0 0
        %2398 = vmatprep.subr.bf16.mxu0 0
        %2399 = vmatpush1.bf16.msra.mxu0 0
        %2400 = vmatprep.subr.bf16.mxu0 0
        %2401 = vmatpush1.bf16.msra.mxu0 0
        %2402 = vmatprep.subr.bf16.mxu0 0
        %2403 = vmatpush1.bf16.msra.mxu0 0
        %2404 = vmatprep.subr.bf16.mxu0 0
        %2405 = vmatpush1.bf16.msra.mxu0 0
        %2406 = vmatprep.subr.bf16.mxu0 0
        %2407 = vmatpush1.bf16.msra.mxu0 0
        %2408 = vmatprep.subr.bf16.mxu0 0
        %2409 = vmatpush1.bf16.msra.mxu0 0
        %2410 = vmatprep.mubr.bf16.mxu0 0
        %2411 = vmatmul.mubr.bf16.gmra.mrb[0].mxu0 %v2373
        %v2412 = vpop.f32.mrb[0].mxu0
        %v2413 = vadd.f32 0.0, %v2412
        %v2414 = vpop.f32.mrb[0].mxu0
        %v2415 = vpop.f32.mrb[0].mxu0
        %v2416 = vpop.f32.mrb[0].mxu0
        %2417 = vdwg.mxu0
        %v2418 = vsel %vm1194, %v2413, -inf
        %2419 = vmax.xlane.f32.xlu0 %v2418
        %v2420 = vpop.xlane.xlu0 %2419
        %v2421 = vsub.f32 %v2413, %v2420
        %v2422 = vmul.f32 %v2421, 1.442695
        %v2423 = vpow.pop %v2422
        %v2424 = vsel %vm1194, %v2423, 0.0
        %2425 = vadd.xlane.f32.xlu0 %v2424
        %v2426 = vpop.xlane.xlu0 %2425
        %v2427 = vrcp.pop %v2426
        %v2428 = vmul.f32 %v2423, %v2427
        %v2429 = vpack.c.bf16 %v2428, %v2428
        %2430 = vrot.lane.b32.xlu0 %v2281, 56
        %v2431 = vpop.permute.xlu0 %2430
        %v2433 = vsel %vm1194, %v2429, 0
        %v2436 = vsel %vm1198, %v2431, 0
        %2438 = vmatprep.subr.bf16.mxu0 0
        %2439 = vmatpush1.bf16.msra.mxu0 %v2436
        %2440 = vmatprep.subr.bf16.mxu0 0
        %2441 = vmatpush1.bf16.msra.mxu0 0
        %2442 = vmatprep.subr.bf16.mxu0 0
        %2443 = vmatpush1.bf16.msra.mxu0 0
        %2444 = vmatprep.subr.bf16.mxu0 0
        %2445 = vmatpush1.bf16.msra.mxu0 0
        %2446 = vmatprep.subr.bf16.mxu0 0
        %2447 = vmatpush1.bf16.msra.mxu0 0
        %2448 = vmatprep.subr.bf16.mxu0 0
        %2449 = vmatpush1.bf16.msra.mxu0 0
        %2450 = vmatprep.subr.bf16.mxu0 0
        %2451 = vmatpush1.bf16.msra.mxu0 0
        %2452 = vmatprep.subr.bf16.mxu0 0
        %2453 = vmatpush1.bf16.msra.mxu0 0
        %2454 = vmatprep.subr.bf16.mxu0 0
        %2455 = vmatpush1.bf16.msra.mxu0 0
        %2456 = vmatprep.subr.bf16.mxu0 0
        %2457 = vmatpush1.bf16.msra.mxu0 0
        %2458 = vmatprep.subr.bf16.mxu0 0
        %2459 = vmatpush1.bf16.msra.mxu0 0
        %2460 = vmatprep.subr.bf16.mxu0 0
        %2461 = vmatpush1.bf16.msra.mxu0 0
        %2462 = vmatprep.subr.bf16.mxu0 0
        %2463 = vmatpush1.bf16.msra.mxu0 0
        %2464 = vmatprep.subr.bf16.mxu0 0
        %2465 = vmatpush1.bf16.msra.mxu0 0
        %2466 = vmatprep.subr.bf16.mxu0 0
        %2467 = vmatpush1.bf16.msra.mxu0 0
        %2468 = vmatprep.subr.bf16.mxu0 0
        %2469 = vmatpush1.bf16.msra.mxu0 0
        %2470 = vmatprep.mubr.bf16.mxu0 0
        %2471 = vmatmul.mubr.bf16.gmra.mrb[0].mxu0 %v2433
        %v2472 = vpop.f32.mrb[0].mxu0
        %v2473 = vadd.f32 0.0, %v2472
        %v2474 = vpop.f32.mrb[0].mxu0
        %v2475 = vpop.f32.mrb[0].mxu0
        %v2476 = vpop.f32.mrb[0].mxu0
        %2477 = vdwg.mxu0
        %v2478 = vpack.c.bf16 %v2473, %v2473
        %v2479 = vpack.c.bf16 %v2180, %v2180
        %v2481 = vsel %vm1194, %v2478, 0
        %v2484 = vsel %vm1198, %v2479, 0
        %2486 = vmatprep.subr.bf16.mxu0 0
        %2487 = vmatpush1.bf16.msra.mxu0 %v2484
        %2488 = vmatprep.subr.bf16.mxu0 0
        %2489 = vmatpush1.bf16.msra.mxu0 0
        %2490 = vmatprep.subr.bf16.mxu0 0
        %2491 = vmatpush1.bf16.msra.mxu0 0
        %2492 = vmatprep.subr.bf16.mxu0 0
        %2493 = vmatpush1.bf16.msra.mxu0 0
        %2494 = vmatprep.subr.bf16.mxu0 0
        %2495 = vmatpush1.bf16.msra.mxu0 0
        %2496 = vmatprep.subr.bf16.mxu0 0
        %2497 = vmatpush1.bf16.msra.mxu0 0
        %2498 = vmatprep.subr.bf16.mxu0 0
        %2499 = vmatpush1.bf16.msra.mxu0 0
        %2500 = vmatprep.subr.bf16.mxu0 0
        %2501 = vmatpush1.bf16.msra.mxu0 0
        %2502 = vmatprep.subr.bf16.mxu0 0
        %2503 = vmatpush1.bf16.msra.mxu0 0
        %2504 = vmatprep.subr.bf16.mxu0 0
        %2505 = vmatpush1.bf16.msra.mxu0 0
        %2506 = vmatprep.subr.bf16.mxu0 0
        %2507 = vmatpush1.bf16.msra.mxu0 0
        %2508 = vmatprep.subr.bf16.mxu0 0
        %2509 = vmatpush1.bf16.msra.mxu0 0
        %2510 = vmatprep.subr.bf16.mxu0 0
        %2511 = vmatpush1.bf16.msra.mxu0 0
        %2512 = vmatprep.subr.bf16.mxu0 0
        %2513 = vmatpush1.bf16.msra.mxu0 0
        %2514 = vmatprep.subr.bf16.mxu0 0
        %2515 = vmatpush1.bf16.msra.mxu0 0
        %2516 = vmatprep.subr.bf16.mxu0 0
        %2517 = vmatpush1.bf16.msra.mxu0 0
        %2518 = vmatprep.mubr.bf16.mxu0 0
        %2519 = vmatmul.mubr.bf16.gmra.mrb[0].mxu0 %v2481
        %v2520 = vpop.f32.mrb[0].mxu0
        %v2521 = vadd.f32 0.0, %v2520
        %v2522 = vpop.f32.mrb[0].mxu0
        %v2523 = vpop.f32.mrb[0].mxu0
        %v2524 = vpop.f32.mrb[0].mxu0
        %2525 = vdwg.mxu0
        %v2527 = vsel %vm1194, %v2331, 0
        %v2530 = vsel %vm1198, %v2332, 0
        %2532 = vmatprep.subr.bf16.mxu0 0
        %2533 = vmatpush1.bf16.msra.mxu0 %v2530
        %2534 = vmatprep.subr.bf16.mxu0 0
        %2535 = vmatpush1.bf16.msra.mxu0 0
        %2536 = vmatprep.subr.bf16.mxu0 0
        %2537 = vmatpush1.bf16.msra.mxu0 0
        %2538 = vmatprep.subr.bf16.mxu0 0
        %2539 = vmatpush1.bf16.msra.mxu0 0
        %2540 = vmatprep.subr.bf16.mxu0 0
        %2541 = vmatpush1.bf16.msra.mxu0 0
        %2542 = vmatprep.subr.bf16.mxu0 0
        %2543 = vmatpush1.bf16.msra.mxu0 0
        %2544 = vmatprep.subr.bf16.mxu0 0
        %2545 = vmatpush1.bf16.msra.mxu0 0
        %2546 = vmatprep.subr.bf16.mxu0 0
        %2547 = vmatpush1.bf16.msra.mxu0 0
        %2548 = vmatprep.subr.bf16.mxu0 0
        %2549 = vmatpush1.bf16.msra.mxu0 0
        %2550 = vmatprep.subr.bf16.mxu0 0
        %2551 = vmatpush1.bf16.msra.mxu0 0
        %2552 = vmatprep.subr.bf16.mxu0 0
        %2553 = vmatpush1.bf16.msra.mxu0 0
        %2554 = vmatprep.subr.bf16.mxu0 0
        %2555 = vmatpush1.bf16.msra.mxu0 0
        %2556 = vmatprep.subr.bf16.mxu0 0
        %2557 = vmatpush1.bf16.msra.mxu0 0
        %2558 = vmatprep.subr.bf16.mxu0 0
        %2559 = vmatpush1.bf16.msra.mxu0 0
        %2560 = vmatprep.subr.bf16.mxu0 0
        %2561 = vmatpush1.bf16.msra.mxu0 0
        %2562 = vmatprep.subr.bf16.mxu0 0
        %2563 = vmatpush1.bf16.msra.mxu0 0
        %2564 = vmatprep.mubr.bf16.mxu0 0
        %2565 = vmatmul.mubr.bf16.gmra.mrb[0].mxu0 %v2527
        %v2566 = vpop.f32.mrb[0].mxu0
        %v2567 = vadd.f32 %v2521, %v2566
        %v2568 = vpop.f32.mrb[0].mxu0
        %v2569 = vpop.f32.mrb[0].mxu0
        %v2570 = vpop.f32.mrb[0].mxu0
        %2571 = vdwg.mxu0
        %2572 = vrot.lane.b32.xlu0 %v2174, 80
        %v2573 = vpop.permute.xlu0 %2572
        %2575 = vxpose.xlu0.b32.start [1/16] %v2573, 128
        %2576 = vxpose.xlu0.b32.cont [2/16] 0.0, 128
        %2577 = vxpose.xlu0.b32.cont [3/16] 0.0, 128
        %2578 = vxpose.xlu0.b32.cont [4/16] 0.0, 128
        %2579 = vxpose.xlu0.b32.cont [5/16] 0.0, 128
        %2580 = vxpose.xlu0.b32.cont [6/16] 0.0, 128
        %2581 = vxpose.xlu0.b32.cont [7/16] 0.0, 128
        %2582 = vxpose.xlu0.b32.cont [8/16] 0.0, 128
        %2583 = vxpose.xlu0.b32.cont [9/16] 0.0, 128
        %2584 = vxpose.xlu0.b32.cont [10/16] 0.0, 128
        %2585 = vxpose.xlu0.b32.cont [11/16] 0.0, 128
        %2586 = vxpose.xlu0.b32.cont [12/16] 0.0, 128
        %2587 = vxpose.xlu0.b32.cont [13/16] 0.0, 128
        %2588 = vxpose.xlu0.b32.cont [14/16] 0.0, 128
        %2589 = vxpose.xlu0.b32.cont [15/16] 0.0, 128
        %2590 = vxpose.xlu0.b32.end [16/16] 0.0, 128
        %v2591 = vpop.trf.xlu0
        %v2592 = vpop.trf.xlu0
        %v2593 = vpop.trf.xlu0
        %v2594 = vpop.trf.xlu0
        %v2595 = vpop.trf.xlu0
        %v2596 = vpop.trf.xlu0
        %v2597 = vpop.trf.xlu0
        %v2598 = vpop.trf.xlu0
        %v2599 = vpop.trf.xlu0
        %v2600 = vpop.trf.xlu0
        %v2601 = vpop.trf.xlu0
        %v2602 = vpop.trf.xlu0
        %v2603 = vpop.trf.xlu0
        %v2604 = vpop.trf.xlu0
        %v2605 = vpop.trf.xlu0
        %v2606 = vpop.trf.xlu0
        %v2607 = vpack.c.bf16 %v2591, %v2591
        %2608 = vrot.lane.b32.xlu0 %v2221, 112
        %v2609 = vpop.permute.xlu0 %2608
        %v2611 = vsel %vm1194, %v2609, 0
        %v2614 = vsel %vm1198, %v2607, 0
        %2616 = vmatprep.subr.bf16.mxu0 0
        %2617 = vmatpush1.bf16.msra.mxu0 %v2614
        %2618 = vmatprep.subr.bf16.mxu0 0
        %2619 = vmatpush1.bf16.msra.mxu0 0
        %2620 = vmatprep.subr.bf16.mxu0 0
        %2621 = vmatpush1.bf16.msra.mxu0 0
        %2622 = vmatprep.subr.bf16.mxu0 0
        %2623 = vmatpush1.bf16.msra.mxu0 0
        %2624 = vmatprep.subr.bf16.mxu0 0
        %2625 = vmatpush1.bf16.msra.mxu0 0
        %2626 = vmatprep.subr.bf16.mxu0 0
        %2627 = vmatpush1.bf16.msra.mxu0 0
        %2628 = vmatprep.subr.bf16.mxu0 0
        %2629 = vmatpush1.bf16.msra.mxu0 0
        %2630 = vmatprep.subr.bf16.mxu0 0
        %2631 = vmatpush1.bf16.msra.mxu0 0
        %2632 = vmatprep.subr.bf16.mxu0 0
        %2633 = vmatpush1.bf16.msra.mxu0 0
        %2634 = vmatprep.subr.bf16.mxu0 0
        %2635 = vmatpush1.bf16.msra.mxu0 0
        %2636 = vmatprep.subr.bf16.mxu0 0
        %2637 = vmatpush1.bf16.msra.mxu0 0
        %2638 = vmatprep.subr.bf16.mxu0 0
        %2639 = vmatpush1.bf16.msra.mxu0 0
        %2640 = vmatprep.subr.bf16.mxu0 0
        %2641 = vmatpush1.bf16.msra.mxu0 0
        %2642 = vmatprep.subr.bf16.mxu0 0
        %2643 = vmatpush1.bf16.msra.mxu0 0
        %2644 = vmatprep.subr.bf16.mxu0 0
        %2645 = vmatpush1.bf16.msra.mxu0 0
        %2646 = vmatprep.subr.bf16.mxu0 0
        %2647 = vmatpush1.bf16.msra.mxu0 0
        %2648 = vmatprep.mubr.bf16.mxu0 0
        %2649 = vmatmul.mubr.bf16.gmra.mrb[0].mxu0 %v2611
        %v2650 = vpop.f32.mrb[0].mxu0
        %v2651 = vadd.f32 0.0, %v2650
        %v2652 = vpop.f32.mrb[0].mxu0
        %v2653 = vpop.f32.mrb[0].mxu0
        %v2654 = vpop.f32.mrb[0].mxu0
        %2655 = vdwg.mxu0
        %v2656 = vsel %vm1194, %v2651, -inf
        %2657 = vmax.xlane.f32.xlu0 %v2656
        %v2658 = vpop.xlane.xlu0 %2657
        %v2659 = vsub.f32 %v2651, %v2658
        %v2660 = vmul.f32 %v2659, 1.442695
        %v2661 = vpow.pop %v2660
        %v2662 = vsel %vm1194, %v2661, 0.0
        %2663 = vadd.xlane.f32.xlu0 %v2662
        %v2664 = vpop.xlane.xlu0 %2663
        %v2665 = vrcp.pop %v2664
        %v2666 = vmul.f32 %v2661, %v2665
        %v2667 = vpack.c.bf16 %v2666, %v2666
        %2668 = vrot.lane.b32.xlu0 %v2281, 48
        %v2669 = vpop.permute.xlu0 %2668
        %v2671 = vsel %vm1194, %v2667, 0
        %v2674 = vsel %vm1198, %v2669, 0
        %2676 = vmatprep.subr.bf16.mxu0 0
        %2677 = vmatpush1.bf16.msra.mxu0 %v2674
        %2678 = vmatprep.subr.bf16.mxu0 0
        %2679 = vmatpush1.bf16.msra.mxu0 0
        %2680 = vmatprep.subr.bf16.mxu0 0
        %2681 = vmatpush1.bf16.msra.mxu0 0
        %2682 = vmatprep.subr.bf16.mxu0 0
        %2683 = vmatpush1.bf16.msra.mxu0 0
        %2684 = vmatprep.subr.bf16.mxu0 0
        %2685 = vmatpush1.bf16.msra.mxu0 0
        %2686 = vmatprep.subr.bf16.mxu0 0
        %2687 = vmatpush1.bf16.msra.mxu0 0
        %2688 = vmatprep.subr.bf16.mxu0 0
        %2689 = vmatpush1.bf16.msra.mxu0 0
        %2690 = vmatprep.subr.bf16.mxu0 0
        %2691 = vmatpush1.bf16.msra.mxu0 0
        %2692 = vmatprep.subr.bf16.mxu0 0
        %2693 = vmatpush1.bf16.msra.mxu0 0
        %2694 = vmatprep.subr.bf16.mxu0 0
        %2695 = vmatpush1.bf16.msra.mxu0 0
        %2696 = vmatprep.subr.bf16.mxu0 0
        %2697 = vmatpush1.bf16.msra.mxu0 0
        %2698 = vmatprep.subr.bf16.mxu0 0
        %2699 = vmatpush1.bf16.msra.mxu0 0
        %2700 = vmatprep.subr.bf16.mxu0 0
        %2701 = vmatpush1.bf16.msra.mxu0 0
        %2702 = vmatprep.subr.bf16.mxu0 0
        %2703 = vmatpush1.bf16.msra.mxu0 0
        %2704 = vmatprep.subr.bf16.mxu0 0
        %2705 = vmatpush1.bf16.msra.mxu0 0
        %2706 = vmatprep.subr.bf16.mxu0 0
        %2707 = vmatpush1.bf16.msra.mxu0 0
        %2708 = vmatprep.mubr.bf16.mxu0 0
        %2709 = vmatmul.mubr.bf16.gmra.mrb[0].mxu0 %v2671
        %v2710 = vpop.f32.mrb[0].mxu0
        %v2711 = vadd.f32 0.0, %v2710
        %v2712 = vpop.f32.mrb[0].mxu0
        %v2713 = vpop.f32.mrb[0].mxu0
        %v2714 = vpop.f32.mrb[0].mxu0
        %2715 = vdwg.mxu0
        %v2716 = vpack.c.bf16 %v2711, %v2711
        %v2717 = vpack.c.bf16 %v2181, %v2181
        %v2719 = vsel %vm1194, %v2716, 0
        %v2722 = vsel %vm1198, %v2717, 0
        %2724 = vmatprep.subr.bf16.mxu0 0
        %2725 = vmatpush1.bf16.msra.mxu0 %v2722
        %2726 = vmatprep.subr.bf16.mxu0 0
        %2727 = vmatpush1.bf16.msra.mxu0 0
        %2728 = vmatprep.subr.bf16.mxu0 0
        %2729 = vmatpush1.bf16.msra.mxu0 0
        %2730 = vmatprep.subr.bf16.mxu0 0
        %2731 = vmatpush1.bf16.msra.mxu0 0
        %2732 = vmatprep.subr.bf16.mxu0 0
        %2733 = vmatpush1.bf16.msra.mxu0 0
        %2734 = vmatprep.subr.bf16.mxu0 0
        %2735 = vmatpush1.bf16.msra.mxu0 0
        %2736 = vmatprep.subr.bf16.mxu0 0
        %2737 = vmatpush1.bf16.msra.mxu0 0
        %2738 = vmatprep.subr.bf16.mxu0 0
        %2739 = vmatpush1.bf16.msra.mxu0 0
        %2740 = vmatprep.subr.bf16.mxu0 0
        %2741 = vmatpush1.bf16.msra.mxu0 0
        %2742 = vmatprep.subr.bf16.mxu0 0
        %2743 = vmatpush1.bf16.msra.mxu0 0
        %2744 = vmatprep.subr.bf16.mxu0 0
        %2745 = vmatpush1.bf16.msra.mxu0 0
        %2746 = vmatprep.subr.bf16.mxu0 0
        %2747 = vmatpush1.bf16.msra.mxu0 0
        %2748 = vmatprep.subr.bf16.mxu0 0
        %2749 = vmatpush1.bf16.msra.mxu0 0
        %2750 = vmatprep.subr.bf16.mxu0 0
        %2751 = vmatpush1.bf16.msra.mxu0 0
        %2752 = vmatprep.subr.bf16.mxu0 0
        %2753 = vmatpush1.bf16.msra.mxu0 0
        %2754 = vmatprep.subr.bf16.mxu0 0
        %2755 = vmatpush1.bf16.msra.mxu0 0
        %2756 = vmatprep.mubr.bf16.mxu0 0
        %2757 = vmatmul.mubr.bf16.gmra.mrb[0].mxu0 %v2719
        %v2758 = vpop.f32.mrb[0].mxu0
        %v2759 = vadd.f32 0.0, %v2758
        %v2760 = vpop.f32.mrb[0].mxu0
        %v2761 = vpop.f32.mrb[0].mxu0
        %v2762 = vpop.f32.mrb[0].mxu0
        %2763 = vdwg.mxu0
        %v2764 = vadd.f32 %v2567, %v2759
        %2765 = vrot.lane.b32.xlu0 %v2174, 72
        %v2766 = vpop.permute.xlu0 %2765
        %2768 = vxpose.xlu0.b32.start [1/16] %v2766, 128
        %2769 = vxpose.xlu0.b32.cont [2/16] 0.0, 128
        %2770 = vxpose.xlu0.b32.cont [3/16] 0.0, 128
        %2771 = vxpose.xlu0.b32.cont [4/16] 0.0, 128
        %2772 = vxpose.xlu0.b32.cont [5/16] 0.0, 128
        %2773 = vxpose.xlu0.b32.cont [6/16] 0.0, 128
        %2774 = vxpose.xlu0.b32.cont [7/16] 0.0, 128
        %2775 = vxpose.xlu0.b32.cont [8/16] 0.0, 128
        %2776 = vxpose.xlu0.b32.cont [9/16] 0.0, 128
        %2777 = vxpose.xlu0.b32.cont [10/16] 0.0, 128
        %2778 = vxpose.xlu0.b32.cont [11/16] 0.0, 128
        %2779 = vxpose.xlu0.b32.cont [12/16] 0.0, 128
        %2780 = vxpose.xlu0.b32.cont [13/16] 0.0, 128
        %2781 = vxpose.xlu0.b32.cont [14/16] 0.0, 128
        %2782 = vxpose.xlu0.b32.cont [15/16] 0.0, 128
        %2783 = vxpose.xlu0.b32.end [16/16] 0.0, 128
        %v2784 = vpop.trf.xlu0
        %v2785 = vpop.trf.xlu0
        %v2786 = vpop.trf.xlu0
        %v2787 = vpop.trf.xlu0
        %v2788 = vpop.trf.xlu0
        %v2789 = vpop.trf.xlu0
        %v2790 = vpop.trf.xlu0
        %v2791 = vpop.trf.xlu0
        %v2792 = vpop.trf.xlu0
        %v2793 = vpop.trf.xlu0
        %v2794 = vpop.trf.xlu0
        %v2795 = vpop.trf.xlu0
        %v2796 = vpop.trf.xlu0
        %v2797 = vpop.trf.xlu0
        %v2798 = vpop.trf.xlu0
        %v2799 = vpop.trf.xlu0
        %v2800 = vpack.c.bf16 %v2784, %v2784
        %2801 = vrot.lane.b32.xlu0 %v2221, 104
        %v2802 = vpop.permute.xlu0 %2801
        %v2804 = vsel %vm1194, %v2802, 0
        %v2807 = vsel %vm1198, %v2800, 0
        %2809 = vmatprep.subr.bf16.mxu0 0
        %2810 = vmatpush1.bf16.msra.mxu0 %v2807
        %2811 = vmatprep.subr.bf16.mxu0 0
        %2812 = vmatpush1.bf16.msra.mxu0 0
        %2813 = vmatprep.subr.bf16.mxu0 0
        %2814 = vmatpush1.bf16.msra.mxu0 0
        %2815 = vmatprep.subr.bf16.mxu0 0
        %2816 = vmatpush1.bf16.msra.mxu0 0
        %2817 = vmatprep.subr.bf16.mxu0 0
        %2818 = vmatpush1.bf16.msra.mxu0 0
        %2819 = vmatprep.subr.bf16.mxu0 0
        %2820 = vmatpush1.bf16.msra.mxu0 0
        %2821 = vmatprep.subr.bf16.mxu0 0
        %2822 = vmatpush1.bf16.msra.mxu0 0
        %2823 = vmatprep.subr.bf16.mxu0 0
        %2824 = vmatpush1.bf16.msra.mxu0 0
        %2825 = vmatprep.subr.bf16.mxu0 0
        %2826 = vmatpush1.bf16.msra.mxu0 0
        %2827 = vmatprep.subr.bf16.mxu0 0
        %2828 = vmatpush1.bf16.msra.mxu0 0
        %2829 = vmatprep.subr.bf16.mxu0 0
        %2830 = vmatpush1.bf16.msra.mxu0 0
        %2831 = vmatprep.subr.bf16.mxu0 0
        %2832 = vmatpush1.bf16.msra.mxu0 0
        %2833 = vmatprep.subr.bf16.mxu0 0
        %2834 = vmatpush1.bf16.msra.mxu0 0
        %2835 = vmatprep.subr.bf16.mxu0 0
        %2836 = vmatpush1.bf16.msra.mxu0 0
        %2837 = vmatprep.subr.bf16.mxu0 0
        %2838 = vmatpush1.bf16.msra.mxu0 0
        %2839 = vmatprep.subr.bf16.mxu0 0
        %2840 = vmatpush1.bf16.msra.mxu0 0
        %2841 = vmatprep.mubr.bf16.mxu0 0
        %2842 = vmatmul.mubr.bf16.gmra.mrb[0].mxu0 %v2804
        %v2843 = vpop.f32.mrb[0].mxu0
        %v2844 = vadd.f32 0.0, %v2843
        %v2845 = vpop.f32.mrb[0].mxu0
        %v2846 = vpop.f32.mrb[0].mxu0
        %v2847 = vpop.f32.mrb[0].mxu0
        %2848 = vdwg.mxu0
        %v2849 = vsel %vm1194, %v2844, -inf
        %2850 = vmax.xlane.f32.xlu0 %v2849
        %v2851 = vpop.xlane.xlu0 %2850
        %v2852 = vsub.f32 %v2844, %v2851
        %v2853 = vmul.f32 %v2852, 1.442695
        %v2854 = vpow.pop %v2853
        %v2855 = vsel %vm1194, %v2854, 0.0
        %2856 = vadd.xlane.f32.xlu0 %v2855
        %v2857 = vpop.xlane.xlu0 %2856
        %v2858 = vrcp.pop %v2857
        %v2859 = vmul.f32 %v2854, %v2858
        %v2860 = vpack.c.bf16 %v2859, %v2859
        %2861 = vrot.lane.b32.xlu0 %v2281, 40
        %v2862 = vpop.permute.xlu0 %2861
        %v2864 = vsel %vm1194, %v2860, 0
        %v2867 = vsel %vm1198, %v2862, 0
        %2869 = vmatprep.subr.bf16.mxu0 0
        %2870 = vmatpush1.bf16.msra.mxu0 %v2867
        %2871 = vmatprep.subr.bf16.mxu0 0
        %2872 = vmatpush1.bf16.msra.mxu0 0
        %2873 = vmatprep.subr.bf16.mxu0 0
        %2874 = vmatpush1.bf16.msra.mxu0 0
        %2875 = vmatprep.subr.bf16.mxu0 0
        %2876 = vmatpush1.bf16.msra.mxu0 0
        %2877 = vmatprep.subr.bf16.mxu0 0
        %2878 = vmatpush1.bf16.msra.mxu0 0
        %2879 = vmatprep.subr.bf16.mxu0 0
        %2880 = vmatpush1.bf16.msra.mxu0 0
        %2881 = vmatprep.subr.bf16.mxu0 0
        %2882 = vmatpush1.bf16.msra.mxu0 0
        %2883 = vmatprep.subr.bf16.mxu0 0
        %2884 = vmatpush1.bf16.msra.mxu0 0
        %2885 = vmatprep.subr.bf16.mxu0 0
        %2886 = vmatpush1.bf16.msra.mxu0 0
        %2887 = vmatprep.subr.bf16.mxu0 0
        %2888 = vmatpush1.bf16.msra.mxu0 0
        %2889 = vmatprep.subr.bf16.mxu0 0
        %2890 = vmatpush1.bf16.msra.mxu0 0
        %2891 = vmatprep.subr.bf16.mxu0 0
        %2892 = vmatpush1.bf16.msra.mxu0 0
        %2893 = vmatprep.subr.bf16.mxu0 0
        %2894 = vmatpush1.bf16.msra.mxu0 0
        %2895 = vmatprep.subr.bf16.mxu0 0
        %2896 = vmatpush1.bf16.msra.mxu0 0
        %2897 = vmatprep.subr.bf16.mxu0 0
        %2898 = vmatpush1.bf16.msra.mxu0 0
        %2899 = vmatprep.subr.bf16.mxu0 0
        %2900 = vmatpush1.bf16.msra.mxu0 0
        %2901 = vmatprep.mubr.bf16.mxu0 0
        %2902 = vmatmul.mubr.bf16.gmra.mrb[0].mxu0 %v2864
        %v2903 = vpop.f32.mrb[0].mxu0
        %v2904 = vadd.f32 0.0, %v2903
        %v2905 = vpop.f32.mrb[0].mxu0
        %v2906 = vpop.f32.mrb[0].mxu0
        %v2907 = vpop.f32.mrb[0].mxu0
        %2908 = vdwg.mxu0
        %v2909 = vpack.c.bf16 %v2904, %v2904
        %v2910 = vpack.c.bf16 %v2182, %v2182
        %v2912 = vsel %vm1194, %v2909, 0
        %v2915 = vsel %vm1198, %v2910, 0
        %2917 = vmatprep.subr.bf16.mxu0 0
        %2918 = vmatpush1.bf16.msra.mxu0 %v2915
        %2919 = vmatprep.subr.bf16.mxu0 0
        %2920 = vmatpush1.bf16.msra.mxu0 0
        %2921 = vmatprep.subr.bf16.mxu0 0
        %2922 = vmatpush1.bf16.msra.mxu0 0
        %2923 = vmatprep.subr.bf16.mxu0 0
        %2924 = vmatpush1.bf16.msra.mxu0 0
        %2925 = vmatprep.subr.bf16.mxu0 0
        %2926 = vmatpush1.bf16.msra.mxu0 0
        %2927 = vmatprep.subr.bf16.mxu0 0
        %2928 = vmatpush1.bf16.msra.mxu0 0
        %2929 = vmatprep.subr.bf16.mxu0 0
        %2930 = vmatpush1.bf16.msra.mxu0 0
        %2931 = vmatprep.subr.bf16.mxu0 0
        %2932 = vmatpush1.bf16.msra.mxu0 0
        %2933 = vmatprep.subr.bf16.mxu0 0
        %2934 = vmatpush1.bf16.msra.mxu0 0
        %2935 = vmatprep.subr.bf16.mxu0 0
        %2936 = vmatpush1.bf16.msra.mxu0 0
        %2937 = vmatprep.subr.bf16.mxu0 0
        %2938 = vmatpush1.bf16.msra.mxu0 0
        %2939 = vmatprep.subr.bf16.mxu0 0
        %2940 = vmatpush1.bf16.msra.mxu0 0
        %2941 = vmatprep.subr.bf16.mxu0 0
        %2942 = vmatpush1.bf16.msra.mxu0 0
        %2943 = vmatprep.subr.bf16.mxu0 0
        %2944 = vmatpush1.bf16.msra.mxu0 0
        %2945 = vmatprep.subr.bf16.mxu0 0
        %2946 = vmatpush1.bf16.msra.mxu0 0
        %2947 = vmatprep.subr.bf16.mxu0 0
        %2948 = vmatpush1.bf16.msra.mxu0 0
        %2949 = vmatprep.mubr.bf16.mxu0 0
        %2950 = vmatmul.mubr.bf16.gmra.mrb[0].mxu0 %v2912
        %v2951 = vpop.f32.mrb[0].mxu0
        %v2952 = vadd.f32 0.0, %v2951
        %v2953 = vpop.f32.mrb[0].mxu0
        %v2954 = vpop.f32.mrb[0].mxu0
        %v2955 = vpop.f32.mrb[0].mxu0
        %2956 = vdwg.mxu0
        %v2957 = vadd.f32 %v2764, %v2952
        %v2959 = vlaneseq
        %v2960 = vshrl.u32 %v2959, 7
        %v2961 = vsub.s32 0, %v2960
        %v2962 = vrot.slane %v2183, %v2961
        %v2964 = vadd.f32 %v2957, %v2962
        %v2965 = vadd.f32 %v2964, %v2121
        %v2966 = vld [vmem:[%s43] sm:$0x1]
        %v2967 = vld [vmem:[%s45] sm:$0x1]
        %v2968 = vsel %vm1049, %v2965, 0.0
        %2969 = vadd.xlane.f32.xlu0 %v2968
        %v2970 = vpop.xlane.xlu0 %2969
        %v2971 = vmul.f32 %v2970, %v1945
        %v2972 = vsub.f32 %v2965, %v2971
        %v2973 = vmul.f32 %v2972, %v2972
        %v2974 = vsel %vm1049, %v2973, 0.0
        %2975 = vadd.xlane.f32.xlu0 %v2974
        %v2976 = vpop.xlane.xlu0 %2975
        %v2977 = vmul.f32 %v2976, %v1945
        %v2978 = vadd.f32 %v2977, 1e-05
        %v2979 = vrsqrt.pop %v2978
        %v2980 = vmul.f32 %v2972, %v2979
        %v2982 = vlaneseq
        %v2983 = vshrl.u32 %v2982, 7
        %v2984 = vsub.s32 0, %v2983
        %v2985 = vrot.slane %v2966, %v2984
        %v2987 = vmul.f32 %v2980, %v2985
        %v2989 = vlaneseq
        %v2990 = vshrl.u32 %v2989, 7
        %v2991 = vsub.s32 0, %v2990
        %v2992 = vrot.slane %v2967, %v2991
        %v2994 = vadd.f32 %v2987, %v2992
        %v2995 = vld [vmem:[%s47] sm:$0xff]
        %v2996 = vld [vmem:[%s47 + $0x8] sm:$0xff]
        %v2997 = vld [vmem:[%s47 + $0x10] sm:$0xff]
        %v2998 = vld [vmem:[%s47 + $0x18] sm:$0xff]
        %v2999 = vpack.c.bf16 %v2994, %v2994
        %v3000 = vpack.c.bf16 %v2996, %v2995
        %v3001 = vpack.c.bf16 %v2998, %v2997
        %v3002 = vld [vmem:[%s49] sm:$0x1]
        %v3004 = vlaneseq
        %v3005 = vshrl.u32 %v3004, 7
        %v3006 = vsub.s32 0, %v3005
        %v3007 = vrot.slane %v3002, %v3006
        %v3010 = vsel %vm1049, %v2999, 0
        %3012 = vmatprep.subr.bf16.mxu0 0
        %3013 = vmatpush1.bf16.msra.mxu0 %v3000
        %3014 = vmatprep.subr.bf16.mxu0 0
        %3015 = vmatpush1.bf16.msra.mxu0 %v3001
        %3016 = vmatprep.subr.bf16.mxu0 0
        %3017 = vmatpush1.bf16.msra.mxu0 0
        %3018 = vmatprep.subr.bf16.mxu0 0
        %3019 = vmatpush1.bf16.msra.mxu0 0
        %3020 = vmatprep.subr.bf16.mxu0 0
        %3021 = vmatpush1.bf16.msra.mxu0 0
        %3022 = vmatprep.subr.bf16.mxu0 0
        %3023 = vmatpush1.bf16.msra.mxu0 0
        %3024 = vmatprep.subr.bf16.mxu0 0
        %3025 = vmatpush1.bf16.msra.mxu0 0
        %3026 = vmatprep.subr.bf16.mxu0 0
        %3027 = vmatpush1.bf16.msra.mxu0 0
        %3028 = vmatprep.subr.bf16.mxu0 0
        %3029 = vmatpush1.bf16.msra.mxu0 0
        %3030 = vmatprep.subr.bf16.mxu0 0
        %3031 = vmatpush1.bf16.msra.mxu0 0
        %3032 = vmatprep.subr.bf16.mxu0 0
        %3033 = vmatpush1.bf16.msra.mxu0 0
        %3034 = vmatprep.subr.bf16.mxu0 0
        %3035 = vmatpush1.bf16.msra.mxu0 0
        %3036 = vmatprep.subr.bf16.mxu0 0
        %3037 = vmatpush1.bf16.msra.mxu0 0
        %3038 = vmatprep.subr.bf16.mxu0 0
        %3039 = vmatpush1.bf16.msra.mxu0 0
        %3040 = vmatprep.subr.bf16.mxu0 0
        %3041 = vmatpush1.bf16.msra.mxu0 0
        %3042 = vmatprep.subr.bf16.mxu0 0
        %3043 = vmatpush1.bf16.msra.mxu0 0
        %3044 = vmatprep.mubr.bf16.mxu0 0
        %3045 = vmatmul.mubr.bf16.gmra.mrb[0].mxu0 %v3010
        %v3046 = vpop.f32.mrb[0].mxu0
        %v3047 = vadd.f32 %v3007, %v3046
        %v3048 = vpop.f32.mrb[0].mxu0
        %v3049 = vpop.f32.mrb[0].mxu0
        %v3050 = vpop.f32.mrb[0].mxu0
        %3051 = vdwg.mxu0
        %v3052 = vmax.f32 %v3047, 0.0
        %v3053 = vld [vmem:[%s51] sm:$0xff]
        %v3054 = vld [vmem:[%s51 + $0x8] sm:$0xff]
        %v3055 = vld [vmem:[%s51 + $0x10] sm:$0xff]
        %v3056 = vld [vmem:[%s51 + $0x18] sm:$0xff]
        %v3057 = vld [vmem:[%s51 + $0x20] sm:$0xff]
        %v3058 = vld [vmem:[%s51 + $0x28] sm:$0xff]
        %v3059 = vld [vmem:[%s51 + $0x30] sm:$0xff]
        %v3060 = vld [vmem:[%s51 + $0x38] sm:$0xff]
        %v3061 = vpack.c.bf16 %v3052, %v3052
        %v3062 = vpack.c.bf16 %v3054, %v3053
        %v3063 = vpack.c.bf16 %v3056, %v3055
        %v3064 = vpack.c.bf16 %v3058, %v3057
        %v3065 = vpack.c.bf16 %v3060, %v3059
        %v3066 = vld [vmem:[%s53] sm:$0x1]
        %v3068 = vlaneseq
        %v3069 = vshrl.u32 %v3068, 7
        %v3070 = vsub.s32 0, %v3069
        %v3071 = vrot.slane %v3066, %v3070
        %v3074 = vsel %vm2048, %v3061, 0
        %3076 = vmatprep.subr.bf16.mxu0 0
        %3077 = vmatpush1.bf16.msra.mxu0 %v3062
        %3078 = vmatprep.subr.bf16.mxu0 0
        %3079 = vmatpush1.bf16.msra.mxu0 %v3063
        %3080 = vmatprep.subr.bf16.mxu0 0
        %3081 = vmatpush1.bf16.msra.mxu0 %v3064
        %3082 = vmatprep.subr.bf16.mxu0 0
        %3083 = vmatpush1.bf16.msra.mxu0 %v3065
        %3084 = vmatprep.subr.bf16.mxu0 0
        %3085 = vmatpush1.bf16.msra.mxu0 0
        %3086 = vmatprep.subr.bf16.mxu0 0
        %3087 = vmatpush1.bf16.msra.mxu0 0
        %3088 = vmatprep.subr.bf16.mxu0 0
        %3089 = vmatpush1.bf16.msra.mxu0 0
        %3090 = vmatprep.subr.bf16.mxu0 0
        %3091 = vmatpush1.bf16.msra.mxu0 0
        %3092 = vmatprep.subr.bf16.mxu0 0
        %3093 = vmatpush1.bf16.msra.mxu0 0
        %3094 = vmatprep.subr.bf16.mxu0 0
        %3095 = vmatpush1.bf16.msra.mxu0 0
        %3096 = vmatprep.subr.bf16.mxu0 0
        %3097 = vmatpush1.bf16.msra.mxu0 0
        %3098 = vmatprep.subr.bf16.mxu0 0
        %3099 = vmatpush1.bf16.msra.mxu0 0
        %3100 = vmatprep.subr.bf16.mxu0 0
        %3101 = vmatpush1.bf16.msra.mxu0 0
        %3102 = vmatprep.subr.bf16.mxu0 0
        %3103 = vmatpush1.bf16.msra.mxu0 0
        %3104 = vmatprep.subr.bf16.mxu0 0
        %3105 = vmatpush1.bf16.msra.mxu0 0
        %3106 = vmatprep.subr.bf16.mxu0 0
        %3107 = vmatpush1.bf16.msra.mxu0 0
        %3108 = vmatprep.mubr.bf16.mxu0 0
        %3109 = vmatmul.mubr.bf16.gmra.mrb[0].mxu0 %v3074
        %v3110 = vpop.f32.mrb[0].mxu0
        %v3111 = vadd.f32 %v3071, %v3110
        %v3112 = vpop.f32.mrb[0].mxu0
        %v3113 = vpop.f32.mrb[0].mxu0
        %v3114 = vpop.f32.mrb[0].mxu0
        %3115 = vdwg.mxu0
        %v3116 = vadd.f32 %v3111, %v2994
        %v3117 = vld [vmem:[%s55] sm:$0x1]
        %v3118 = vld [vmem:[%s57] sm:$0x1]
        %v3119 = vsel %vm1049, %v3116, 0.0
        %3120 = vadd.xlane.f32.xlu0 %v3119
        %v3121 = vpop.xlane.xlu0 %3120
        %v3122 = vmul.f32 %v3121, %v1945
        %v3123 = vsub.f32 %v3116, %v3122
        %v3124 = vmul.f32 %v3123, %v3123
        %v3125 = vsel %vm1049, %v3124, 0.0
        %3126 = vadd.xlane.f32.xlu0 %v3125
        %v3127 = vpop.xlane.xlu0 %3126
        %v3128 = vmul.f32 %v3127, %v1945
        %v3129 = vadd.f32 %v3128, 1e-05
        %v3130 = vrsqrt.pop %v3129
        %v3131 = vmul.f32 %v3123, %v3130
        %v3133 = vlaneseq
        %v3134 = vshrl.u32 %v3133, 7
        %v3135 = vsub.s32 0, %v3134
        %v3136 = vrot.slane %v3117, %v3135
        %v3138 = vmul.f32 %v3131, %v3136
        %v3140 = vlaneseq
        %v3141 = vshrl.u32 %v3140, 7
        %v3142 = vsub.s32 0, %v3141
        %v3143 = vrot.slane %v3118, %v3142
        %v3145 = vadd.f32 %v3138, %v3143
        %3146 = vst.msk [vmem:[%s1029] sm:$0xff] %vm1049, %v3145
        %p3147 = scmp.lt.s32.totalorder %s75, 1
        %s3148 = scalar_select %p3147, %s75, 1
        %s3149 = smul.addr %s3148, 8
        %s3150 = scalar_lea.vmem %s59, %s3149
        // Predicated region
        $region169: #{co_forward.1} parent=135 // pred_check
          %p3151 = pneg %p717
        $region170: #{co_forward.1} parent=135 // pred_check_branch
          %3153 = sbr.rel (%p3151) target = $region172
        $region171: #{co_forward.1} parent=135 // pred_region
          _
        $region172: #{co_forward.1} parent=135 // pred_fallthru
          _
      $region136: #{co_forward.1} parent=5 // pred_fallthru
        _
      %p3154 = scmp.le.s32.totalorder 2, %s70
      // Predicated region
      $region173: #{co_forward.1} parent=5 // pred_check
        %p3155 = pneg %p3154
      $region174: #{co_forward.1} parent=5 // pred_check_branch
        %3157 = sbr.rel (%p3155) target = $region176
      $region175: #{co_forward.1} parent=5 // pred_region
        %s3158 = ssub.s32 %s70, 2
        // Predicated region
        $region177: #{co_forward.1} parent=175 // pred_check
          %p3159 = pneg %p723
        $region178: #{co_forward.1} parent=175 // pred_check_branch
          %3161 = sbr.rel (%p3159) target = $region180
        $region179: #{co_forward.1} parent=175 // pred_region
          %p3162 = scmp.lt.s32.totalorder %s76, 1
          %s3163 = scalar_select %p3162, %s76, 1
          %s3164 = smul.addr %s3163, 8
          %s3165 = scalar_lea.vmem %s59, %s3164
        $region180: #{co_forward.1} parent=175 // pred_fallthru
          _
      $region176: #{co_forward.1} parent=5 // pred_fallthru
        _
    $region6: #{co_forward.1} parent=1 // loop_footer
      %s74 = sadd.s32 1, %s70
    $region7: #{co_forward.1} parent=1 // loop_footer_branch
      %69 = sbr.rel target = $region3
    $region8: #{co_forward.1} parent=1 // loop_exit
      _
    %3166 = vsyncpa [#allocation3], 1
    %s3167 = scalar_lea.sflag [#allocation3], 1
    %3168 = vsyncpa %s3167, 1
    %3169 = vsyncpa [#allocation5], 1
    %3170 = vsyncpa [#allocation8], 1
    %3171 = vsyncpa [#allocation11], 1
    %3172 = vsyncpa [#allocation14], 1

</llo_original>
